<compile_context>
chip_gen: v5e
topology: v5e:2x2
jax: 0.10.0
libtpu: 0.0.40
codegen_flags: <defaults>
</compile_context>

<pallas_src>
import jax
import jax.numpy as jnp
from jax.experimental import pallas as pl
from jax.experimental.pallas import tpu as pltpu


# --------------------------- in-kernel GRU layer -----------------------------

def _gru_layer_body(x_tbe, wih_ref, whh_ref, b_ref, lengths, want_seq, want_last):
    """Run one GRU layer over the VMEM-resident sequence value x_tbe.

    x_tbe:   (T, B, E_in) f32 value (already loaded).
    wih_ref: (3, E_in, H) per-gate input weights [r, z, n].
    whh_ref: (3, H, H)    per-gate hidden weights [r, z, n].
    b_ref:   (4, H)       [b_ih_r+b_hh_r, b_ih_z+b_hh_z, b_ih_n, b_hh_n].
    lengths: (B, 1) int32 sequence lengths (only used if want_last).
    Returns (y or None, h_last or None).
    """
    T, B, E = x_tbe.shape
    H = whh_ref.shape[-1]
    b = b_ref[...]                                            # (4, H)

    # Hoisted input projection: one (T*B,E)x(E,H) matmul per gate (no
    # sequential dependence), biases folded in here.
    x2d = x_tbe.reshape(T * B, E)
    gi_r = (jnp.dot(x2d, wih_ref[0], preferred_element_type=jnp.float32)
            + b[0:1, :]).reshape(T, B, H)
    gi_z = (jnp.dot(x2d, wih_ref[1], preferred_element_type=jnp.float32)
            + b[1:2, :]).reshape(T, B, H)
    gi_n = (jnp.dot(x2d, wih_ref[2], preferred_element_type=jnp.float32)
            + b[2:3, :]).reshape(T, B, H)

    # Hoist hidden-weight loads (and the n-gate hidden bias) out of the loop.
    w_r = whh_ref[0]
    w_z = whh_ref[1]
    w_n = whh_ref[2]
    b_hn = b[3:4, :]

    h = jnp.zeros((B, H), jnp.float32)
    h_last = jnp.zeros((B, H), jnp.float32) if want_last else None
    ys = []
    for t in range(T):                     # static unroll: T small & fixed
        gh_r = jnp.dot(h, w_r, preferred_element_type=jnp.float32)
        gh_z = jnp.dot(h, w_z, preferred_element_type=jnp.float32)
        gh_n = jnp.dot(h, w_n, preferred_element_type=jnp.float32) + b_hn
        r = jax.nn.sigmoid(gi_r[t] + gh_r)
        z = jax.nn.sigmoid(gi_z[t] + gh_z)
        n = jnp.tanh(gi_n[t] + r * gh_n)
        h = (1.0 - z) * n + z * h
        if want_seq:
            ys.append(h)
        if want_last:
            # select h at t == length-1 per batch row (masked update)
            h_last = jnp.where(lengths == (t + 1), h, h_last)
    y = jnp.stack(ys, axis=0) if want_seq else None
    return y, h_last


# ------------------------------ fused kernel ---------------------------------

def make_fused_kernel(nlayers):
    """Kernel: [len, x, (wih,whh,b) x nlayers, w1,b1,w2,b2,w3,b3] -> out."""

    def kernel(*refs):
        len_ref, x_ref = refs[0], refs[1]
        idx = 2
        layers = []
        for _ in range(nlayers):
            layers.append((refs[idx], refs[idx + 1], refs[idx + 2]))
            idx += 3
        w1_ref, b1_ref, w2_ref, b2_ref, w3_ref, b3_ref = refs[idx:idx + 6]
        out_ref = refs[idx + 6]

        lengths = len_ref[...]                                # (B, 1) int32
        x = x_ref[...]                                        # (T, B, E) f32

        h_last = None
        for li, (wih_ref, whh_ref, b_ref) in enumerate(layers):
            last = li == nlayers - 1
            x, h_last = _gru_layer_body(
                x, wih_ref, whh_ref, b_ref, lengths,
                want_seq=not last, want_last=last)

        # MLP head fused behind the recurrence epilogue (no extra launch).
        feat = (jnp.dot(h_last, w1_ref[...], preferred_element_type=jnp.float32)
                + b1_ref[...])
        hid = (jnp.dot(feat, w2_ref[...], preferred_element_type=jnp.float32)
               + b2_ref[...])
        hid = jnp.maximum(hid, 0.0)
        out_ref[...] = (jnp.dot(hid, w3_ref[...], preferred_element_type=jnp.float32)
                        + b3_ref[...])

    return kernel


# ------------------------------ param packing --------------------------------

def _split_gates(w, H):
    # (X, 3H) -> (3, X, H), PyTorch gate order [r, z, n]
    return jnp.stack([w[:, 0:H], w[:, H:2 * H], w[:, 2 * H:3 * H]], axis=0)


def pack_gru_layer(layer, H):
    wih_g = _split_gates(layer["wih"], H)            # (3, E_in, H)
    whh_g = _split_gates(layer["whh"], H)            # (3, H, H)
    bih, bhh = layer["bih"][0], layer["bhh"][0]      # (3H,), (3H,)
    b = jnp.stack([
        bih[0:H] + bhh[0:H],                         # r: fold both biases
        bih[H:2 * H] + bhh[H:2 * H],                 # z: fold both biases
        bih[2 * H:3 * H],                            # n: b_ih_n -> GI
        bhh[2 * H:3 * H],                            # n: b_hh_n -> inside r*(.)
    ], axis=0)                                       # (4, H)
    return wih_g, whh_g, b


# ------------------------------- forward pass --------------------------------

def style_rewarder_forward(params, tokens, lengths):
    """tokens: (B, T, num_token_streams) int32; lengths: (B,) int32."""
    B, T, _ = tokens.shape

    # Embedding lookups per token stream (plain-JAX glue), concatenated.
    embs = [jnp.take(tbl, tokens[:, :, i], axis=0)
            for i, tbl in enumerate(params["emb"])]
    x = jnp.concatenate(embs, axis=-1).astype(jnp.float32)    # (B, T, E)
    x = jnp.transpose(x, (1, 0, 2))                           # (T, B, E) time-major

    # Pad batch to a sublane multiple (8); padded rows get length 1 and are
    # sliced off below.
    Bp = ((B + 7) // 8) * 8
    pad = Bp - B
    lengths = lengths.astype(jnp.int32)
    if pad:
        x = jnp.pad(x, ((0, 0), (0, pad), (0, 0)))
        lengths = jnp.concatenate([lengths, jnp.ones((pad,), jnp.int32)])
    lengths2d = lengths.reshape(Bp, 1)

    H = params["gru"][0]["whh"].shape[0]
    nlayers = len(params["gru"])
    w1, b1 = params["left_fc"]
    w2, b2 = params["fc"]
    w3, b3 = params["pred"]
    out_dim = w3.shape[1]

    args = [lengths2d, x]
    for layer in params["gru"]:
        wih_g, whh_g, b = pack_gru_layer(layer, H)
        args += [wih_g, whh_g, b]
    args += [w1, b1, w2, b2, w3, b3]

    out = pl.pallas_call(
        make_fused_kernel(nlayers),
        out_shape=jax.ShapeDtypeStruct((Bp, out_dim), jnp.float32),
        compiler_params=pltpu.CompilerParams(vmem_limit_bytes=32 << 20),
    )(*args)
    return out[:B], None


# ---------------------------- pure-JAX reference ------------------------------

def gru_layer_ref(x_tbe, wih, whh, bih, bhh):
    H = whh.shape[0]

    def step(h, x):
        gi = x @ wih + bih
        gh = h @ whh + bhh
        r = jax.nn.sigmoid(gi[:, :H] + gh[:, :H])
        z = jax.nn.sigmoid(gi[:, H:2 * H] + gh[:, H:2 * H])
        n = jnp.tanh(gi[:, 2 * H:] + r * gh[:, 2 * H:])
        h_new = (1.0 - z) * n + z * h
        return h_new, h_new

    h0 = jnp.zeros((x_tbe.shape[1], H), jnp.float32)
    _, ys = jax.lax.scan(step, h0, x_tbe)
    return ys


def style_rewarder_ref(params, tokens, lengths):
    B = tokens.shape[0]
    embs = [jnp.take(tbl, tokens[:, :, i], axis=0)
            for i, tbl in enumerate(params["emb"])]
    x = jnp.transpose(jnp.concatenate(embs, -1).astype(jnp.float32), (1, 0, 2))
    for layer in params["gru"]:
        x = gru_layer_ref(x, layer["wih"], layer["whh"], layer["bih"], layer["bhh"])
    h_last = x[lengths - 1, jnp.arange(B), :]
    w1, b1 = params["left_fc"]; w2, b2 = params["fc"]; w3, b3 = params["pred"]
    feat = h_last @ w1 + b1
    hid = jnp.maximum(feat @ w2 + b2, 0.0)
    return hid @ w3 + b3


# ------------------------------- param init -----------------------------------

def init_params(key, cfg):
    keys = iter(jax.random.split(key, 64))
    params = {}
    params["emb"] = [
        0.1 * jax.random.normal(next(keys), (nt, ne), jnp.float32)
        for ne, nt in zip(cfg["nembs"], cfg["num_tokens"])
    ]
    E, H = sum(cfg["nembs"]), cfg["nhid"]
    s = 1.0 / (H ** 0.5)
    gru, in_sz = [], E
    for _ in range(cfg["nlayers"]):
        gru.append(dict(
            wih=jax.random.uniform(next(keys), (in_sz, 3 * H), jnp.float32, -s, s),
            whh=jax.random.uniform(next(keys), (H, 3 * H), jnp.float32, -s, s),
            bih=jax.random.uniform(next(keys), (1, 3 * H), jnp.float32, -s, s),
            bhh=jax.random.uniform(next(keys), (1, 3 * H), jnp.float32, -s, s),
        ))
        in_sz = H
    params["gru"] = gru

    def linear(k, fi, fo):
        sc = 1.0 / (fi ** 0.5)
        kw, kb = jax.random.split(k)
        return (jax.random.uniform(kw, (fi, fo), jnp.float32, -sc, sc),
                jax.random.uniform(kb, (1, fo), jnp.float32, -sc, sc))

    params["left_fc"] = linear(next(keys), H, cfg["nfc_left"])
    params["fc"] = linear(next(keys), cfg["nfc_left"], cfg["pred_nfc"])
    params["pred"] = linear(next(keys), cfg["pred_nfc"],
                            cfg["num_pitches"] * cfg["num_durations"])
    return params


# ----------------------------------- main --------------------------------------

if __name__ == "__main__":
    cfg = dict(
        num_tokens=[10, 12],      # vocab sizes per token stream
        nembs=[16, 16],           # embedding dims (sum = GRU input = 32)
        nhid=32,
        nlayers=2,
        dropout=0.0,
        nfc_left=32,
        pred_nfc=32,
        num_pitches=4,
        num_durations=8,          # output dim = 32
    )
    B, T = 4, 8

    root = jax.random.PRNGKey(0)
    kp, kt0, kt1, _ = jax.random.split(root, 4)
    params = init_params(kp, cfg)

    tok0 = jax.random.randint(kt0, (B, T), 0, cfg["num_tokens"][0], jnp.int32)
    tok1 = jax.random.randint(kt1, (B, T), 0, cfg["num_tokens"][1], jnp.int32)
    tokens = jnp.stack([tok0, tok1], axis=-1)                  # (B, T, 2)
    lengths = jnp.array([8, 6, 5, 3], jnp.int32)               # sorted desc (packed-seq)

    pred, aux = jax.jit(style_rewarder_forward)(params, tokens, lengths)
    pred = jax.block_until_ready(pred)
    assert aux is None
    assert pred.shape == (B, cfg["num_pitches"] * cfg["num_durations"])

    ref = style_rewarder_ref(params, tokens, lengths)
    assert jnp.allclose(pred, ref, atol=1e-5, rtol=1e-5), "mismatch vs reference"

    print("KERNEL_OK")
</pallas_src>

<mosaic_0001>
module attributes {stable_mosaic.version = 11 : i64} {
  func.func @kernel(%arg0: memref<8x1xi32, #tpu.memory_space<vmem>>, %arg1: memref<8x8x32xf32, #tpu.memory_space<vmem>>, %arg2: memref<3x32x32xf32, #tpu.memory_space<vmem>>, %arg3: memref<3x32x32xf32, #tpu.memory_space<vmem>>, %arg4: memref<4x32xf32, #tpu.memory_space<vmem>>, %arg5: memref<3x32x32xf32, #tpu.memory_space<vmem>>, %arg6: memref<3x32x32xf32, #tpu.memory_space<vmem>>, %arg7: memref<4x32xf32, #tpu.memory_space<vmem>>, %arg8: memref<32x32xf32, #tpu.memory_space<vmem>>, %arg9: memref<1x32xf32, #tpu.memory_space<vmem>>, %arg10: memref<32x32xf32, #tpu.memory_space<vmem>>, %arg11: memref<1x32xf32, #tpu.memory_space<vmem>>, %arg12: memref<32x32xf32, #tpu.memory_space<vmem>>, %arg13: memref<1x32xf32, #tpu.memory_space<vmem>>, %arg14: memref<8x32xf32, #tpu.memory_space<vmem>>) attributes {dimension_semantics = [], scalar_prefetch = 0 : i64, scratch_operands = 0 : i64, tpu.core_type = #tpu.core_type<tc>} {
    %c0 = arith.constant 0 : index
    %c0_0 = arith.constant 0 : index
    %0 = vector.load %arg0[%c0, %c0_0] : memref<8x1xi32, #tpu.memory_space<vmem>>, vector<8x1xi32>
    %c0_1 = arith.constant 0 : index
    %c0_2 = arith.constant 0 : index
    %c0_3 = arith.constant 0 : index
    %1 = vector.load %arg1[%c0_1, %c0_2, %c0_3] : memref<8x8x32xf32, #tpu.memory_space<vmem>>, vector<8x8x32xf32>
    %c0_4 = arith.constant 0 : index
    %c0_5 = arith.constant 0 : index
    %2 = vector.load %arg4[%c0_4, %c0_5] : memref<4x32xf32, #tpu.memory_space<vmem>>, vector<4x32xf32>
    %3 = vector.shape_cast %1 : vector<8x8x32xf32> to vector<64x32xf32>
    %c0_6 = arith.constant 0 : index
    %c0_7 = arith.constant 0 : index
    %c0_8 = arith.constant 0 : index
    %4 = vector.load %arg2[%c0_6, %c0_7, %c0_8] : memref<3x32x32xf32, #tpu.memory_space<vmem>>, vector<1x32x32xf32>
    %5 = vector.shape_cast %4 : vector<1x32x32xf32> to vector<32x32xf32>
    %cst = arith.constant dense<0.000000e+00> : vector<64x32xf32>
    %6 = tpu.matmul %3, %5, %cst {dimension_numbers = #tpu.dot_dimension_numbers<[1], [0], [0], [1], [0, 0, 1, 1], [], []>} : vector<64x32xf32>, vector<32x32xf32>, vector<64x32xf32> -> vector<64x32xf32>
    %7 = vector.extract_strided_slice %2 {offsets = [0, 0], sizes = [1, 32], strides = [1, 1]} : vector<4x32xf32> to vector<1x32xf32>
    %8 = vector.broadcast %7 : vector<1x32xf32> to vector<64x32xf32>
    %9 = arith.addf %6, %8 : vector<64x32xf32>
    %10 = vector.shape_cast %9 : vector<64x32xf32> to vector<8x8x32xf32>
    %c1 = arith.constant 1 : index
    %c0_9 = arith.constant 0 : index
    %c0_10 = arith.constant 0 : index
    %11 = vector.load %arg2[%c1, %c0_9, %c0_10] : memref<3x32x32xf32, #tpu.memory_space<vmem>>, vector<1x32x32xf32>
    %12 = vector.shape_cast %11 : vector<1x32x32xf32> to vector<32x32xf32>
    %cst_11 = arith.constant dense<0.000000e+00> : vector<64x32xf32>
    %13 = tpu.matmul %3, %12, %cst_11 {dimension_numbers = #tpu.dot_dimension_numbers<[1], [0], [0], [1], [0, 0, 1, 1], [], []>} : vector<64x32xf32>, vector<32x32xf32>, vector<64x32xf32> -> vector<64x32xf32>
    %14 = vector.extract_strided_slice %2 {offsets = [1, 0], sizes = [1, 32], strides = [1, 1]} : vector<4x32xf32> to vector<1x32xf32>
    %15 = vector.broadcast %14 : vector<1x32xf32> to vector<64x32xf32>
    %16 = arith.addf %13, %15 : vector<64x32xf32>
    %17 = vector.shape_cast %16 : vector<64x32xf32> to vector<8x8x32xf32>
    %c2 = arith.constant 2 : index
    %c0_12 = arith.constant 0 : index
    %c0_13 = arith.constant 0 : index
    %18 = vector.load %arg2[%c2, %c0_12, %c0_13] : memref<3x32x32xf32, #tpu.memory_space<vmem>>, vector<1x32x32xf32>
    %19 = vector.shape_cast %18 : vector<1x32x32xf32> to vector<32x32xf32>
    %cst_14 = arith.constant dense<0.000000e+00> : vector<64x32xf32>
    %20 = tpu.matmul %3, %19, %cst_14 {dimension_numbers = #tpu.dot_dimension_numbers<[1], [0], [0], [1], [0, 0, 1, 1], [], []>} : vector<64x32xf32>, vector<32x32xf32>, vector<64x32xf32> -> vector<64x32xf32>
    %21 = vector.extract_strided_slice %2 {offsets = [2, 0], sizes = [1, 32], strides = [1, 1]} : vector<4x32xf32> to vector<1x32xf32>
    %22 = vector.broadcast %21 : vector<1x32xf32> to vector<64x32xf32>
    %23 = arith.addf %20, %22 : vector<64x32xf32>
    %24 = vector.shape_cast %23 : vector<64x32xf32> to vector<8x8x32xf32>
    %c0_15 = arith.constant 0 : index
    %c0_16 = arith.constant 0 : index
    %c0_17 = arith.constant 0 : index
    %25 = vector.load %arg3[%c0_15, %c0_16, %c0_17] : memref<3x32x32xf32, #tpu.memory_space<vmem>>, vector<1x32x32xf32>
    %26 = vector.shape_cast %25 : vector<1x32x32xf32> to vector<32x32xf32>
    %c1_18 = arith.constant 1 : index
    %c0_19 = arith.constant 0 : index
    %c0_20 = arith.constant 0 : index
    %27 = vector.load %arg3[%c1_18, %c0_19, %c0_20] : memref<3x32x32xf32, #tpu.memory_space<vmem>>, vector<1x32x32xf32>
    %28 = vector.shape_cast %27 : vector<1x32x32xf32> to vector<32x32xf32>
    %c2_21 = arith.constant 2 : index
    %c0_22 = arith.constant 0 : index
    %c0_23 = arith.constant 0 : index
    %29 = vector.load %arg3[%c2_21, %c0_22, %c0_23] : memref<3x32x32xf32, #tpu.memory_space<vmem>>, vector<1x32x32xf32>
    %30 = vector.shape_cast %29 : vector<1x32x32xf32> to vector<32x32xf32>
    %31 = vector.extract_strided_slice %2 {offsets = [3, 0], sizes = [1, 32], strides = [1, 1]} : vector<4x32xf32> to vector<1x32xf32>
    %cst_24 = arith.constant 0.000000e+00 : f32
    %32 = vector.broadcast %cst_24 : f32 to vector<8x32xf32>
    %cst_25 = arith.constant dense<0.000000e+00> : vector<8x32xf32>
    %33 = tpu.matmul %32, %26, %cst_25 {dimension_numbers = #tpu.dot_dimension_numbers<[1], [0], [0], [1], [0, 0, 1, 1], [], []>} : vector<8x32xf32>, vector<32x32xf32>, vector<8x32xf32> -> vector<8x32xf32>
    %cst_26 = arith.constant dense<0.000000e+00> : vector<8x32xf32>
    %34 = tpu.matmul %32, %28, %cst_26 {dimension_numbers = #tpu.dot_dimension_numbers<[1], [0], [0], [1], [0, 0, 1, 1], [], []>} : vector<8x32xf32>, vector<32x32xf32>, vector<8x32xf32> -> vector<8x32xf32>
    %cst_27 = arith.constant dense<0.000000e+00> : vector<8x32xf32>
    %35 = tpu.matmul %32, %30, %cst_27 {dimension_numbers = #tpu.dot_dimension_numbers<[1], [0], [0], [1], [0, 0, 1, 1], [], []>} : vector<8x32xf32>, vector<32x32xf32>, vector<8x32xf32> -> vector<8x32xf32>
    %36 = vector.broadcast %31 : vector<1x32xf32> to vector<8x32xf32>
    %37 = arith.addf %35, %36 : vector<8x32xf32>
    %38 = vector.extract_strided_slice %10 {offsets = [0, 0, 0], sizes = [1, 8, 32], strides = [1, 1, 1]} : vector<8x8x32xf32> to vector<1x8x32xf32>
    %39 = vector.shape_cast %38 : vector<1x8x32xf32> to vector<8x32xf32>
    %40 = arith.addf %39, %33 : vector<8x32xf32>
    %41 = arith.negf %40 : vector<8x32xf32>
    %42 = math.exp %41 : vector<8x32xf32>
    %cst_28 = arith.constant 1.000000e+00 : f32
    %43 = vector.broadcast %cst_28 : f32 to vector<8x32xf32>
    %44 = arith.addf %43, %42 : vector<8x32xf32>
    %45 = arith.divf %43, %44 : vector<8x32xf32>
    %46 = vector.extract_strided_slice %17 {offsets = [0, 0, 0], sizes = [1, 8, 32], strides = [1, 1, 1]} : vector<8x8x32xf32> to vector<1x8x32xf32>
    %47 = vector.shape_cast %46 : vector<1x8x32xf32> to vector<8x32xf32>
    %48 = arith.addf %47, %34 : vector<8x32xf32>
    %49 = arith.negf %48 : vector<8x32xf32>
    %50 = math.exp %49 : vector<8x32xf32>
    %cst_29 = arith.constant 1.000000e+00 : f32
    %51 = vector.broadcast %cst_29 : f32 to vector<8x32xf32>
    %52 = arith.addf %51, %50 : vector<8x32xf32>
    %53 = arith.divf %51, %52 : vector<8x32xf32>
    %54 = vector.extract_strided_slice %24 {offsets = [0, 0, 0], sizes = [1, 8, 32], strides = [1, 1, 1]} : vector<8x8x32xf32> to vector<1x8x32xf32>
    %55 = vector.shape_cast %54 : vector<1x8x32xf32> to vector<8x32xf32>
    %56 = arith.mulf %45, %37 : vector<8x32xf32>
    %57 = arith.addf %55, %56 : vector<8x32xf32>
    %58 = math.tanh %57 : vector<8x32xf32>
    %cst_30 = arith.constant 1.000000e+00 : f32
    %59 = vector.broadcast %cst_30 : f32 to vector<8x32xf32>
    %60 = arith.subf %59, %53 : vector<8x32xf32>
    %61 = arith.mulf %60, %58 : vector<8x32xf32>
    %62 = arith.mulf %53, %32 : vector<8x32xf32>
    %63 = arith.addf %61, %62 : vector<8x32xf32>
    %cst_31 = arith.constant dense<0.000000e+00> : vector<8x32xf32>
    %64 = tpu.matmul %63, %26, %cst_31 {dimension_numbers = #tpu.dot_dimension_numbers<[1], [0], [0], [1], [0, 0, 1, 1], [], []>} : vector<8x32xf32>, vector<32x32xf32>, vector<8x32xf32> -> vector<8x32xf32>
    %cst_32 = arith.constant dense<0.000000e+00> : vector<8x32xf32>
    %65 = tpu.matmul %63, %28, %cst_32 {dimension_numbers = #tpu.dot_dimension_numbers<[1], [0], [0], [1], [0, 0, 1, 1], [], []>} : vector<8x32xf32>, vector<32x32xf32>, vector<8x32xf32> -> vector<8x32xf32>
    %cst_33 = arith.constant dense<0.000000e+00> : vector<8x32xf32>
    %66 = tpu.matmul %63, %30, %cst_33 {dimension_numbers = #tpu.dot_dimension_numbers<[1], [0], [0], [1], [0, 0, 1, 1], [], []>} : vector<8x32xf32>, vector<32x32xf32>, vector<8x32xf32> -> vector<8x32xf32>
    %67 = vector.broadcast %31 : vector<1x32xf32> to vector<8x32xf32>
    %68 = arith.addf %66, %67 : vector<8x32xf32>
    %69 = vector.extract_strided_slice %10 {offsets = [1, 0, 0], sizes = [1, 8, 32], strides = [1, 1, 1]} : vector<8x8x32xf32> to vector<1x8x32xf32>
    %70 = vector.shape_cast %69 : vector<1x8x32xf32> to vector<8x32xf32>
    %71 = arith.addf %70, %64 : vector<8x32xf32>
    %72 = arith.negf %71 : vector<8x32xf32>
    %73 = math.exp %72 : vector<8x32xf32>
    %cst_34 = arith.constant 1.000000e+00 : f32
    %74 = vector.broadcast %cst_34 : f32 to vector<8x32xf32>
    %75 = arith.addf %74, %73 : vector<8x32xf32>
    %76 = arith.divf %74, %75 : vector<8x32xf32>
    %77 = vector.extract_strided_slice %17 {offsets = [1, 0, 0], sizes = [1, 8, 32], strides = [1, 1, 1]} : vector<8x8x32xf32> to vector<1x8x32xf32>
    %78 = vector.shape_cast %77 : vector<1x8x32xf32> to vector<8x32xf32>
    %79 = arith.addf %78, %65 : vector<8x32xf32>
    %80 = arith.negf %79 : vector<8x32xf32>
    %81 = math.exp %80 : vector<8x32xf32>
    %cst_35 = arith.constant 1.000000e+00 : f32
    %82 = vector.broadcast %cst_35 : f32 to vector<8x32xf32>
    %83 = arith.addf %82, %81 : vector<8x32xf32>
    %84 = arith.divf %82, %83 : vector<8x32xf32>
    %85 = vector.extract_strided_slice %24 {offsets = [1, 0, 0], sizes = [1, 8, 32], strides = [1, 1, 1]} : vector<8x8x32xf32> to vector<1x8x32xf32>
    %86 = vector.shape_cast %85 : vector<1x8x32xf32> to vector<8x32xf32>
    %87 = arith.mulf %76, %68 : vector<8x32xf32>
    %88 = arith.addf %86, %87 : vector<8x32xf32>
    %89 = math.tanh %88 : vector<8x32xf32>
    %cst_36 = arith.constant 1.000000e+00 : f32
    %90 = vector.broadcast %cst_36 : f32 to vector<8x32xf32>
    %91 = arith.subf %90, %84 : vector<8x32xf32>
    %92 = arith.mulf %91, %89 : vector<8x32xf32>
    %93 = arith.mulf %84, %63 : vector<8x32xf32>
    %94 = arith.addf %92, %93 : vector<8x32xf32>
    %cst_37 = arith.constant dense<0.000000e+00> : vector<8x32xf32>
    %95 = tpu.matmul %94, %26, %cst_37 {dimension_numbers = #tpu.dot_dimension_numbers<[1], [0], [0], [1], [0, 0, 1, 1], [], []>} : vector<8x32xf32>, vector<32x32xf32>, vector<8x32xf32> -> vector<8x32xf32>
    %cst_38 = arith.constant dense<0.000000e+00> : vector<8x32xf32>
    %96 = tpu.matmul %94, %28, %cst_38 {dimension_numbers = #tpu.dot_dimension_numbers<[1], [0], [0], [1], [0, 0, 1, 1], [], []>} : vector<8x32xf32>, vector<32x32xf32>, vector<8x32xf32> -> vector<8x32xf32>
    %cst_39 = arith.constant dense<0.000000e+00> : vector<8x32xf32>
    %97 = tpu.matmul %94, %30, %cst_39 {dimension_numbers = #tpu.dot_dimension_numbers<[1], [0], [0], [1], [0, 0, 1, 1], [], []>} : vector<8x32xf32>, vector<32x32xf32>, vector<8x32xf32> -> vector<8x32xf32>
    %98 = vector.broadcast %31 : vector<1x32xf32> to vector<8x32xf32>
    %99 = arith.addf %97, %98 : vector<8x32xf32>
    %100 = vector.extract_strided_slice %10 {offsets = [2, 0, 0], sizes = [1, 8, 32], strides = [1, 1, 1]} : vector<8x8x32xf32> to vector<1x8x32xf32>
    %101 = vector.shape_cast %100 : vector<1x8x32xf32> to vector<8x32xf32>
    %102 = arith.addf %101, %95 : vector<8x32xf32>
    %103 = arith.negf %102 : vector<8x32xf32>
    %104 = math.exp %103 : vector<8x32xf32>
    %cst_40 = arith.constant 1.000000e+00 : f32
    %105 = vector.broadcast %cst_40 : f32 to vector<8x32xf32>
    %106 = arith.addf %105, %104 : vector<8x32xf32>
    %107 = arith.divf %105, %106 : vector<8x32xf32>
    %108 = vector.extract_strided_slice %17 {offsets = [2, 0, 0], sizes = [1, 8, 32], strides = [1, 1, 1]} : vector<8x8x32xf32> to vector<1x8x32xf32>
    %109 = vector.shape_cast %108 : vector<1x8x32xf32> to vector<8x32xf32>
    %110 = arith.addf %109, %96 : vector<8x32xf32>
    %111 = arith.negf %110 : vector<8x32xf32>
    %112 = math.exp %111 : vector<8x32xf32>
    %cst_41 = arith.constant 1.000000e+00 : f32
    %113 = vector.broadcast %cst_41 : f32 to vector<8x32xf32>
    %114 = arith.addf %113, %112 : vector<8x32xf32>
    %115 = arith.divf %113, %114 : vector<8x32xf32>
    %116 = vector.extract_strided_slice %24 {offsets = [2, 0, 0], sizes = [1, 8, 32], strides = [1, 1, 1]} : vector<8x8x32xf32> to vector<1x8x32xf32>
    %117 = vector.shape_cast %116 : vector<1x8x32xf32> to vector<8x32xf32>
    %118 = arith.mulf %107, %99 : vector<8x32xf32>
    %119 = arith.addf %117, %118 : vector<8x32xf32>
    %120 = math.tanh %119 : vector<8x32xf32>
    %cst_42 = arith.constant 1.000000e+00 : f32
    %121 = vector.broadcast %cst_42 : f32 to vector<8x32xf32>
    %122 = arith.subf %121, %115 : vector<8x32xf32>
    %123 = arith.mulf %122, %120 : vector<8x32xf32>
    %124 = arith.mulf %115, %94 : vector<8x32xf32>
    %125 = arith.addf %123, %124 : vector<8x32xf32>
    %cst_43 = arith.constant dense<0.000000e+00> : vector<8x32xf32>
    %126 = tpu.matmul %125, %26, %cst_43 {dimension_numbers = #tpu.dot_dimension_numbers<[1], [0], [0], [1], [0, 0, 1, 1], [], []>} : vector<8x32xf32>, vector<32x32xf32>, vector<8x32xf32> -> vector<8x32xf32>
    %cst_44 = arith.constant dense<0.000000e+00> : vector<8x32xf32>
    %127 = tpu.matmul %125, %28, %cst_44 {dimension_numbers = #tpu.dot_dimension_numbers<[1], [0], [0], [1], [0, 0, 1, 1], [], []>} : vector<8x32xf32>, vector<32x32xf32>, vector<8x32xf32> -> vector<8x32xf32>
    %cst_45 = arith.constant dense<0.000000e+00> : vector<8x32xf32>
    %128 = tpu.matmul %125, %30, %cst_45 {dimension_numbers = #tpu.dot_dimension_numbers<[1], [0], [0], [1], [0, 0, 1, 1], [], []>} : vector<8x32xf32>, vector<32x32xf32>, vector<8x32xf32> -> vector<8x32xf32>
    %129 = vector.broadcast %31 : vector<1x32xf32> to vector<8x32xf32>
    %130 = arith.addf %128, %129 : vector<8x32xf32>
    %131 = vector.extract_strided_slice %10 {offsets = [3, 0, 0], sizes = [1, 8, 32], strides = [1, 1, 1]} : vector<8x8x32xf32> to vector<1x8x32xf32>
    %132 = vector.shape_cast %131 : vector<1x8x32xf32> to vector<8x32xf32>
    %133 = arith.addf %132, %126 : vector<8x32xf32>
    %134 = arith.negf %133 : vector<8x32xf32>
    %135 = math.exp %134 : vector<8x32xf32>
    %cst_46 = arith.constant 1.000000e+00 : f32
    %136 = vector.broadcast %cst_46 : f32 to vector<8x32xf32>
    %137 = arith.addf %136, %135 : vector<8x32xf32>
    %138 = arith.divf %136, %137 : vector<8x32xf32>
    %139 = vector.extract_strided_slice %17 {offsets = [3, 0, 0], sizes = [1, 8, 32], strides = [1, 1, 1]} : vector<8x8x32xf32> to vector<1x8x32xf32>
    %140 = vector.shape_cast %139 : vector<1x8x32xf32> to vector<8x32xf32>
    %141 = arith.addf %140, %127 : vector<8x32xf32>
    %142 = arith.negf %141 : vector<8x32xf32>
    %143 = math.exp %142 : vector<8x32xf32>
    %cst_47 = arith.constant 1.000000e+00 : f32
    %144 = vector.broadcast %cst_47 : f32 to vector<8x32xf32>
    %145 = arith.addf %144, %143 : vector<8x32xf32>
    %146 = arith.divf %144, %145 : vector<8x32xf32>
    %147 = vector.extract_strided_slice %24 {offsets = [3, 0, 0], sizes = [1, 8, 32], strides = [1, 1, 1]} : vector<8x8x32xf32> to vector<1x8x32xf32>
    %148 = vector.shape_cast %147 : vector<1x8x32xf32> to vector<8x32xf32>
    %149 = arith.mulf %138, %130 : vector<8x32xf32>
    %150 = arith.addf %148, %149 : vector<8x32xf32>
    %151 = math.tanh %150 : vector<8x32xf32>
    %cst_48 = arith.constant 1.000000e+00 : f32
    %152 = vector.broadcast %cst_48 : f32 to vector<8x32xf32>
    %153 = arith.subf %152, %146 : vector<8x32xf32>
    %154 = arith.mulf %153, %151 : vector<8x32xf32>
    %155 = arith.mulf %146, %125 : vector<8x32xf32>
    %156 = arith.addf %154, %155 : vector<8x32xf32>
    %cst_49 = arith.constant dense<0.000000e+00> : vector<8x32xf32>
    %157 = tpu.matmul %156, %26, %cst_49 {dimension_numbers = #tpu.dot_dimension_numbers<[1], [0], [0], [1], [0, 0, 1, 1], [], []>} : vector<8x32xf32>, vector<32x32xf32>, vector<8x32xf32> -> vector<8x32xf32>
    %cst_50 = arith.constant dense<0.000000e+00> : vector<8x32xf32>
    %158 = tpu.matmul %156, %28, %cst_50 {dimension_numbers = #tpu.dot_dimension_numbers<[1], [0], [0], [1], [0, 0, 1, 1], [], []>} : vector<8x32xf32>, vector<32x32xf32>, vector<8x32xf32> -> vector<8x32xf32>
    %cst_51 = arith.constant dense<0.000000e+00> : vector<8x32xf32>
    %159 = tpu.matmul %156, %30, %cst_51 {dimension_numbers = #tpu.dot_dimension_numbers<[1], [0], [0], [1], [0, 0, 1, 1], [], []>} : vector<8x32xf32>, vector<32x32xf32>, vector<8x32xf32> -> vector<8x32xf32>
    %160 = vector.broadcast %31 : vector<1x32xf32> to vector<8x32xf32>
    %161 = arith.addf %159, %160 : vector<8x32xf32>
    %162 = vector.extract_strided_slice %10 {offsets = [4, 0, 0], sizes = [1, 8, 32], strides = [1, 1, 1]} : vector<8x8x32xf32> to vector<1x8x32xf32>
    %163 = vector.shape_cast %162 : vector<1x8x32xf32> to vector<8x32xf32>
    %164 = arith.addf %163, %157 : vector<8x32xf32>
    %165 = arith.negf %164 : vector<8x32xf32>
    %166 = math.exp %165 : vector<8x32xf32>
    %cst_52 = arith.constant 1.000000e+00 : f32
    %167 = vector.broadcast %cst_52 : f32 to vector<8x32xf32>
    %168 = arith.addf %167, %166 : vector<8x32xf32>
    %169 = arith.divf %167, %168 : vector<8x32xf32>
    %170 = vector.extract_strided_slice %17 {offsets = [4, 0, 0], sizes = [1, 8, 32], strides = [1, 1, 1]} : vector<8x8x32xf32> to vector<1x8x32xf32>
    %171 = vector.shape_cast %170 : vector<1x8x32xf32> to vector<8x32xf32>
    %172 = arith.addf %171, %158 : vector<8x32xf32>
    %173 = arith.negf %172 : vector<8x32xf32>
    %174 = math.exp %173 : vector<8x32xf32>
    %cst_53 = arith.constant 1.000000e+00 : f32
    %175 = vector.broadcast %cst_53 : f32 to vector<8x32xf32>
    %176 = arith.addf %175, %174 : vector<8x32xf32>
    %177 = arith.divf %175, %176 : vector<8x32xf32>
    %178 = vector.extract_strided_slice %24 {offsets = [4, 0, 0], sizes = [1, 8, 32], strides = [1, 1, 1]} : vector<8x8x32xf32> to vector<1x8x32xf32>
    %179 = vector.shape_cast %178 : vector<1x8x32xf32> to vector<8x32xf32>
    %180 = arith.mulf %169, %161 : vector<8x32xf32>
    %181 = arith.addf %179, %180 : vector<8x32xf32>
    %182 = math.tanh %181 : vector<8x32xf32>
    %cst_54 = arith.constant 1.000000e+00 : f32
    %183 = vector.broadcast %cst_54 : f32 to vector<8x32xf32>
    %184 = arith.subf %183, %177 : vector<8x32xf32>
    %185 = arith.mulf %184, %182 : vector<8x32xf32>
    %186 = arith.mulf %177, %156 : vector<8x32xf32>
    %187 = arith.addf %185, %186 : vector<8x32xf32>
    %cst_55 = arith.constant dense<0.000000e+00> : vector<8x32xf32>
    %188 = tpu.matmul %187, %26, %cst_55 {dimension_numbers = #tpu.dot_dimension_numbers<[1], [0], [0], [1], [0, 0, 1, 1], [], []>} : vector<8x32xf32>, vector<32x32xf32>, vector<8x32xf32> -> vector<8x32xf32>
    %cst_56 = arith.constant dense<0.000000e+00> : vector<8x32xf32>
    %189 = tpu.matmul %187, %28, %cst_56 {dimension_numbers = #tpu.dot_dimension_numbers<[1], [0], [0], [1], [0, 0, 1, 1], [], []>} : vector<8x32xf32>, vector<32x32xf32>, vector<8x32xf32> -> vector<8x32xf32>
    %cst_57 = arith.constant dense<0.000000e+00> : vector<8x32xf32>
    %190 = tpu.matmul %187, %30, %cst_57 {dimension_numbers = #tpu.dot_dimension_numbers<[1], [0], [0], [1], [0, 0, 1, 1], [], []>} : vector<8x32xf32>, vector<32x32xf32>, vector<8x32xf32> -> vector<8x32xf32>
    %191 = vector.broadcast %31 : vector<1x32xf32> to vector<8x32xf32>
    %192 = arith.addf %190, %191 : vector<8x32xf32>
    %193 = vector.extract_strided_slice %10 {offsets = [5, 0, 0], sizes = [1, 8, 32], strides = [1, 1, 1]} : vector<8x8x32xf32> to vector<1x8x32xf32>
    %194 = vector.shape_cast %193 : vector<1x8x32xf32> to vector<8x32xf32>
    %195 = arith.addf %194, %188 : vector<8x32xf32>
    %196 = arith.negf %195 : vector<8x32xf32>
    %197 = math.exp %196 : vector<8x32xf32>
    %cst_58 = arith.constant 1.000000e+00 : f32
    %198 = vector.broadcast %cst_58 : f32 to vector<8x32xf32>
    %199 = arith.addf %198, %197 : vector<8x32xf32>
    %200 = arith.divf %198, %199 : vector<8x32xf32>
    %201 = vector.extract_strided_slice %17 {offsets = [5, 0, 0], sizes = [1, 8, 32], strides = [1, 1, 1]} : vector<8x8x32xf32> to vector<1x8x32xf32>
    %202 = vector.shape_cast %201 : vector<1x8x32xf32> to vector<8x32xf32>
    %203 = arith.addf %202, %189 : vector<8x32xf32>
    %204 = arith.negf %203 : vector<8x32xf32>
    %205 = math.exp %204 : vector<8x32xf32>
    %cst_59 = arith.constant 1.000000e+00 : f32
    %206 = vector.broadcast %cst_59 : f32 to vector<8x32xf32>
    %207 = arith.addf %206, %205 : vector<8x32xf32>
    %208 = arith.divf %206, %207 : vector<8x32xf32>
    %209 = vector.extract_strided_slice %24 {offsets = [5, 0, 0], sizes = [1, 8, 32], strides = [1, 1, 1]} : vector<8x8x32xf32> to vector<1x8x32xf32>
    %210 = vector.shape_cast %209 : vector<1x8x32xf32> to vector<8x32xf32>
    %211 = arith.mulf %200, %192 : vector<8x32xf32>
    %212 = arith.addf %210, %211 : vector<8x32xf32>
    %213 = math.tanh %212 : vector<8x32xf32>
    %cst_60 = arith.constant 1.000000e+00 : f32
    %214 = vector.broadcast %cst_60 : f32 to vector<8x32xf32>
    %215 = arith.subf %214, %208 : vector<8x32xf32>
    %216 = arith.mulf %215, %213 : vector<8x32xf32>
    %217 = arith.mulf %208, %187 : vector<8x32xf32>
    %218 = arith.addf %216, %217 : vector<8x32xf32>
    %cst_61 = arith.constant dense<0.000000e+00> : vector<8x32xf32>
    %219 = tpu.matmul %218, %26, %cst_61 {dimension_numbers = #tpu.dot_dimension_numbers<[1], [0], [0], [1], [0, 0, 1, 1], [], []>} : vector<8x32xf32>, vector<32x32xf32>, vector<8x32xf32> -> vector<8x32xf32>
    %cst_62 = arith.constant dense<0.000000e+00> : vector<8x32xf32>
    %220 = tpu.matmul %218, %28, %cst_62 {dimension_numbers = #tpu.dot_dimension_numbers<[1], [0], [0], [1], [0, 0, 1, 1], [], []>} : vector<8x32xf32>, vector<32x32xf32>, vector<8x32xf32> -> vector<8x32xf32>
    %cst_63 = arith.constant dense<0.000000e+00> : vector<8x32xf32>
    %221 = tpu.matmul %218, %30, %cst_63 {dimension_numbers = #tpu.dot_dimension_numbers<[1], [0], [0], [1], [0, 0, 1, 1], [], []>} : vector<8x32xf32>, vector<32x32xf32>, vector<8x32xf32> -> vector<8x32xf32>
    %222 = vector.broadcast %31 : vector<1x32xf32> to vector<8x32xf32>
    %223 = arith.addf %221, %222 : vector<8x32xf32>
    %224 = vector.extract_strided_slice %10 {offsets = [6, 0, 0], sizes = [1, 8, 32], strides = [1, 1, 1]} : vector<8x8x32xf32> to vector<1x8x32xf32>
    %225 = vector.shape_cast %224 : vector<1x8x32xf32> to vector<8x32xf32>
    %226 = arith.addf %225, %219 : vector<8x32xf32>
    %227 = arith.negf %226 : vector<8x32xf32>
    %228 = math.exp %227 : vector<8x32xf32>
    %cst_64 = arith.constant 1.000000e+00 : f32
    %229 = vector.broadcast %cst_64 : f32 to vector<8x32xf32>
    %230 = arith.addf %229, %228 : vector<8x32xf32>
    %231 = arith.divf %229, %230 : vector<8x32xf32>
    %232 = vector.extract_strided_slice %17 {offsets = [6, 0, 0], sizes = [1, 8, 32], strides = [1, 1, 1]} : vector<8x8x32xf32> to vector<1x8x32xf32>
    %233 = vector.shape_cast %232 : vector<1x8x32xf32> to vector<8x32xf32>
    %234 = arith.addf %233, %220 : vector<8x32xf32>
    %235 = arith.negf %234 : vector<8x32xf32>
    %236 = math.exp %235 : vector<8x32xf32>
    %cst_65 = arith.constant 1.000000e+00 : f32
    %237 = vector.broadcast %cst_65 : f32 to vector<8x32xf32>
    %238 = arith.addf %237, %236 : vector<8x32xf32>
    %239 = arith.divf %237, %238 : vector<8x32xf32>
    %240 = vector.extract_strided_slice %24 {offsets = [6, 0, 0], sizes = [1, 8, 32], strides = [1, 1, 1]} : vector<8x8x32xf32> to vector<1x8x32xf32>
    %241 = vector.shape_cast %240 : vector<1x8x32xf32> to vector<8x32xf32>
    %242 = arith.mulf %231, %223 : vector<8x32xf32>
    %243 = arith.addf %241, %242 : vector<8x32xf32>
    %244 = math.tanh %243 : vector<8x32xf32>
    %cst_66 = arith.constant 1.000000e+00 : f32
    %245 = vector.broadcast %cst_66 : f32 to vector<8x32xf32>
    %246 = arith.subf %245, %239 : vector<8x32xf32>
    %247 = arith.mulf %246, %244 : vector<8x32xf32>
    %248 = arith.mulf %239, %218 : vector<8x32xf32>
    %249 = arith.addf %247, %248 : vector<8x32xf32>
    %cst_67 = arith.constant dense<0.000000e+00> : vector<8x32xf32>
    %250 = tpu.matmul %249, %26, %cst_67 {dimension_numbers = #tpu.dot_dimension_numbers<[1], [0], [0], [1], [0, 0, 1, 1], [], []>} : vector<8x32xf32>, vector<32x32xf32>, vector<8x32xf32> -> vector<8x32xf32>
    %cst_68 = arith.constant dense<0.000000e+00> : vector<8x32xf32>
    %251 = tpu.matmul %249, %28, %cst_68 {dimension_numbers = #tpu.dot_dimension_numbers<[1], [0], [0], [1], [0, 0, 1, 1], [], []>} : vector<8x32xf32>, vector<32x32xf32>, vector<8x32xf32> -> vector<8x32xf32>
    %cst_69 = arith.constant dense<0.000000e+00> : vector<8x32xf32>
    %252 = tpu.matmul %249, %30, %cst_69 {dimension_numbers = #tpu.dot_dimension_numbers<[1], [0], [0], [1], [0, 0, 1, 1], [], []>} : vector<8x32xf32>, vector<32x32xf32>, vector<8x32xf32> -> vector<8x32xf32>
    %253 = vector.broadcast %31 : vector<1x32xf32> to vector<8x32xf32>
    %254 = arith.addf %252, %253 : vector<8x32xf32>
    %255 = vector.extract_strided_slice %10 {offsets = [7, 0, 0], sizes = [1, 8, 32], strides = [1, 1, 1]} : vector<8x8x32xf32> to vector<1x8x32xf32>
    %256 = vector.shape_cast %255 : vector<1x8x32xf32> to vector<8x32xf32>
    %257 = arith.addf %256, %250 : vector<8x32xf32>
    %258 = arith.negf %257 : vector<8x32xf32>
    %259 = math.exp %258 : vector<8x32xf32>
    %cst_70 = arith.constant 1.000000e+00 : f32
    %260 = vector.broadcast %cst_70 : f32 to vector<8x32xf32>
    %261 = arith.addf %260, %259 : vector<8x32xf32>
    %262 = arith.divf %260, %261 : vector<8x32xf32>
    %263 = vector.extract_strided_slice %17 {offsets = [7, 0, 0], sizes = [1, 8, 32], strides = [1, 1, 1]} : vector<8x8x32xf32> to vector<1x8x32xf32>
    %264 = vector.shape_cast %263 : vector<1x8x32xf32> to vector<8x32xf32>
    %265 = arith.addf %264, %251 : vector<8x32xf32>
    %266 = arith.negf %265 : vector<8x32xf32>
    %267 = math.exp %266 : vector<8x32xf32>
    %cst_71 = arith.constant 1.000000e+00 : f32
    %268 = vector.broadcast %cst_71 : f32 to vector<8x32xf32>
    %269 = arith.addf %268, %267 : vector<8x32xf32>
    %270 = arith.divf %268, %269 : vector<8x32xf32>
    %271 = vector.extract_strided_slice %24 {offsets = [7, 0, 0], sizes = [1, 8, 32], strides = [1, 1, 1]} : vector<8x8x32xf32> to vector<1x8x32xf32>
    %272 = vector.shape_cast %271 : vector<1x8x32xf32> to vector<8x32xf32>
    %273 = arith.mulf %262, %254 : vector<8x32xf32>
    %274 = arith.addf %272, %273 : vector<8x32xf32>
    %275 = math.tanh %274 : vector<8x32xf32>
    %cst_72 = arith.constant 1.000000e+00 : f32
    %276 = vector.broadcast %cst_72 : f32 to vector<8x32xf32>
    %277 = arith.subf %276, %270 : vector<8x32xf32>
    %278 = arith.mulf %277, %275 : vector<8x32xf32>
    %279 = arith.mulf %270, %249 : vector<8x32xf32>
    %280 = arith.addf %278, %279 : vector<8x32xf32>
    %281 = vector.shape_cast %63 : vector<8x32xf32> to vector<1x8x32xf32>
    %282 = vector.shape_cast %94 : vector<8x32xf32> to vector<1x8x32xf32>
    %283 = vector.shape_cast %125 : vector<8x32xf32> to vector<1x8x32xf32>
    %284 = vector.shape_cast %156 : vector<8x32xf32> to vector<1x8x32xf32>
    %285 = vector.shape_cast %187 : vector<8x32xf32> to vector<1x8x32xf32>
    %286 = vector.shape_cast %218 : vector<8x32xf32> to vector<1x8x32xf32>
    %287 = vector.shape_cast %249 : vector<8x32xf32> to vector<1x8x32xf32>
    %288 = vector.shape_cast %280 : vector<8x32xf32> to vector<1x8x32xf32>
    %289 = tpu.concatenate %281, %282, %283, %284, %285, %286, %287, %288 in 0 : vector<1x8x32xf32>, vector<1x8x32xf32>, vector<1x8x32xf32>, vector<1x8x32xf32>, vector<1x8x32xf32>, vector<1x8x32xf32>, vector<1x8x32xf32>, vector<1x8x32xf32> -> vector<8x8x32xf32>
    %c0_73 = arith.constant 0 : index
    %c0_74 = arith.constant 0 : index
    %290 = vector.load %arg7[%c0_73, %c0_74] : memref<4x32xf32, #tpu.memory_space<vmem>>, vector<4x32xf32>
    %291 = vector.shape_cast %289 : vector<8x8x32xf32> to vector<64x32xf32>
    %c0_75 = arith.constant 0 : index
    %c0_76 = arith.constant 0 : index
    %c0_77 = arith.constant 0 : index
    %292 = vector.load %arg5[%c0_75, %c0_76, %c0_77] : memref<3x32x32xf32, #tpu.memory_space<vmem>>, vector<1x32x32xf32>
    %293 = vector.shape_cast %292 : vector<1x32x32xf32> to vector<32x32xf32>
    %cst_78 = arith.constant dense<0.000000e+00> : vector<64x32xf32>
    %294 = tpu.matmul %291, %293, %cst_78 {dimension_numbers = #tpu.dot_dimension_numbers<[1], [0], [0], [1], [0, 0, 1, 1], [], []>} : vector<64x32xf32>, vector<32x32xf32>, vector<64x32xf32> -> vector<64x32xf32>
    %295 = vector.extract_strided_slice %290 {offsets = [0, 0], sizes = [1, 32], strides = [1, 1]} : vector<4x32xf32> to vector<1x32xf32>
    %296 = vector.broadcast %295 : vector<1x32xf32> to vector<64x32xf32>
    %297 = arith.addf %294, %296 : vector<64x32xf32>
    %298 = vector.shape_cast %297 : vector<64x32xf32> to vector<8x8x32xf32>
    %c1_79 = arith.constant 1 : index
    %c0_80 = arith.constant 0 : index
    %c0_81 = arith.constant 0 : index
    %299 = vector.load %arg5[%c1_79, %c0_80, %c0_81] : memref<3x32x32xf32, #tpu.memory_space<vmem>>, vector<1x32x32xf32>
    %300 = vector.shape_cast %299 : vector<1x32x32xf32> to vector<32x32xf32>
    %cst_82 = arith.constant dense<0.000000e+00> : vector<64x32xf32>
    %301 = tpu.matmul %291, %300, %cst_82 {dimension_numbers = #tpu.dot_dimension_numbers<[1], [0], [0], [1], [0, 0, 1, 1], [], []>} : vector<64x32xf32>, vector<32x32xf32>, vector<64x32xf32> -> vector<64x32xf32>
    %302 = vector.extract_strided_slice %290 {offsets = [1, 0], sizes = [1, 32], strides = [1, 1]} : vector<4x32xf32> to vector<1x32xf32>
    %303 = vector.broadcast %302 : vector<1x32xf32> to vector<64x32xf32>
    %304 = arith.addf %301, %303 : vector<64x32xf32>
    %305 = vector.shape_cast %304 : vector<64x32xf32> to vector<8x8x32xf32>
    %c2_83 = arith.constant 2 : index
    %c0_84 = arith.constant 0 : index
    %c0_85 = arith.constant 0 : index
    %306 = vector.load %arg5[%c2_83, %c0_84, %c0_85] : memref<3x32x32xf32, #tpu.memory_space<vmem>>, vector<1x32x32xf32>
    %307 = vector.shape_cast %306 : vector<1x32x32xf32> to vector<32x32xf32>
    %cst_86 = arith.constant dense<0.000000e+00> : vector<64x32xf32>
    %308 = tpu.matmul %291, %307, %cst_86 {dimension_numbers = #tpu.dot_dimension_numbers<[1], [0], [0], [1], [0, 0, 1, 1], [], []>} : vector<64x32xf32>, vector<32x32xf32>, vector<64x32xf32> -> vector<64x32xf32>
    %309 = vector.extract_strided_slice %290 {offsets = [2, 0], sizes = [1, 32], strides = [1, 1]} : vector<4x32xf32> to vector<1x32xf32>
    %310 = vector.broadcast %309 : vector<1x32xf32> to vector<64x32xf32>
    %311 = arith.addf %308, %310 : vector<64x32xf32>
    %312 = vector.shape_cast %311 : vector<64x32xf32> to vector<8x8x32xf32>
    %c0_87 = arith.constant 0 : index
    %c0_88 = arith.constant 0 : index
    %c0_89 = arith.constant 0 : index
    %313 = vector.load %arg6[%c0_87, %c0_88, %c0_89] : memref<3x32x32xf32, #tpu.memory_space<vmem>>, vector<1x32x32xf32>
    %314 = vector.shape_cast %313 : vector<1x32x32xf32> to vector<32x32xf32>
    %c1_90 = arith.constant 1 : index
    %c0_91 = arith.constant 0 : index
    %c0_92 = arith.constant 0 : index
    %315 = vector.load %arg6[%c1_90, %c0_91, %c0_92] : memref<3x32x32xf32, #tpu.memory_space<vmem>>, vector<1x32x32xf32>
    %316 = vector.shape_cast %315 : vector<1x32x32xf32> to vector<32x32xf32>
    %c2_93 = arith.constant 2 : index
    %c0_94 = arith.constant 0 : index
    %c0_95 = arith.constant 0 : index
    %317 = vector.load %arg6[%c2_93, %c0_94, %c0_95] : memref<3x32x32xf32, #tpu.memory_space<vmem>>, vector<1x32x32xf32>
    %318 = vector.shape_cast %317 : vector<1x32x32xf32> to vector<32x32xf32>
    %319 = vector.extract_strided_slice %290 {offsets = [3, 0], sizes = [1, 32], strides = [1, 1]} : vector<4x32xf32> to vector<1x32xf32>
    %cst_96 = arith.constant 0.000000e+00 : f32
    %320 = vector.broadcast %cst_96 : f32 to vector<8x32xf32>
    %cst_97 = arith.constant 0.000000e+00 : f32
    %321 = vector.broadcast %cst_97 : f32 to vector<8x32xf32>
    %cst_98 = arith.constant dense<0.000000e+00> : vector<8x32xf32>
    %322 = tpu.matmul %320, %314, %cst_98 {dimension_numbers = #tpu.dot_dimension_numbers<[1], [0], [0], [1], [0, 0, 1, 1], [], []>} : vector<8x32xf32>, vector<32x32xf32>, vector<8x32xf32> -> vector<8x32xf32>
    %cst_99 = arith.constant dense<0.000000e+00> : vector<8x32xf32>
    %323 = tpu.matmul %320, %316, %cst_99 {dimension_numbers = #tpu.dot_dimension_numbers<[1], [0], [0], [1], [0, 0, 1, 1], [], []>} : vector<8x32xf32>, vector<32x32xf32>, vector<8x32xf32> -> vector<8x32xf32>
    %cst_100 = arith.constant dense<0.000000e+00> : vector<8x32xf32>
    %324 = tpu.matmul %320, %318, %cst_100 {dimension_numbers = #tpu.dot_dimension_numbers<[1], [0], [0], [1], [0, 0, 1, 1], [], []>} : vector<8x32xf32>, vector<32x32xf32>, vector<8x32xf32> -> vector<8x32xf32>
    %325 = vector.broadcast %319 : vector<1x32xf32> to vector<8x32xf32>
    %326 = arith.addf %324, %325 : vector<8x32xf32>
    %327 = vector.extract_strided_slice %298 {offsets = [0, 0, 0], sizes = [1, 8, 32], strides = [1, 1, 1]} : vector<8x8x32xf32> to vector<1x8x32xf32>
    %328 = vector.shape_cast %327 : vector<1x8x32xf32> to vector<8x32xf32>
    %329 = arith.addf %328, %322 : vector<8x32xf32>
    %330 = arith.negf %329 : vector<8x32xf32>
    %331 = math.exp %330 : vector<8x32xf32>
    %cst_101 = arith.constant 1.000000e+00 : f32
    %332 = vector.broadcast %cst_101 : f32 to vector<8x32xf32>
    %333 = arith.addf %332, %331 : vector<8x32xf32>
    %334 = arith.divf %332, %333 : vector<8x32xf32>
    %335 = vector.extract_strided_slice %305 {offsets = [0, 0, 0], sizes = [1, 8, 32], strides = [1, 1, 1]} : vector<8x8x32xf32> to vector<1x8x32xf32>
    %336 = vector.shape_cast %335 : vector<1x8x32xf32> to vector<8x32xf32>
    %337 = arith.addf %336, %323 : vector<8x32xf32>
    %338 = arith.negf %337 : vector<8x32xf32>
    %339 = math.exp %338 : vector<8x32xf32>
    %cst_102 = arith.constant 1.000000e+00 : f32
    %340 = vector.broadcast %cst_102 : f32 to vector<8x32xf32>
    %341 = arith.addf %340, %339 : vector<8x32xf32>
    %342 = arith.divf %340, %341 : vector<8x32xf32>
    %343 = vector.extract_strided_slice %312 {offsets = [0, 0, 0], sizes = [1, 8, 32], strides = [1, 1, 1]} : vector<8x8x32xf32> to vector<1x8x32xf32>
    %344 = vector.shape_cast %343 : vector<1x8x32xf32> to vector<8x32xf32>
    %345 = arith.mulf %334, %326 : vector<8x32xf32>
    %346 = arith.addf %344, %345 : vector<8x32xf32>
    %347 = math.tanh %346 : vector<8x32xf32>
    %cst_103 = arith.constant 1.000000e+00 : f32
    %348 = vector.broadcast %cst_103 : f32 to vector<8x32xf32>
    %349 = arith.subf %348, %342 : vector<8x32xf32>
    %350 = arith.mulf %349, %347 : vector<8x32xf32>
    %351 = arith.mulf %342, %320 : vector<8x32xf32>
    %352 = arith.addf %350, %351 : vector<8x32xf32>
    %c1_i32 = arith.constant 1 : i32
    %353 = vector.broadcast %c1_i32 : i32 to vector<8x1xi32>
    %354 = arith.cmpi eq, %0, %353 : vector<8x1xi32>
    %355 = vector.shape_cast %354 : vector<8x1xi1> to vector<8x1xi1>
    %356 = vector.broadcast %355 : vector<8x1xi1> to vector<8x32xi1>
    %357 = arith.select %356, %352, %321 : vector<8x32xi1>, vector<8x32xf32>
    %cst_104 = arith.constant dense<0.000000e+00> : vector<8x32xf32>
    %358 = tpu.matmul %352, %314, %cst_104 {dimension_numbers = #tpu.dot_dimension_numbers<[1], [0], [0], [1], [0, 0, 1, 1], [], []>} : vector<8x32xf32>, vector<32x32xf32>, vector<8x32xf32> -> vector<8x32xf32>
    %cst_105 = arith.constant dense<0.000000e+00> : vector<8x32xf32>
    %359 = tpu.matmul %352, %316, %cst_105 {dimension_numbers = #tpu.dot_dimension_numbers<[1], [0], [0], [1], [0, 0, 1, 1], [], []>} : vector<8x32xf32>, vector<32x32xf32>, vector<8x32xf32> -> vector<8x32xf32>
    %cst_106 = arith.constant dense<0.000000e+00> : vector<8x32xf32>
    %360 = tpu.matmul %352, %318, %cst_106 {dimension_numbers = #tpu.dot_dimension_numbers<[1], [0], [0], [1], [0, 0, 1, 1], [], []>} : vector<8x32xf32>, vector<32x32xf32>, vector<8x32xf32> -> vector<8x32xf32>
    %361 = vector.broadcast %319 : vector<1x32xf32> to vector<8x32xf32>
    %362 = arith.addf %360, %361 : vector<8x32xf32>
    %363 = vector.extract_strided_slice %298 {offsets = [1, 0, 0], sizes = [1, 8, 32], strides = [1, 1, 1]} : vector<8x8x32xf32> to vector<1x8x32xf32>
    %364 = vector.shape_cast %363 : vector<1x8x32xf32> to vector<8x32xf32>
    %365 = arith.addf %364, %358 : vector<8x32xf32>
    %366 = arith.negf %365 : vector<8x32xf32>
    %367 = math.exp %366 : vector<8x32xf32>
    %cst_107 = arith.constant 1.000000e+00 : f32
    %368 = vector.broadcast %cst_107 : f32 to vector<8x32xf32>
    %369 = arith.addf %368, %367 : vector<8x32xf32>
    %370 = arith.divf %368, %369 : vector<8x32xf32>
    %371 = vector.extract_strided_slice %305 {offsets = [1, 0, 0], sizes = [1, 8, 32], strides = [1, 1, 1]} : vector<8x8x32xf32> to vector<1x8x32xf32>
    %372 = vector.shape_cast %371 : vector<1x8x32xf32> to vector<8x32xf32>
    %373 = arith.addf %372, %359 : vector<8x32xf32>
    %374 = arith.negf %373 : vector<8x32xf32>
    %375 = math.exp %374 : vector<8x32xf32>
    %cst_108 = arith.constant 1.000000e+00 : f32
    %376 = vector.broadcast %cst_108 : f32 to vector<8x32xf32>
    %377 = arith.addf %376, %375 : vector<8x32xf32>
    %378 = arith.divf %376, %377 : vector<8x32xf32>
    %379 = vector.extract_strided_slice %312 {offsets = [1, 0, 0], sizes = [1, 8, 32], strides = [1, 1, 1]} : vector<8x8x32xf32> to vector<1x8x32xf32>
    %380 = vector.shape_cast %379 : vector<1x8x32xf32> to vector<8x32xf32>
    %381 = arith.mulf %370, %362 : vector<8x32xf32>
    %382 = arith.addf %380, %381 : vector<8x32xf32>
    %383 = math.tanh %382 : vector<8x32xf32>
    %cst_109 = arith.constant 1.000000e+00 : f32
    %384 = vector.broadcast %cst_109 : f32 to vector<8x32xf32>
    %385 = arith.subf %384, %378 : vector<8x32xf32>
    %386 = arith.mulf %385, %383 : vector<8x32xf32>
    %387 = arith.mulf %378, %352 : vector<8x32xf32>
    %388 = arith.addf %386, %387 : vector<8x32xf32>
    %c2_i32 = arith.constant 2 : i32
    %389 = vector.broadcast %c2_i32 : i32 to vector<8x1xi32>
    %390 = arith.cmpi eq, %0, %389 : vector<8x1xi32>
    %391 = vector.shape_cast %390 : vector<8x1xi1> to vector<8x1xi1>
    %392 = vector.broadcast %391 : vector<8x1xi1> to vector<8x32xi1>
    %393 = arith.select %392, %388, %357 : vector<8x32xi1>, vector<8x32xf32>
    %cst_110 = arith.constant dense<0.000000e+00> : vector<8x32xf32>
    %394 = tpu.matmul %388, %314, %cst_110 {dimension_numbers = #tpu.dot_dimension_numbers<[1], [0], [0], [1], [0, 0, 1, 1], [], []>} : vector<8x32xf32>, vector<32x32xf32>, vector<8x32xf32> -> vector<8x32xf32>
    %cst_111 = arith.constant dense<0.000000e+00> : vector<8x32xf32>
    %395 = tpu.matmul %388, %316, %cst_111 {dimension_numbers = #tpu.dot_dimension_numbers<[1], [0], [0], [1], [0, 0, 1, 1], [], []>} : vector<8x32xf32>, vector<32x32xf32>, vector<8x32xf32> -> vector<8x32xf32>
    %cst_112 = arith.constant dense<0.000000e+00> : vector<8x32xf32>
    %396 = tpu.matmul %388, %318, %cst_112 {dimension_numbers = #tpu.dot_dimension_numbers<[1], [0], [0], [1], [0, 0, 1, 1], [], []>} : vector<8x32xf32>, vector<32x32xf32>, vector<8x32xf32> -> vector<8x32xf32>
    %397 = vector.broadcast %319 : vector<1x32xf32> to vector<8x32xf32>
    %398 = arith.addf %396, %397 : vector<8x32xf32>
    %399 = vector.extract_strided_slice %298 {offsets = [2, 0, 0], sizes = [1, 8, 32], strides = [1, 1, 1]} : vector<8x8x32xf32> to vector<1x8x32xf32>
    %400 = vector.shape_cast %399 : vector<1x8x32xf32> to vector<8x32xf32>
    %401 = arith.addf %400, %394 : vector<8x32xf32>
    %402 = arith.negf %401 : vector<8x32xf32>
    %403 = math.exp %402 : vector<8x32xf32>
    %cst_113 = arith.constant 1.000000e+00 : f32
    %404 = vector.broadcast %cst_113 : f32 to vector<8x32xf32>
    %405 = arith.addf %404, %403 : vector<8x32xf32>
    %406 = arith.divf %404, %405 : vector<8x32xf32>
    %407 = vector.extract_strided_slice %305 {offsets = [2, 0, 0], sizes = [1, 8, 32], strides = [1, 1, 1]} : vector<8x8x32xf32> to vector<1x8x32xf32>
    %408 = vector.shape_cast %407 : vector<1x8x32xf32> to vector<8x32xf32>
    %409 = arith.addf %408, %395 : vector<8x32xf32>
    %410 = arith.negf %409 : vector<8x32xf32>
    %411 = math.exp %410 : vector<8x32xf32>
    %cst_114 = arith.constant 1.000000e+00 : f32
    %412 = vector.broadcast %cst_114 : f32 to vector<8x32xf32>
    %413 = arith.addf %412, %411 : vector<8x32xf32>
    %414 = arith.divf %412, %413 : vector<8x32xf32>
    %415 = vector.extract_strided_slice %312 {offsets = [2, 0, 0], sizes = [1, 8, 32], strides = [1, 1, 1]} : vector<8x8x32xf32> to vector<1x8x32xf32>
    %416 = vector.shape_cast %415 : vector<1x8x32xf32> to vector<8x32xf32>
    %417 = arith.mulf %406, %398 : vector<8x32xf32>
    %418 = arith.addf %416, %417 : vector<8x32xf32>
    %419 = math.tanh %418 : vector<8x32xf32>
    %cst_115 = arith.constant 1.000000e+00 : f32
    %420 = vector.broadcast %cst_115 : f32 to vector<8x32xf32>
    %421 = arith.subf %420, %414 : vector<8x32xf32>
    %422 = arith.mulf %421, %419 : vector<8x32xf32>
    %423 = arith.mulf %414, %388 : vector<8x32xf32>
    %424 = arith.addf %422, %423 : vector<8x32xf32>
    %c3_i32 = arith.constant 3 : i32
    %425 = vector.broadcast %c3_i32 : i32 to vector<8x1xi32>
    %426 = arith.cmpi eq, %0, %425 : vector<8x1xi32>
    %427 = vector.shape_cast %426 : vector<8x1xi1> to vector<8x1xi1>
    %428 = vector.broadcast %427 : vector<8x1xi1> to vector<8x32xi1>
    %429 = arith.select %428, %424, %393 : vector<8x32xi1>, vector<8x32xf32>
    %cst_116 = arith.constant dense<0.000000e+00> : vector<8x32xf32>
    %430 = tpu.matmul %424, %314, %cst_116 {dimension_numbers = #tpu.dot_dimension_numbers<[1], [0], [0], [1], [0, 0, 1, 1], [], []>} : vector<8x32xf32>, vector<32x32xf32>, vector<8x32xf32> -> vector<8x32xf32>
    %cst_117 = arith.constant dense<0.000000e+00> : vector<8x32xf32>
    %431 = tpu.matmul %424, %316, %cst_117 {dimension_numbers = #tpu.dot_dimension_numbers<[1], [0], [0], [1], [0, 0, 1, 1], [], []>} : vector<8x32xf32>, vector<32x32xf32>, vector<8x32xf32> -> vector<8x32xf32>
    %cst_118 = arith.constant dense<0.000000e+00> : vector<8x32xf32>
    %432 = tpu.matmul %424, %318, %cst_118 {dimension_numbers = #tpu.dot_dimension_numbers<[1], [0], [0], [1], [0, 0, 1, 1], [], []>} : vector<8x32xf32>, vector<32x32xf32>, vector<8x32xf32> -> vector<8x32xf32>
    %433 = vector.broadcast %319 : vector<1x32xf32> to vector<8x32xf32>
    %434 = arith.addf %432, %433 : vector<8x32xf32>
    %435 = vector.extract_strided_slice %298 {offsets = [3, 0, 0], sizes = [1, 8, 32], strides = [1, 1, 1]} : vector<8x8x32xf32> to vector<1x8x32xf32>
    %436 = vector.shape_cast %435 : vector<1x8x32xf32> to vector<8x32xf32>
    %437 = arith.addf %436, %430 : vector<8x32xf32>
    %438 = arith.negf %437 : vector<8x32xf32>
    %439 = math.exp %438 : vector<8x32xf32>
    %cst_119 = arith.constant 1.000000e+00 : f32
    %440 = vector.broadcast %cst_119 : f32 to vector<8x32xf32>
    %441 = arith.addf %440, %439 : vector<8x32xf32>
    %442 = arith.divf %440, %441 : vector<8x32xf32>
    %443 = vector.extract_strided_slice %305 {offsets = [3, 0, 0], sizes = [1, 8, 32], strides = [1, 1, 1]} : vector<8x8x32xf32> to vector<1x8x32xf32>
    %444 = vector.shape_cast %443 : vector<1x8x32xf32> to vector<8x32xf32>
    %445 = arith.addf %444, %431 : vector<8x32xf32>
    %446 = arith.negf %445 : vector<8x32xf32>
    %447 = math.exp %446 : vector<8x32xf32>
    %cst_120 = arith.constant 1.000000e+00 : f32
    %448 = vector.broadcast %cst_120 : f32 to vector<8x32xf32>
    %449 = arith.addf %448, %447 : vector<8x32xf32>
    %450 = arith.divf %448, %449 : vector<8x32xf32>
    %451 = vector.extract_strided_slice %312 {offsets = [3, 0, 0], sizes = [1, 8, 32], strides = [1, 1, 1]} : vector<8x8x32xf32> to vector<1x8x32xf32>
    %452 = vector.shape_cast %451 : vector<1x8x32xf32> to vector<8x32xf32>
    %453 = arith.mulf %442, %434 : vector<8x32xf32>
    %454 = arith.addf %452, %453 : vector<8x32xf32>
    %455 = math.tanh %454 : vector<8x32xf32>
    %cst_121 = arith.constant 1.000000e+00 : f32
    %456 = vector.broadcast %cst_121 : f32 to vector<8x32xf32>
    %457 = arith.subf %456, %450 : vector<8x32xf32>
    %458 = arith.mulf %457, %455 : vector<8x32xf32>
    %459 = arith.mulf %450, %424 : vector<8x32xf32>
    %460 = arith.addf %458, %459 : vector<8x32xf32>
    %c4_i32 = arith.constant 4 : i32
    %461 = vector.broadcast %c4_i32 : i32 to vector<8x1xi32>
    %462 = arith.cmpi eq, %0, %461 : vector<8x1xi32>
    %463 = vector.shape_cast %462 : vector<8x1xi1> to vector<8x1xi1>
    %464 = vector.broadcast %463 : vector<8x1xi1> to vector<8x32xi1>
    %465 = arith.select %464, %460, %429 : vector<8x32xi1>, vector<8x32xf32>
    %cst_122 = arith.constant dense<0.000000e+00> : vector<8x32xf32>
    %466 = tpu.matmul %460, %314, %cst_122 {dimension_numbers = #tpu.dot_dimension_numbers<[1], [0], [0], [1], [0, 0, 1, 1], [], []>} : vector<8x32xf32>, vector<32x32xf32>, vector<8x32xf32> -> vector<8x32xf32>
    %cst_123 = arith.constant dense<0.000000e+00> : vector<8x32xf32>
    %467 = tpu.matmul %460, %316, %cst_123 {dimension_numbers = #tpu.dot_dimension_numbers<[1], [0], [0], [1], [0, 0, 1, 1], [], []>} : vector<8x32xf32>, vector<32x32xf32>, vector<8x32xf32> -> vector<8x32xf32>
    %cst_124 = arith.constant dense<0.000000e+00> : vector<8x32xf32>
    %468 = tpu.matmul %460, %318, %cst_124 {dimension_numbers = #tpu.dot_dimension_numbers<[1], [0], [0], [1], [0, 0, 1, 1], [], []>} : vector<8x32xf32>, vector<32x32xf32>, vector<8x32xf32> -> vector<8x32xf32>
    %469 = vector.broadcast %319 : vector<1x32xf32> to vector<8x32xf32>
    %470 = arith.addf %468, %469 : vector<8x32xf32>
    %471 = vector.extract_strided_slice %298 {offsets = [4, 0, 0], sizes = [1, 8, 32], strides = [1, 1, 1]} : vector<8x8x32xf32> to vector<1x8x32xf32>
    %472 = vector.shape_cast %471 : vector<1x8x32xf32> to vector<8x32xf32>
    %473 = arith.addf %472, %466 : vector<8x32xf32>
    %474 = arith.negf %473 : vector<8x32xf32>
    %475 = math.exp %474 : vector<8x32xf32>
    %cst_125 = arith.constant 1.000000e+00 : f32
    %476 = vector.broadcast %cst_125 : f32 to vector<8x32xf32>
    %477 = arith.addf %476, %475 : vector<8x32xf32>
    %478 = arith.divf %476, %477 : vector<8x32xf32>
    %479 = vector.extract_strided_slice %305 {offsets = [4, 0, 0], sizes = [1, 8, 32], strides = [1, 1, 1]} : vector<8x8x32xf32> to vector<1x8x32xf32>
    %480 = vector.shape_cast %479 : vector<1x8x32xf32> to vector<8x32xf32>
    %481 = arith.addf %480, %467 : vector<8x32xf32>
    %482 = arith.negf %481 : vector<8x32xf32>
    %483 = math.exp %482 : vector<8x32xf32>
    %cst_126 = arith.constant 1.000000e+00 : f32
    %484 = vector.broadcast %cst_126 : f32 to vector<8x32xf32>
    %485 = arith.addf %484, %483 : vector<8x32xf32>
    %486 = arith.divf %484, %485 : vector<8x32xf32>
    %487 = vector.extract_strided_slice %312 {offsets = [4, 0, 0], sizes = [1, 8, 32], strides = [1, 1, 1]} : vector<8x8x32xf32> to vector<1x8x32xf32>
    %488 = vector.shape_cast %487 : vector<1x8x32xf32> to vector<8x32xf32>
    %489 = arith.mulf %478, %470 : vector<8x32xf32>
    %490 = arith.addf %488, %489 : vector<8x32xf32>
    %491 = math.tanh %490 : vector<8x32xf32>
    %cst_127 = arith.constant 1.000000e+00 : f32
    %492 = vector.broadcast %cst_127 : f32 to vector<8x32xf32>
    %493 = arith.subf %492, %486 : vector<8x32xf32>
    %494 = arith.mulf %493, %491 : vector<8x32xf32>
    %495 = arith.mulf %486, %460 : vector<8x32xf32>
    %496 = arith.addf %494, %495 : vector<8x32xf32>
    %c5_i32 = arith.constant 5 : i32
    %497 = vector.broadcast %c5_i32 : i32 to vector<8x1xi32>
    %498 = arith.cmpi eq, %0, %497 : vector<8x1xi32>
    %499 = vector.shape_cast %498 : vector<8x1xi1> to vector<8x1xi1>
    %500 = vector.broadcast %499 : vector<8x1xi1> to vector<8x32xi1>
    %501 = arith.select %500, %496, %465 : vector<8x32xi1>, vector<8x32xf32>
    %cst_128 = arith.constant dense<0.000000e+00> : vector<8x32xf32>
    %502 = tpu.matmul %496, %314, %cst_128 {dimension_numbers = #tpu.dot_dimension_numbers<[1], [0], [0], [1], [0, 0, 1, 1], [], []>} : vector<8x32xf32>, vector<32x32xf32>, vector<8x32xf32> -> vector<8x32xf32>
    %cst_129 = arith.constant dense<0.000000e+00> : vector<8x32xf32>
    %503 = tpu.matmul %496, %316, %cst_129 {dimension_numbers = #tpu.dot_dimension_numbers<[1], [0], [0], [1], [0, 0, 1, 1], [], []>} : vector<8x32xf32>, vector<32x32xf32>, vector<8x32xf32> -> vector<8x32xf32>
    %cst_130 = arith.constant dense<0.000000e+00> : vector<8x32xf32>
    %504 = tpu.matmul %496, %318, %cst_130 {dimension_numbers = #tpu.dot_dimension_numbers<[1], [0], [0], [1], [0, 0, 1, 1], [], []>} : vector<8x32xf32>, vector<32x32xf32>, vector<8x32xf32> -> vector<8x32xf32>
    %505 = vector.broadcast %319 : vector<1x32xf32> to vector<8x32xf32>
    %506 = arith.addf %504, %505 : vector<8x32xf32>
    %507 = vector.extract_strided_slice %298 {offsets = [5, 0, 0], sizes = [1, 8, 32], strides = [1, 1, 1]} : vector<8x8x32xf32> to vector<1x8x32xf32>
    %508 = vector.shape_cast %507 : vector<1x8x32xf32> to vector<8x32xf32>
    %509 = arith.addf %508, %502 : vector<8x32xf32>
    %510 = arith.negf %509 : vector<8x32xf32>
    %511 = math.exp %510 : vector<8x32xf32>
    %cst_131 = arith.constant 1.000000e+00 : f32
    %512 = vector.broadcast %cst_131 : f32 to vector<8x32xf32>
    %513 = arith.addf %512, %511 : vector<8x32xf32>
    %514 = arith.divf %512, %513 : vector<8x32xf32>
    %515 = vector.extract_strided_slice %305 {offsets = [5, 0, 0], sizes = [1, 8, 32], strides = [1, 1, 1]} : vector<8x8x32xf32> to vector<1x8x32xf32>
    %516 = vector.shape_cast %515 : vector<1x8x32xf32> to vector<8x32xf32>
    %517 = arith.addf %516, %503 : vector<8x32xf32>
    %518 = arith.negf %517 : vector<8x32xf32>
    %519 = math.exp %518 : vector<8x32xf32>
    %cst_132 = arith.constant 1.000000e+00 : f32
    %520 = vector.broadcast %cst_132 : f32 to vector<8x32xf32>
    %521 = arith.addf %520, %519 : vector<8x32xf32>
    %522 = arith.divf %520, %521 : vector<8x32xf32>
    %523 = vector.extract_strided_slice %312 {offsets = [5, 0, 0], sizes = [1, 8, 32], strides = [1, 1, 1]} : vector<8x8x32xf32> to vector<1x8x32xf32>
    %524 = vector.shape_cast %523 : vector<1x8x32xf32> to vector<8x32xf32>
    %525 = arith.mulf %514, %506 : vector<8x32xf32>
    %526 = arith.addf %524, %525 : vector<8x32xf32>
    %527 = math.tanh %526 : vector<8x32xf32>
    %cst_133 = arith.constant 1.000000e+00 : f32
    %528 = vector.broadcast %cst_133 : f32 to vector<8x32xf32>
    %529 = arith.subf %528, %522 : vector<8x32xf32>
    %530 = arith.mulf %529, %527 : vector<8x32xf32>
    %531 = arith.mulf %522, %496 : vector<8x32xf32>
    %532 = arith.addf %530, %531 : vector<8x32xf32>
    %c6_i32 = arith.constant 6 : i32
    %533 = vector.broadcast %c6_i32 : i32 to vector<8x1xi32>
    %534 = arith.cmpi eq, %0, %533 : vector<8x1xi32>
    %535 = vector.shape_cast %534 : vector<8x1xi1> to vector<8x1xi1>
    %536 = vector.broadcast %535 : vector<8x1xi1> to vector<8x32xi1>
    %537 = arith.select %536, %532, %501 : vector<8x32xi1>, vector<8x32xf32>
    %cst_134 = arith.constant dense<0.000000e+00> : vector<8x32xf32>
    %538 = tpu.matmul %532, %314, %cst_134 {dimension_numbers = #tpu.dot_dimension_numbers<[1], [0], [0], [1], [0, 0, 1, 1], [], []>} : vector<8x32xf32>, vector<32x32xf32>, vector<8x32xf32> -> vector<8x32xf32>
    %cst_135 = arith.constant dense<0.000000e+00> : vector<8x32xf32>
    %539 = tpu.matmul %532, %316, %cst_135 {dimension_numbers = #tpu.dot_dimension_numbers<[1], [0], [0], [1], [0, 0, 1, 1], [], []>} : vector<8x32xf32>, vector<32x32xf32>, vector<8x32xf32> -> vector<8x32xf32>
    %cst_136 = arith.constant dense<0.000000e+00> : vector<8x32xf32>
    %540 = tpu.matmul %532, %318, %cst_136 {dimension_numbers = #tpu.dot_dimension_numbers<[1], [0], [0], [1], [0, 0, 1, 1], [], []>} : vector<8x32xf32>, vector<32x32xf32>, vector<8x32xf32> -> vector<8x32xf32>
    %541 = vector.broadcast %319 : vector<1x32xf32> to vector<8x32xf32>
    %542 = arith.addf %540, %541 : vector<8x32xf32>
    %543 = vector.extract_strided_slice %298 {offsets = [6, 0, 0], sizes = [1, 8, 32], strides = [1, 1, 1]} : vector<8x8x32xf32> to vector<1x8x32xf32>
    %544 = vector.shape_cast %543 : vector<1x8x32xf32> to vector<8x32xf32>
    %545 = arith.addf %544, %538 : vector<8x32xf32>
    %546 = arith.negf %545 : vector<8x32xf32>
    %547 = math.exp %546 : vector<8x32xf32>
    %cst_137 = arith.constant 1.000000e+00 : f32
    %548 = vector.broadcast %cst_137 : f32 to vector<8x32xf32>
    %549 = arith.addf %548, %547 : vector<8x32xf32>
    %550 = arith.divf %548, %549 : vector<8x32xf32>
    %551 = vector.extract_strided_slice %305 {offsets = [6, 0, 0], sizes = [1, 8, 32], strides = [1, 1, 1]} : vector<8x8x32xf32> to vector<1x8x32xf32>
    %552 = vector.shape_cast %551 : vector<1x8x32xf32> to vector<8x32xf32>
    %553 = arith.addf %552, %539 : vector<8x32xf32>
    %554 = arith.negf %553 : vector<8x32xf32>
    %555 = math.exp %554 : vector<8x32xf32>
    %cst_138 = arith.constant 1.000000e+00 : f32
    %556 = vector.broadcast %cst_138 : f32 to vector<8x32xf32>
    %557 = arith.addf %556, %555 : vector<8x32xf32>
    %558 = arith.divf %556, %557 : vector<8x32xf32>
    %559 = vector.extract_strided_slice %312 {offsets = [6, 0, 0], sizes = [1, 8, 32], strides = [1, 1, 1]} : vector<8x8x32xf32> to vector<1x8x32xf32>
    %560 = vector.shape_cast %559 : vector<1x8x32xf32> to vector<8x32xf32>
    %561 = arith.mulf %550, %542 : vector<8x32xf32>
    %562 = arith.addf %560, %561 : vector<8x32xf32>
    %563 = math.tanh %562 : vector<8x32xf32>
    %cst_139 = arith.constant 1.000000e+00 : f32
    %564 = vector.broadcast %cst_139 : f32 to vector<8x32xf32>
    %565 = arith.subf %564, %558 : vector<8x32xf32>
    %566 = arith.mulf %565, %563 : vector<8x32xf32>
    %567 = arith.mulf %558, %532 : vector<8x32xf32>
    %568 = arith.addf %566, %567 : vector<8x32xf32>
    %c7_i32 = arith.constant 7 : i32
    %569 = vector.broadcast %c7_i32 : i32 to vector<8x1xi32>
    %570 = arith.cmpi eq, %0, %569 : vector<8x1xi32>
    %571 = vector.shape_cast %570 : vector<8x1xi1> to vector<8x1xi1>
    %572 = vector.broadcast %571 : vector<8x1xi1> to vector<8x32xi1>
    %573 = arith.select %572, %568, %537 : vector<8x32xi1>, vector<8x32xf32>
    %cst_140 = arith.constant dense<0.000000e+00> : vector<8x32xf32>
    %574 = tpu.matmul %568, %314, %cst_140 {dimension_numbers = #tpu.dot_dimension_numbers<[1], [0], [0], [1], [0, 0, 1, 1], [], []>} : vector<8x32xf32>, vector<32x32xf32>, vector<8x32xf32> -> vector<8x32xf32>
    %cst_141 = arith.constant dense<0.000000e+00> : vector<8x32xf32>
    %575 = tpu.matmul %568, %316, %cst_141 {dimension_numbers = #tpu.dot_dimension_numbers<[1], [0], [0], [1], [0, 0, 1, 1], [], []>} : vector<8x32xf32>, vector<32x32xf32>, vector<8x32xf32> -> vector<8x32xf32>
    %cst_142 = arith.constant dense<0.000000e+00> : vector<8x32xf32>
    %576 = tpu.matmul %568, %318, %cst_142 {dimension_numbers = #tpu.dot_dimension_numbers<[1], [0], [0], [1], [0, 0, 1, 1], [], []>} : vector<8x32xf32>, vector<32x32xf32>, vector<8x32xf32> -> vector<8x32xf32>
    %577 = vector.broadcast %319 : vector<1x32xf32> to vector<8x32xf32>
    %578 = arith.addf %576, %577 : vector<8x32xf32>
    %579 = vector.extract_strided_slice %298 {offsets = [7, 0, 0], sizes = [1, 8, 32], strides = [1, 1, 1]} : vector<8x8x32xf32> to vector<1x8x32xf32>
    %580 = vector.shape_cast %579 : vector<1x8x32xf32> to vector<8x32xf32>
    %581 = arith.addf %580, %574 : vector<8x32xf32>
    %582 = arith.negf %581 : vector<8x32xf32>
    %583 = math.exp %582 : vector<8x32xf32>
    %cst_143 = arith.constant 1.000000e+00 : f32
    %584 = vector.broadcast %cst_143 : f32 to vector<8x32xf32>
    %585 = arith.addf %584, %583 : vector<8x32xf32>
    %586 = arith.divf %584, %585 : vector<8x32xf32>
    %587 = vector.extract_strided_slice %305 {offsets = [7, 0, 0], sizes = [1, 8, 32], strides = [1, 1, 1]} : vector<8x8x32xf32> to vector<1x8x32xf32>
    %588 = vector.shape_cast %587 : vector<1x8x32xf32> to vector<8x32xf32>
    %589 = arith.addf %588, %575 : vector<8x32xf32>
    %590 = arith.negf %589 : vector<8x32xf32>
    %591 = math.exp %590 : vector<8x32xf32>
    %cst_144 = arith.constant 1.000000e+00 : f32
    %592 = vector.broadcast %cst_144 : f32 to vector<8x32xf32>
    %593 = arith.addf %592, %591 : vector<8x32xf32>
    %594 = arith.divf %592, %593 : vector<8x32xf32>
    %595 = vector.extract_strided_slice %312 {offsets = [7, 0, 0], sizes = [1, 8, 32], strides = [1, 1, 1]} : vector<8x8x32xf32> to vector<1x8x32xf32>
    %596 = vector.shape_cast %595 : vector<1x8x32xf32> to vector<8x32xf32>
    %597 = arith.mulf %586, %578 : vector<8x32xf32>
    %598 = arith.addf %596, %597 : vector<8x32xf32>
    %599 = math.tanh %598 : vector<8x32xf32>
    %cst_145 = arith.constant 1.000000e+00 : f32
    %600 = vector.broadcast %cst_145 : f32 to vector<8x32xf32>
    %601 = arith.subf %600, %594 : vector<8x32xf32>
    %602 = arith.mulf %601, %599 : vector<8x32xf32>
    %603 = arith.mulf %594, %568 : vector<8x32xf32>
    %604 = arith.addf %602, %603 : vector<8x32xf32>
    %c8_i32 = arith.constant 8 : i32
    %605 = vector.broadcast %c8_i32 : i32 to vector<8x1xi32>
    %606 = arith.cmpi eq, %0, %605 : vector<8x1xi32>
    %607 = vector.shape_cast %606 : vector<8x1xi1> to vector<8x1xi1>
    %608 = vector.broadcast %607 : vector<8x1xi1> to vector<8x32xi1>
    %609 = arith.select %608, %604, %573 : vector<8x32xi1>, vector<8x32xf32>
    %c0_146 = arith.constant 0 : index
    %c0_147 = arith.constant 0 : index
    %610 = vector.load %arg8[%c0_146, %c0_147] : memref<32x32xf32, #tpu.memory_space<vmem>>, vector<32x32xf32>
    %cst_148 = arith.constant dense<0.000000e+00> : vector<8x32xf32>
    %611 = tpu.matmul %609, %610, %cst_148 {dimension_numbers = #tpu.dot_dimension_numbers<[1], [0], [0], [1], [0, 0, 1, 1], [], []>} : vector<8x32xf32>, vector<32x32xf32>, vector<8x32xf32> -> vector<8x32xf32>
    %c0_149 = arith.constant 0 : index
    %c0_150 = arith.constant 0 : index
    %612 = vector.load %arg9[%c0_149, %c0_150] : memref<1x32xf32, #tpu.memory_space<vmem>>, vector<1x32xf32>
    %613 = vector.broadcast %612 : vector<1x32xf32> to vector<8x32xf32>
    %614 = arith.addf %611, %613 : vector<8x32xf32>
    %c0_151 = arith.constant 0 : index
    %c0_152 = arith.constant 0 : index
    %615 = vector.load %arg10[%c0_151, %c0_152] : memref<32x32xf32, #tpu.memory_space<vmem>>, vector<32x32xf32>
    %cst_153 = arith.constant dense<0.000000e+00> : vector<8x32xf32>
    %616 = tpu.matmul %614, %615, %cst_153 {dimension_numbers = #tpu.dot_dimension_numbers<[1], [0], [0], [1], [0, 0, 1, 1], [], []>} : vector<8x32xf32>, vector<32x32xf32>, vector<8x32xf32> -> vector<8x32xf32>
    %c0_154 = arith.constant 0 : index
    %c0_155 = arith.constant 0 : index
    %617 = vector.load %arg11[%c0_154, %c0_155] : memref<1x32xf32, #tpu.memory_space<vmem>>, vector<1x32xf32>
    %618 = vector.broadcast %617 : vector<1x32xf32> to vector<8x32xf32>
    %619 = arith.addf %616, %618 : vector<8x32xf32>
    %cst_156 = arith.constant 0.000000e+00 : f32
    %620 = vector.broadcast %cst_156 : f32 to vector<8x32xf32>
    %621 = arith.maximumf %619, %620 : vector<8x32xf32>
    %c0_157 = arith.constant 0 : index
    %c0_158 = arith.constant 0 : index
    %622 = vector.load %arg12[%c0_157, %c0_158] : memref<32x32xf32, #tpu.memory_space<vmem>>, vector<32x32xf32>
    %cst_159 = arith.constant dense<0.000000e+00> : vector<8x32xf32>
    %623 = tpu.matmul %621, %622, %cst_159 {dimension_numbers = #tpu.dot_dimension_numbers<[1], [0], [0], [1], [0, 0, 1, 1], [], []>} : vector<8x32xf32>, vector<32x32xf32>, vector<8x32xf32> -> vector<8x32xf32>
    %c0_160 = arith.constant 0 : index
    %c0_161 = arith.constant 0 : index
    %624 = vector.load %arg13[%c0_160, %c0_161] : memref<1x32xf32, #tpu.memory_space<vmem>>, vector<1x32xf32>
    %625 = vector.broadcast %624 : vector<1x32xf32> to vector<8x32xf32>
    %626 = arith.addf %623, %625 : vector<8x32xf32>
    %c0_162 = arith.constant 0 : index
    %c0_163 = arith.constant 0 : index
    %627 = vector.load %arg14[%c0_162, %c0_163] : memref<8x32xf32, #tpu.memory_space<vmem>>, vector<8x32xf32>
    tpu.vector_store %arg14[%c0_162, %c0_163], %626 {strides = array<i32>} : memref<8x32xf32, #tpu.memory_space<vmem>>, vector<8x32xf32>,
    return
  }
}

</mosaic_0001>

<llo_original>
// kernel: style_rewarder_forward.1
$region0: #{style_rewarder_forward.1}
  #allocation0 [shape = 'u32[]', space=smem, size = 0x4, offset = 0x4, fixed_abs, tag = 'smem constant byte address 0x4 - core index']
  #allocation1 [shape = 'u32[72,128]{1,0:T(1,128)}', space=vmem, size = 0x9000, scoped, tag = 'internal scratch']
  %s0 = inlined_call_operand.vmem [shape: s32[8,1], index: 0, kind: input, shape index: {}]
  %s1 = inlined_call_operand.vmem [shape: f32[8,8,32], index: 1, kind: input, shape index: {}]
  %s2 = inlined_call_operand.vmem [shape: f32[3,32,32], index: 2, kind: input, shape index: {}]
  %s3 = inlined_call_operand.vmem [shape: f32[3,32,32], index: 3, kind: input, shape index: {}]
  %s4 = inlined_call_operand.vmem [shape: f32[4,32], index: 4, kind: input, shape index: {}]
  %s5 = inlined_call_operand.vmem [shape: f32[3,32,32], index: 5, kind: input, shape index: {}]
  %s6 = inlined_call_operand.vmem [shape: f32[3,32,32], index: 6, kind: input, shape index: {}]
  %s7 = inlined_call_operand.vmem [shape: f32[4,32], index: 7, kind: input, shape index: {}]
  %s8 = inlined_call_operand.vmem [shape: f32[32,32], index: 8, kind: input, shape index: {}]
  %s9 = inlined_call_operand.vmem [shape: f32[1,32], index: 9, kind: input, shape index: {}]
  %s10 = inlined_call_operand.vmem [shape: f32[32,32], index: 10, kind: input, shape index: {}]
  %s11 = inlined_call_operand.vmem [shape: f32[1,32], index: 11, kind: input, shape index: {}]
  %s12 = inlined_call_operand.vmem [shape: f32[32,32], index: 12, kind: input, shape index: {}]
  %s13 = inlined_call_operand.vmem [shape: f32[1,32], index: 13, kind: input, shape index: {}]
  %s14 = inlined_call_operand.vmem [shape: f32[8,32], index: 14, kind: output, shape index: {}]
  %s15 = sld [smem:[#allocation0]]
  $region66: #{style_rewarder_forward.1} parent=0
    _
  %s17 = ssub.s32 1, %s15
  %s18 = scalar_select 0, %s17, %s15
  // Predicated region
  $region2: #{style_rewarder_forward.1} parent=0 // pred_check
    _
  $region3: #{style_rewarder_forward.1} parent=0 // pred_check_branch
    %20 = sbr.rel (0) target = $region5
  $region4: #{style_rewarder_forward.1} parent=0 // pred_region
    _
  $region5: #{style_rewarder_forward.1} parent=0 // pred_fallthru
    _
  // Predicated region
  $region6: #{style_rewarder_forward.1} parent=0 // pred_check
    _
  $region7: #{style_rewarder_forward.1} parent=0 // pred_check_branch
    %22 = sbr.rel (0) target = $region9
  $region8: #{style_rewarder_forward.1} parent=0 // pred_region
    _
  $region9: #{style_rewarder_forward.1} parent=0 // pred_fallthru
    _
  // Predicated region
  $region10: #{style_rewarder_forward.1} parent=0 // pred_check
    _
  $region11: #{style_rewarder_forward.1} parent=0 // pred_check_branch
    %24 = sbr.rel (0) target = $region13
  $region12: #{style_rewarder_forward.1} parent=0 // pred_region
    _
  $region13: #{style_rewarder_forward.1} parent=0 // pred_fallthru
    _
  // Predicated region
  $region14: #{style_rewarder_forward.1} parent=0 // pred_check
    _
  $region15: #{style_rewarder_forward.1} parent=0 // pred_check_branch
    %26 = sbr.rel (0) target = $region17
  $region16: #{style_rewarder_forward.1} parent=0 // pred_region
    _
  $region17: #{style_rewarder_forward.1} parent=0 // pred_fallthru
    _
  // Predicated region
  $region18: #{style_rewarder_forward.1} parent=0 // pred_check
    _
  $region19: #{style_rewarder_forward.1} parent=0 // pred_check_branch
    %28 = sbr.rel (0) target = $region21
  $region20: #{style_rewarder_forward.1} parent=0 // pred_region
    _
  $region21: #{style_rewarder_forward.1} parent=0 // pred_fallthru
    _
  // Predicated region
  $region22: #{style_rewarder_forward.1} parent=0 // pred_check
    _
  $region23: #{style_rewarder_forward.1} parent=0 // pred_check_branch
    %30 = sbr.rel (0) target = $region25
  $region24: #{style_rewarder_forward.1} parent=0 // pred_region
    _
  $region25: #{style_rewarder_forward.1} parent=0 // pred_fallthru
    _
  // Predicated region
  $region26: #{style_rewarder_forward.1} parent=0 // pred_check
    _
  $region27: #{style_rewarder_forward.1} parent=0 // pred_check_branch
    %32 = sbr.rel (0) target = $region29
  $region28: #{style_rewarder_forward.1} parent=0 // pred_region
    _
  $region29: #{style_rewarder_forward.1} parent=0 // pred_fallthru
    _
  // Predicated region
  $region30: #{style_rewarder_forward.1} parent=0 // pred_check
    _
  $region31: #{style_rewarder_forward.1} parent=0 // pred_check_branch
    %34 = sbr.rel (0) target = $region33
  $region32: #{style_rewarder_forward.1} parent=0 // pred_region
    _
  $region33: #{style_rewarder_forward.1} parent=0 // pred_fallthru
    _
  // Predicated region
  $region34: #{style_rewarder_forward.1} parent=0 // pred_check
    _
  $region35: #{style_rewarder_forward.1} parent=0 // pred_check_branch
    %36 = sbr.rel (0) target = $region37
  $region36: #{style_rewarder_forward.1} parent=0 // pred_region
    _
  $region37: #{style_rewarder_forward.1} parent=0 // pred_fallthru
    _
  // Predicated region
  $region38: #{style_rewarder_forward.1} parent=0 // pred_check
    _
  $region39: #{style_rewarder_forward.1} parent=0 // pred_check_branch
    %38 = sbr.rel (0) target = $region41
  $region40: #{style_rewarder_forward.1} parent=0 // pred_region
    _
  $region41: #{style_rewarder_forward.1} parent=0 // pred_fallthru
    _
  // Predicated region
  $region42: #{style_rewarder_forward.1} parent=0 // pred_check
    _
  $region43: #{style_rewarder_forward.1} parent=0 // pred_check_branch
    %40 = sbr.rel (0) target = $region45
  $region44: #{style_rewarder_forward.1} parent=0 // pred_region
    _
  $region45: #{style_rewarder_forward.1} parent=0 // pred_fallthru
    _
  // Predicated region
  $region46: #{style_rewarder_forward.1} parent=0 // pred_check
    _
  $region47: #{style_rewarder_forward.1} parent=0 // pred_check_branch
    %42 = sbr.rel (0) target = $region49
  $region48: #{style_rewarder_forward.1} parent=0 // pred_region
    _
  $region49: #{style_rewarder_forward.1} parent=0 // pred_fallthru
    _
  // Predicated region
  $region50: #{style_rewarder_forward.1} parent=0 // pred_check
    _
  $region51: #{style_rewarder_forward.1} parent=0 // pred_check_branch
    %44 = sbr.rel (0) target = $region53
  $region52: #{style_rewarder_forward.1} parent=0 // pred_region
    _
  $region53: #{style_rewarder_forward.1} parent=0 // pred_fallthru
    _
  // Predicated region
  $region54: #{style_rewarder_forward.1} parent=0 // pred_check
    _
  $region55: #{style_rewarder_forward.1} parent=0 // pred_check_branch
    %46 = sbr.rel (0) target = $region57
  $region56: #{style_rewarder_forward.1} parent=0 // pred_region
    _
  $region57: #{style_rewarder_forward.1} parent=0 // pred_fallthru
    _
  %v47 = vld [vmem:[%s0] sm:$0xff]
  %v48 = vld [vmem:[%s1] sm:$0xff]
  %v49 = vld [vmem:[%s1 + $0x8] sm:$0xff]
  %v50 = vld [vmem:[%s1 + $0x10] sm:$0xff]
  %v51 = vld [vmem:[%s1 + $0x18] sm:$0xff]
  %v52 = vld [vmem:[%s1 + $0x20] sm:$0xff]
  %v53 = vld [vmem:[%s1 + $0x28] sm:$0xff]
  %v54 = vld [vmem:[%s1 + $0x30] sm:$0xff]
  %v55 = vld [vmem:[%s1 + $0x38] sm:$0xff]
  %v56 = vld [vmem:[%s4] sm:$0xf]
  %v57 = vld [vmem:[%s2] sm:$0xff]
  %v58 = vld [vmem:[%s2 + $0x8] sm:$0xff]
  %v59 = vld [vmem:[%s2 + $0x10] sm:$0xff]
  %v60 = vld [vmem:[%s2 + $0x18] sm:$0xff]
  %v61 = vperm.slane %v56, 0
  %vm62 = vcmask 261120
  %v64 = vsel %vm62, %v48, 0
  %v67 = vsel %vm62, %v49, 0
  %v70 = vsel %vm62, %v50, 0
  %v73 = vsel %vm62, %v51, 0
  %v76 = vsel %vm62, %v52, 0
  %v79 = vsel %vm62, %v53, 0
  %v82 = vsel %vm62, %v54, 0
  %v85 = vsel %vm62, %v55, 0
  %87 = vmatpush.msra.mxu0 0.0
  %88 = vmatpush.msra.mxu0 0.0
  %89 = vmatpush.msra.mxu0 0.0
  %90 = vmatpush.msra.mxu0 0.0
  %91 = vmatpush.msra.mxu0 0.0
  %92 = vmatpush.msra.mxu0 0.0
  %93 = vmatpush.msra.mxu0 0.0
  %94 = vmatpush.msra.mxu0 0.0
  %95 = vmatpush.msra.mxu0 0.0
  %96 = vmatpush.msra.mxu0 0.0
  %97 = vmatpush.msra.mxu0 0.0
  %98 = vmatpush.msra.mxu0 0.0
  %99 = vmatpush.msra.mxu0 %v60
  %100 = vmatpush.msra.mxu0 %v59
  %101 = vmatpush.msra.mxu0 %v58
  %102 = vmatpush.msra.mxu0 %v57
  %103 = vmatmul.f32.gmra.mxu0 %v64
  %v104 = vpop.f32.mrf.mxu0
  %v105 = vadd.f32 %v61, %v104
  %106 = vmatmul.f32.gmra.mxu0 %v67
  %v107 = vpop.f32.mrf.mxu0
  %v108 = vadd.f32 %v61, %v107
  %109 = vmatmul.f32.gmra.mxu0 %v70
  %v110 = vpop.f32.mrf.mxu0
  %v111 = vadd.f32 %v61, %v110
  %112 = vmatmul.f32.gmra.mxu0 %v73
  %v113 = vpop.f32.mrf.mxu0
  %v114 = vadd.f32 %v61, %v113
  %115 = vmatmul.f32.gmra.mxu0 %v76
  %v116 = vpop.f32.mrf.mxu0
  %v117 = vadd.f32 %v61, %v116
  %118 = vmatmul.f32.gmra.mxu0 %v79
  %v119 = vpop.f32.mrf.mxu0
  %v120 = vadd.f32 %v61, %v119
  %121 = vmatmul.f32.gmra.mxu0 %v82
  %v122 = vpop.f32.mrf.mxu0
  %v123 = vadd.f32 %v61, %v122
  %124 = vmatmul.f32.gmra.mxu0 %v85
  %v125 = vpop.f32.mrf.mxu0
  %v126 = vadd.f32 %v61, %v125
  %127 = vdwg.mxu0
  %s128 = scalar_lea.vmem %s2, 32
  %v129 = vld [vmem:[%s128] sm:$0xff]
  %v130 = vld [vmem:[%s128 + $0x8] sm:$0xff]
  %v131 = vld [vmem:[%s128 + $0x10] sm:$0xff]
  %v132 = vld [vmem:[%s128 + $0x18] sm:$0xff]
  %v133 = vperm.slane %v56, 1
  %134 = vmatpush.msra.mxu0 0.0
  %135 = vmatpush.msra.mxu0 0.0
  %136 = vmatpush.msra.mxu0 0.0
  %137 = vmatpush.msra.mxu0 0.0
  %138 = vmatpush.msra.mxu0 0.0
  %139 = vmatpush.msra.mxu0 0.0
  %140 = vmatpush.msra.mxu0 0.0
  %141 = vmatpush.msra.mxu0 0.0
  %142 = vmatpush.msra.mxu0 0.0
  %143 = vmatpush.msra.mxu0 0.0
  %144 = vmatpush.msra.mxu0 0.0
  %145 = vmatpush.msra.mxu0 0.0
  %146 = vmatpush.msra.mxu0 %v132
  %147 = vmatpush.msra.mxu0 %v131
  %148 = vmatpush.msra.mxu0 %v130
  %149 = vmatpush.msra.mxu0 %v129
  %150 = vmatmul.f32.gmra.mxu0 %v64
  %v151 = vpop.f32.mrf.mxu0
  %v152 = vadd.f32 %v133, %v151
  %153 = vmatmul.f32.gmra.mxu0 %v67
  %v154 = vpop.f32.mrf.mxu0
  %v155 = vadd.f32 %v133, %v154
  %156 = vmatmul.f32.gmra.mxu0 %v70
  %v157 = vpop.f32.mrf.mxu0
  %v158 = vadd.f32 %v133, %v157
  %159 = vmatmul.f32.gmra.mxu0 %v73
  %v160 = vpop.f32.mrf.mxu0
  %v161 = vadd.f32 %v133, %v160
  %162 = vmatmul.f32.gmra.mxu0 %v76
  %v163 = vpop.f32.mrf.mxu0
  %v164 = vadd.f32 %v133, %v163
  %165 = vmatmul.f32.gmra.mxu0 %v79
  %v166 = vpop.f32.mrf.mxu0
  %v167 = vadd.f32 %v133, %v166
  %168 = vmatmul.f32.gmra.mxu0 %v82
  %v169 = vpop.f32.mrf.mxu0
  %v170 = vadd.f32 %v133, %v169
  %171 = vmatmul.f32.gmra.mxu0 %v85
  %v172 = vpop.f32.mrf.mxu0
  %v173 = vadd.f32 %v133, %v172
  %174 = vdwg.mxu0
  %s175 = scalar_lea.vmem %s2, 64
  %v176 = vld [vmem:[%s175] sm:$0xff]
  %v177 = vld [vmem:[%s175 + $0x8] sm:$0xff]
  %v178 = vld [vmem:[%s175 + $0x10] sm:$0xff]
  %v179 = vld [vmem:[%s175 + $0x18] sm:$0xff]
  %v180 = vperm.slane %v56, 2
  %181 = vmatpush.msra.mxu0 0.0
  %182 = vmatpush.msra.mxu0 0.0
  %183 = vmatpush.msra.mxu0 0.0
  %184 = vmatpush.msra.mxu0 0.0
  %185 = vmatpush.msra.mxu0 0.0
  %186 = vmatpush.msra.mxu0 0.0
  %187 = vmatpush.msra.mxu0 0.0
  %188 = vmatpush.msra.mxu0 0.0
  %189 = vmatpush.msra.mxu0 0.0
  %190 = vmatpush.msra.mxu0 0.0
  %191 = vmatpush.msra.mxu0 0.0
  %192 = vmatpush.msra.mxu0 0.0
  %193 = vmatpush.msra.mxu0 %v179
  %194 = vmatpush.msra.mxu0 %v178
  %195 = vmatpush.msra.mxu0 %v177
  %196 = vmatpush.msra.mxu0 %v176
  %197 = vmatmul.f32.gmra.mxu0 %v64
  %v198 = vpop.f32.mrf.mxu0
  %v199 = vadd.f32 %v180, %v198
  %200 = vmatmul.f32.gmra.mxu0 %v67
  %v201 = vpop.f32.mrf.mxu0
  %v202 = vadd.f32 %v180, %v201
  %203 = vmatmul.f32.gmra.mxu0 %v70
  %v204 = vpop.f32.mrf.mxu0
  %v205 = vadd.f32 %v180, %v204
  %206 = vmatmul.f32.gmra.mxu0 %v73
  %v207 = vpop.f32.mrf.mxu0
  %v208 = vadd.f32 %v180, %v207
  %209 = vmatmul.f32.gmra.mxu0 %v76
  %v210 = vpop.f32.mrf.mxu0
  %v211 = vadd.f32 %v180, %v210
  %212 = vmatmul.f32.gmra.mxu0 %v79
  %v213 = vpop.f32.mrf.mxu0
  %v214 = vadd.f32 %v180, %v213
  %215 = vmatmul.f32.gmra.mxu0 %v82
  %v216 = vpop.f32.mrf.mxu0
  %v217 = vadd.f32 %v180, %v216
  %218 = vmatmul.f32.gmra.mxu0 %v85
  %v219 = vpop.f32.mrf.mxu0
  %v220 = vadd.f32 %v180, %v219
  %221 = vdwg.mxu0
  %v222 = vld [vmem:[%s3] sm:$0xff]
  %v223 = vld [vmem:[%s3 + $0x8] sm:$0xff]
  %v224 = vld [vmem:[%s3 + $0x10] sm:$0xff]
  %v225 = vld [vmem:[%s3 + $0x18] sm:$0xff]
  %s226 = scalar_lea.vmem %s3, 32
  %v227 = vld [vmem:[%s226] sm:$0xff]
  %v228 = vld [vmem:[%s226 + $0x8] sm:$0xff]
  %v229 = vld [vmem:[%s226 + $0x10] sm:$0xff]
  %v230 = vld [vmem:[%s226 + $0x18] sm:$0xff]
  %s231 = scalar_lea.vmem %s3, 64
  %v232 = vld [vmem:[%s231] sm:$0xff]
  %v233 = vld [vmem:[%s231 + $0x8] sm:$0xff]
  %v234 = vld [vmem:[%s231 + $0x10] sm:$0xff]
  %v235 = vld [vmem:[%s231 + $0x18] sm:$0xff]
  %v237 = vsel %vm62, 0.0, 0
  %239 = vmatpush.msra.mxu0 0.0
  %240 = vmatpush.msra.mxu0 0.0
  %241 = vmatpush.msra.mxu0 0.0
  %242 = vmatpush.msra.mxu0 0.0
  %243 = vmatpush.msra.mxu0 0.0
  %244 = vmatpush.msra.mxu0 0.0
  %245 = vmatpush.msra.mxu0 0.0
  %246 = vmatpush.msra.mxu0 0.0
  %247 = vmatpush.msra.mxu0 0.0
  %248 = vmatpush.msra.mxu0 0.0
  %249 = vmatpush.msra.mxu0 0.0
  %250 = vmatpush.msra.mxu0 0.0
  %251 = vmatpush.msra.mxu0 %v225
  %252 = vmatpush.msra.mxu0 %v224
  %253 = vmatpush.msra.mxu0 %v223
  %254 = vmatpush.msra.mxu0 %v222
  %255 = vmatmul.f32.gmra.mxu0 %v237
  %v256 = vpop.f32.mrf.mxu0
  %v257 = vadd.f32 0.0, %v256
  %258 = vdwg.mxu0
  %259 = vmatpush.msra.mxu0 0.0
  %260 = vmatpush.msra.mxu0 0.0
  %261 = vmatpush.msra.mxu0 0.0
  %262 = vmatpush.msra.mxu0 0.0
  %263 = vmatpush.msra.mxu0 0.0
  %264 = vmatpush.msra.mxu0 0.0
  %265 = vmatpush.msra.mxu0 0.0
  %266 = vmatpush.msra.mxu0 0.0
  %267 = vmatpush.msra.mxu0 0.0
  %268 = vmatpush.msra.mxu0 0.0
  %269 = vmatpush.msra.mxu0 0.0
  %270 = vmatpush.msra.mxu0 0.0
  %271 = vmatpush.msra.mxu0 %v230
  %272 = vmatpush.msra.mxu0 %v229
  %273 = vmatpush.msra.mxu0 %v228
  %274 = vmatpush.msra.mxu0 %v227
  %275 = vmatmul.f32.gmra.mxu0 %v237
  %v276 = vpop.f32.mrf.mxu0
  %v277 = vadd.f32 0.0, %v276
  %278 = vdwg.mxu0
  %v279 = vperm.slane %v56, 3
  %280 = vmatpush.msra.mxu0 0.0
  %281 = vmatpush.msra.mxu0 0.0
  %282 = vmatpush.msra.mxu0 0.0
  %283 = vmatpush.msra.mxu0 0.0
  %284 = vmatpush.msra.mxu0 0.0
  %285 = vmatpush.msra.mxu0 0.0
  %286 = vmatpush.msra.mxu0 0.0
  %287 = vmatpush.msra.mxu0 0.0
  %288 = vmatpush.msra.mxu0 0.0
  %289 = vmatpush.msra.mxu0 0.0
  %290 = vmatpush.msra.mxu0 0.0
  %291 = vmatpush.msra.mxu0 0.0
  %292 = vmatpush.msra.mxu0 %v235
  %293 = vmatpush.msra.mxu0 %v234
  %294 = vmatpush.msra.mxu0 %v233
  %295 = vmatpush.msra.mxu0 %v232
  %296 = vmatmul.f32.gmra.mxu0 %v237
  %v297 = vpop.f32.mrf.mxu0
  %v298 = vadd.f32 %v279, %v297
  %299 = vdwg.mxu0
  %v300 = vadd.f32 %v105, %v257
  %v301 = vxor.u32 %v300, 2147483648
  %v302 = vmul.f32 %v301, 1.442695
  %v303 = vpow.pop %v302
  %v304 = vadd.f32 %v303, 1.0
  %v305 = vrcp.pop %v304
  %v306 = vmul.f32 %v304, %v305
  %v307 = vsub.f32 1.0, %v306
  %v308 = vmul.f32 %v305, %v307
  %v309 = vadd.f32 %v305, %v308
  %vm310 = vweird.f32 %v304
  %vm311 = vweird.f32 %v305
  %vm312 = vmor %vm310, %vm311
  %v313 = vsel %vm312, %v305, %v309
  %v314 = vand.u32 2147483647, %v304
  %vm315 = vcmp.eq.f32.partialorder %v314, 8.507059e+37
  %v316 = vand.u32 %v304, 2147483648
  %v317 = vor.u32 1.1754944e-38, %v316
  %v318 = vsel %vm315, %v317, %v313
  %v319 = vmul.f32 1.0, %v318
  %v320 = vadd.f32 %v152, %v277
  %v321 = vxor.u32 %v320, 2147483648
  %v322 = vmul.f32 %v321, 1.442695
  %v323 = vpow.pop %v322
  %v324 = vadd.f32 %v323, 1.0
  %v325 = vrcp.pop %v324
  %v326 = vmul.f32 %v324, %v325
  %v327 = vsub.f32 1.0, %v326
  %v328 = vmul.f32 %v325, %v327
  %v329 = vadd.f32 %v325, %v328
  %vm330 = vweird.f32 %v324
  %vm331 = vweird.f32 %v325
  %vm332 = vmor %vm330, %vm331
  %v333 = vsel %vm332, %v325, %v329
  %v334 = vand.u32 2147483647, %v324
  %vm335 = vcmp.eq.f32.partialorder %v334, 8.507059e+37
  %v336 = vand.u32 %v324, 2147483648
  %v337 = vor.u32 1.1754944e-38, %v336
  %v338 = vsel %vm335, %v337, %v333
  %v339 = vmul.f32 1.0, %v338
  %v340 = vmul.f32 %v319, %v298
  %v341 = vadd.f32 %v199, %v340
  %v342 = vtanh.pop %v341
  %v343 = vsub.f32 1.0, %v339
  %v344 = vmul.f32 %v343, %v342
  %v345 = vmul.f32 %v339, 0.0
  %v346 = vadd.f32 %v344, %v345
  %v348 = vsel %vm62, %v346, 0
  %350 = vmatpush.msra.mxu0 0.0
  %351 = vmatpush.msra.mxu0 0.0
  %352 = vmatpush.msra.mxu0 0.0
  %353 = vmatpush.msra.mxu0 0.0
  %354 = vmatpush.msra.mxu0 0.0
  %355 = vmatpush.msra.mxu0 0.0
  %356 = vmatpush.msra.mxu0 0.0
  %357 = vmatpush.msra.mxu0 0.0
  %358 = vmatpush.msra.mxu0 0.0
  %359 = vmatpush.msra.mxu0 0.0
  %360 = vmatpush.msra.mxu0 0.0
  %361 = vmatpush.msra.mxu0 0.0
  %362 = vmatpush.msra.mxu0 %v225
  %363 = vmatpush.msra.mxu0 %v224
  %364 = vmatpush.msra.mxu0 %v223
  %365 = vmatpush.msra.mxu0 %v222
  %366 = vmatmul.f32.gmra.mxu0 %v348
  %v367 = vpop.f32.mrf.mxu0
  %v368 = vadd.f32 0.0, %v367
  %369 = vdwg.mxu0
  %370 = vmatpush.msra.mxu0 0.0
  %371 = vmatpush.msra.mxu0 0.0
  %372 = vmatpush.msra.mxu0 0.0
  %373 = vmatpush.msra.mxu0 0.0
  %374 = vmatpush.msra.mxu0 0.0
  %375 = vmatpush.msra.mxu0 0.0
  %376 = vmatpush.msra.mxu0 0.0
  %377 = vmatpush.msra.mxu0 0.0
  %378 = vmatpush.msra.mxu0 0.0
  %379 = vmatpush.msra.mxu0 0.0
  %380 = vmatpush.msra.mxu0 0.0
  %381 = vmatpush.msra.mxu0 0.0
  %382 = vmatpush.msra.mxu0 %v230
  %383 = vmatpush.msra.mxu0 %v229
  %384 = vmatpush.msra.mxu0 %v228
  %385 = vmatpush.msra.mxu0 %v227
  %386 = vmatmul.f32.gmra.mxu0 %v348
  %v387 = vpop.f32.mrf.mxu0
  %v388 = vadd.f32 0.0, %v387
  %389 = vdwg.mxu0
  %390 = vmatpush.msra.mxu0 0.0
  %391 = vmatpush.msra.mxu0 0.0
  %392 = vmatpush.msra.mxu0 0.0
  %393 = vmatpush.msra.mxu0 0.0
  %394 = vmatpush.msra.mxu0 0.0
  %395 = vmatpush.msra.mxu0 0.0
  %396 = vmatpush.msra.mxu0 0.0
  %397 = vmatpush.msra.mxu0 0.0
  %398 = vmatpush.msra.mxu0 0.0
  %399 = vmatpush.msra.mxu0 0.0
  %400 = vmatpush.msra.mxu0 0.0
  %401 = vmatpush.msra.mxu0 0.0
  %402 = vmatpush.msra.mxu0 %v235
  %403 = vmatpush.msra.mxu0 %v234
  %404 = vmatpush.msra.mxu0 %v233
  %405 = vmatpush.msra.mxu0 %v232
  %406 = vmatmul.f32.gmra.mxu0 %v348
  %v407 = vpop.f32.mrf.mxu0
  %v408 = vadd.f32 %v279, %v407
  %409 = vdwg.mxu0
  %v410 = vadd.f32 %v108, %v368
  %v411 = vxor.u32 %v410, 2147483648
  %v412 = vmul.f32 %v411, 1.442695
  %v413 = vpow.pop %v412
  %v414 = vadd.f32 %v413, 1.0
  %v415 = vrcp.pop %v414
  %v416 = vmul.f32 %v414, %v415
  %v417 = vsub.f32 1.0, %v416
  %v418 = vmul.f32 %v415, %v417
  %v419 = vadd.f32 %v415, %v418
  %vm420 = vweird.f32 %v414
  %vm421 = vweird.f32 %v415
  %vm422 = vmor %vm420, %vm421
  %v423 = vsel %vm422, %v415, %v419
  %v424 = vand.u32 2147483647, %v414
  %vm425 = vcmp.eq.f32.partialorder %v424, 8.507059e+37
  %v426 = vand.u32 %v414, 2147483648
  %v427 = vor.u32 1.1754944e-38, %v426
  %v428 = vsel %vm425, %v427, %v423
  %v429 = vmul.f32 1.0, %v428
  %v430 = vadd.f32 %v155, %v388
  %v431 = vxor.u32 %v430, 2147483648
  %v432 = vmul.f32 %v431, 1.442695
  %v433 = vpow.pop %v432
  %v434 = vadd.f32 %v433, 1.0
  %v435 = vrcp.pop %v434
  %v436 = vmul.f32 %v434, %v435
  %v437 = vsub.f32 1.0, %v436
  %v438 = vmul.f32 %v435, %v437
  %v439 = vadd.f32 %v435, %v438
  %vm440 = vweird.f32 %v434
  %vm441 = vweird.f32 %v435
  %vm442 = vmor %vm440, %vm441
  %v443 = vsel %vm442, %v435, %v439
  %v444 = vand.u32 2147483647, %v434
  %vm445 = vcmp.eq.f32.partialorder %v444, 8.507059e+37
  %v446 = vand.u32 %v434, 2147483648
  %v447 = vor.u32 1.1754944e-38, %v446
  %v448 = vsel %vm445, %v447, %v443
  %v449 = vmul.f32 1.0, %v448
  %v450 = vmul.f32 %v429, %v408
  %v451 = vadd.f32 %v202, %v450
  %v452 = vtanh.pop %v451
  %v453 = vsub.f32 1.0, %v449
  %v454 = vmul.f32 %v453, %v452
  %v455 = vmul.f32 %v449, %v346
  %v456 = vadd.f32 %v454, %v455
  %v458 = vsel %vm62, %v456, 0
  %460 = vmatpush.msra.mxu0 0.0
  %461 = vmatpush.msra.mxu0 0.0
  %462 = vmatpush.msra.mxu0 0.0
  %463 = vmatpush.msra.mxu0 0.0
  %464 = vmatpush.msra.mxu0 0.0
  %465 = vmatpush.msra.mxu0 0.0
  %466 = vmatpush.msra.mxu0 0.0
  %467 = vmatpush.msra.mxu0 0.0
  %468 = vmatpush.msra.mxu0 0.0
  %469 = vmatpush.msra.mxu0 0.0
  %470 = vmatpush.msra.mxu0 0.0
  %471 = vmatpush.msra.mxu0 0.0
  %472 = vmatpush.msra.mxu0 %v225
  %473 = vmatpush.msra.mxu0 %v224
  %474 = vmatpush.msra.mxu0 %v223
  %475 = vmatpush.msra.mxu0 %v222
  %476 = vmatmul.f32.gmra.mxu0 %v458
  %v477 = vpop.f32.mrf.mxu0
  %v478 = vadd.f32 0.0, %v477
  %479 = vdwg.mxu0
  %480 = vmatpush.msra.mxu0 0.0
  %481 = vmatpush.msra.mxu0 0.0
  %482 = vmatpush.msra.mxu0 0.0
  %483 = vmatpush.msra.mxu0 0.0
  %484 = vmatpush.msra.mxu0 0.0
  %485 = vmatpush.msra.mxu0 0.0
  %486 = vmatpush.msra.mxu0 0.0
  %487 = vmatpush.msra.mxu0 0.0
  %488 = vmatpush.msra.mxu0 0.0
  %489 = vmatpush.msra.mxu0 0.0
  %490 = vmatpush.msra.mxu0 0.0
  %491 = vmatpush.msra.mxu0 0.0
  %492 = vmatpush.msra.mxu0 %v230
  %493 = vmatpush.msra.mxu0 %v229
  %494 = vmatpush.msra.mxu0 %v228
  %495 = vmatpush.msra.mxu0 %v227
  %496 = vmatmul.f32.gmra.mxu0 %v458
  %v497 = vpop.f32.mrf.mxu0
  %v498 = vadd.f32 0.0, %v497
  %499 = vdwg.mxu0
  %500 = vmatpush.msra.mxu0 0.0
  %501 = vmatpush.msra.mxu0 0.0
  %502 = vmatpush.msra.mxu0 0.0
  %503 = vmatpush.msra.mxu0 0.0
  %504 = vmatpush.msra.mxu0 0.0
  %505 = vmatpush.msra.mxu0 0.0
  %506 = vmatpush.msra.mxu0 0.0
  %507 = vmatpush.msra.mxu0 0.0
  %508 = vmatpush.msra.mxu0 0.0
  %509 = vmatpush.msra.mxu0 0.0
  %510 = vmatpush.msra.mxu0 0.0
  %511 = vmatpush.msra.mxu0 0.0
  %512 = vmatpush.msra.mxu0 %v235
  %513 = vmatpush.msra.mxu0 %v234
  %514 = vmatpush.msra.mxu0 %v233
  %515 = vmatpush.msra.mxu0 %v232
  %516 = vmatmul.f32.gmra.mxu0 %v458
  %v517 = vpop.f32.mrf.mxu0
  %v518 = vadd.f32 %v279, %v517
  %519 = vdwg.mxu0
  %v520 = vadd.f32 %v111, %v478
  %v521 = vxor.u32 %v520, 2147483648
  %v522 = vmul.f32 %v521, 1.442695
  %v523 = vpow.pop %v522
  %v524 = vadd.f32 %v523, 1.0
  %v525 = vrcp.pop %v524
  %v526 = vmul.f32 %v524, %v525
  %v527 = vsub.f32 1.0, %v526
  %v528 = vmul.f32 %v525, %v527
  %v529 = vadd.f32 %v525, %v528
  %vm530 = vweird.f32 %v524
  %vm531 = vweird.f32 %v525
  %vm532 = vmor %vm530, %vm531
  %v533 = vsel %vm532, %v525, %v529
  %v534 = vand.u32 2147483647, %v524
  %vm535 = vcmp.eq.f32.partialorder %v534, 8.507059e+37
  %v536 = vand.u32 %v524, 2147483648
  %v537 = vor.u32 1.1754944e-38, %v536
  %v538 = vsel %vm535, %v537, %v533
  %v539 = vmul.f32 1.0, %v538
  %v540 = vadd.f32 %v158, %v498
  %v541 = vxor.u32 %v540, 2147483648
  %v542 = vmul.f32 %v541, 1.442695
  %v543 = vpow.pop %v542
  %v544 = vadd.f32 %v543, 1.0
  %v545 = vrcp.pop %v544
  %v546 = vmul.f32 %v544, %v545
  %v547 = vsub.f32 1.0, %v546
  %v548 = vmul.f32 %v545, %v547
  %v549 = vadd.f32 %v545, %v548
  %vm550 = vweird.f32 %v544
  %vm551 = vweird.f32 %v545
  %vm552 = vmor %vm550, %vm551
  %v553 = vsel %vm552, %v545, %v549
  %v554 = vand.u32 2147483647, %v544
  %vm555 = vcmp.eq.f32.partialorder %v554, 8.507059e+37
  %v556 = vand.u32 %v544, 2147483648
  %v557 = vor.u32 1.1754944e-38, %v556
  %v558 = vsel %vm555, %v557, %v553
  %v559 = vmul.f32 1.0, %v558
  %v560 = vmul.f32 %v539, %v518
  %v561 = vadd.f32 %v205, %v560
  %v562 = vtanh.pop %v561
  %v563 = vsub.f32 1.0, %v559
  %v564 = vmul.f32 %v563, %v562
  %v565 = vmul.f32 %v559, %v456
  %v566 = vadd.f32 %v564, %v565
  %v568 = vsel %vm62, %v566, 0
  %570 = vmatpush.msra.mxu0 0.0
  %571 = vmatpush.msra.mxu0 0.0
  %572 = vmatpush.msra.mxu0 0.0
  %573 = vmatpush.msra.mxu0 0.0
  %574 = vmatpush.msra.mxu0 0.0
  %575 = vmatpush.msra.mxu0 0.0
  %576 = vmatpush.msra.mxu0 0.0
  %577 = vmatpush.msra.mxu0 0.0
  %578 = vmatpush.msra.mxu0 0.0
  %579 = vmatpush.msra.mxu0 0.0
  %580 = vmatpush.msra.mxu0 0.0
  %581 = vmatpush.msra.mxu0 0.0
  %582 = vmatpush.msra.mxu0 %v225
  %583 = vmatpush.msra.mxu0 %v224
  %584 = vmatpush.msra.mxu0 %v223
  %585 = vmatpush.msra.mxu0 %v222
  %586 = vmatmul.f32.gmra.mxu0 %v568
  %v587 = vpop.f32.mrf.mxu0
  %v588 = vadd.f32 0.0, %v587
  %589 = vdwg.mxu0
  %590 = vmatpush.msra.mxu0 0.0
  %591 = vmatpush.msra.mxu0 0.0
  %592 = vmatpush.msra.mxu0 0.0
  %593 = vmatpush.msra.mxu0 0.0
  %594 = vmatpush.msra.mxu0 0.0
  %595 = vmatpush.msra.mxu0 0.0
  %596 = vmatpush.msra.mxu0 0.0
  %597 = vmatpush.msra.mxu0 0.0
  %598 = vmatpush.msra.mxu0 0.0
  %599 = vmatpush.msra.mxu0 0.0
  %600 = vmatpush.msra.mxu0 0.0
  %601 = vmatpush.msra.mxu0 0.0
  %602 = vmatpush.msra.mxu0 %v230
  %603 = vmatpush.msra.mxu0 %v229
  %604 = vmatpush.msra.mxu0 %v228
  %605 = vmatpush.msra.mxu0 %v227
  %606 = vmatmul.f32.gmra.mxu0 %v568
  %v607 = vpop.f32.mrf.mxu0
  %v608 = vadd.f32 0.0, %v607
  %609 = vdwg.mxu0
  %610 = vmatpush.msra.mxu0 0.0
  %611 = vmatpush.msra.mxu0 0.0
  %612 = vmatpush.msra.mxu0 0.0
  %613 = vmatpush.msra.mxu0 0.0
  %614 = vmatpush.msra.mxu0 0.0
  %615 = vmatpush.msra.mxu0 0.0
  %616 = vmatpush.msra.mxu0 0.0
  %617 = vmatpush.msra.mxu0 0.0
  %618 = vmatpush.msra.mxu0 0.0
  %619 = vmatpush.msra.mxu0 0.0
  %620 = vmatpush.msra.mxu0 0.0
  %621 = vmatpush.msra.mxu0 0.0
  %622 = vmatpush.msra.mxu0 %v235
  %623 = vmatpush.msra.mxu0 %v234
  %624 = vmatpush.msra.mxu0 %v233
  %625 = vmatpush.msra.mxu0 %v232
  %626 = vmatmul.f32.gmra.mxu0 %v568
  %v627 = vpop.f32.mrf.mxu0
  %v628 = vadd.f32 %v279, %v627
  %629 = vdwg.mxu0
  %v630 = vadd.f32 %v114, %v588
  %v631 = vxor.u32 %v630, 2147483648
  %v632 = vmul.f32 %v631, 1.442695
  %v633 = vpow.pop %v632
  %v634 = vadd.f32 %v633, 1.0
  %v635 = vrcp.pop %v634
  %v636 = vmul.f32 %v634, %v635
  %v637 = vsub.f32 1.0, %v636
  %v638 = vmul.f32 %v635, %v637
  %v639 = vadd.f32 %v635, %v638
  %vm640 = vweird.f32 %v634
  %vm641 = vweird.f32 %v635
  %vm642 = vmor %vm640, %vm641
  %v643 = vsel %vm642, %v635, %v639
  %v644 = vand.u32 2147483647, %v634
  %vm645 = vcmp.eq.f32.partialorder %v644, 8.507059e+37
  %v646 = vand.u32 %v634, 2147483648
  %v647 = vor.u32 1.1754944e-38, %v646
  %v648 = vsel %vm645, %v647, %v643
  %v649 = vmul.f32 1.0, %v648
  %v650 = vadd.f32 %v161, %v608
  %v651 = vxor.u32 %v650, 2147483648
  %v652 = vmul.f32 %v651, 1.442695
  %v653 = vpow.pop %v652
  %v654 = vadd.f32 %v653, 1.0
  %v655 = vrcp.pop %v654
  %v656 = vmul.f32 %v654, %v655
  %v657 = vsub.f32 1.0, %v656
  %v658 = vmul.f32 %v655, %v657
  %v659 = vadd.f32 %v655, %v658
  %vm660 = vweird.f32 %v654
  %vm661 = vweird.f32 %v655
  %vm662 = vmor %vm660, %vm661
  %v663 = vsel %vm662, %v655, %v659
  %v664 = vand.u32 2147483647, %v654
  %vm665 = vcmp.eq.f32.partialorder %v664, 8.507059e+37
  %v666 = vand.u32 %v654, 2147483648
  %v667 = vor.u32 1.1754944e-38, %v666
  %v668 = vsel %vm665, %v667, %v663
  %v669 = vmul.f32 1.0, %v668
  %v670 = vmul.f32 %v649, %v628
  %v671 = vadd.f32 %v208, %v670
  %v672 = vtanh.pop %v671
  %v673 = vsub.f32 1.0, %v669
  %v674 = vmul.f32 %v673, %v672
  %v675 = vmul.f32 %v669, %v566
  %v676 = vadd.f32 %v674, %v675
  %v678 = vsel %vm62, %v676, 0
  %680 = vmatpush.msra.mxu0 0.0
  %681 = vmatpush.msra.mxu0 0.0
  %682 = vmatpush.msra.mxu0 0.0
  %683 = vmatpush.msra.mxu0 0.0
  %684 = vmatpush.msra.mxu0 0.0
  %685 = vmatpush.msra.mxu0 0.0
  %686 = vmatpush.msra.mxu0 0.0
  %687 = vmatpush.msra.mxu0 0.0
  %688 = vmatpush.msra.mxu0 0.0
  %689 = vmatpush.msra.mxu0 0.0
  %690 = vmatpush.msra.mxu0 0.0
  %691 = vmatpush.msra.mxu0 0.0
  %692 = vmatpush.msra.mxu0 %v225
  %693 = vmatpush.msra.mxu0 %v224
  %694 = vmatpush.msra.mxu0 %v223
  %695 = vmatpush.msra.mxu0 %v222
  %696 = vmatmul.f32.gmra.mxu0 %v678
  %v697 = vpop.f32.mrf.mxu0
  %v698 = vadd.f32 0.0, %v697
  %699 = vdwg.mxu0
  %700 = vmatpush.msra.mxu0 0.0
  %701 = vmatpush.msra.mxu0 0.0
  %702 = vmatpush.msra.mxu0 0.0
  %703 = vmatpush.msra.mxu0 0.0
  %704 = vmatpush.msra.mxu0 0.0
  %705 = vmatpush.msra.mxu0 0.0
  %706 = vmatpush.msra.mxu0 0.0
  %707 = vmatpush.msra.mxu0 0.0
  %708 = vmatpush.msra.mxu0 0.0
  %709 = vmatpush.msra.mxu0 0.0
  %710 = vmatpush.msra.mxu0 0.0
  %711 = vmatpush.msra.mxu0 0.0
  %712 = vmatpush.msra.mxu0 %v230
  %713 = vmatpush.msra.mxu0 %v229
  %714 = vmatpush.msra.mxu0 %v228
  %715 = vmatpush.msra.mxu0 %v227
  %716 = vmatmul.f32.gmra.mxu0 %v678
  %v717 = vpop.f32.mrf.mxu0
  %v718 = vadd.f32 0.0, %v717
  %719 = vdwg.mxu0
  %720 = vmatpush.msra.mxu0 0.0
  %721 = vmatpush.msra.mxu0 0.0
  %722 = vmatpush.msra.mxu0 0.0
  %723 = vmatpush.msra.mxu0 0.0
  %724 = vmatpush.msra.mxu0 0.0
  %725 = vmatpush.msra.mxu0 0.0
  %726 = vmatpush.msra.mxu0 0.0
  %727 = vmatpush.msra.mxu0 0.0
  %728 = vmatpush.msra.mxu0 0.0
  %729 = vmatpush.msra.mxu0 0.0
  %730 = vmatpush.msra.mxu0 0.0
  %731 = vmatpush.msra.mxu0 0.0
  %732 = vmatpush.msra.mxu0 %v235
  %733 = vmatpush.msra.mxu0 %v234
  %734 = vmatpush.msra.mxu0 %v233
  %735 = vmatpush.msra.mxu0 %v232
  %736 = vmatmul.f32.gmra.mxu0 %v678
  %v737 = vpop.f32.mrf.mxu0
  %v738 = vadd.f32 %v279, %v737
  %739 = vdwg.mxu0
  %v740 = vadd.f32 %v117, %v698
  %v741 = vxor.u32 %v740, 2147483648
  %v742 = vmul.f32 %v741, 1.442695
  %v743 = vpow.pop %v742
  %v744 = vadd.f32 %v743, 1.0
  %v745 = vrcp.pop %v744
  %v746 = vmul.f32 %v744, %v745
  %v747 = vsub.f32 1.0, %v746
  %v748 = vmul.f32 %v745, %v747
  %v749 = vadd.f32 %v745, %v748
  %vm750 = vweird.f32 %v744
  %vm751 = vweird.f32 %v745
  %vm752 = vmor %vm750, %vm751
  %v753 = vsel %vm752, %v745, %v749
  %v754 = vand.u32 2147483647, %v744
  %vm755 = vcmp.eq.f32.partialorder %v754, 8.507059e+37
  %v756 = vand.u32 %v744, 2147483648
  %v757 = vor.u32 1.1754944e-38, %v756
  %v758 = vsel %vm755, %v757, %v753
  %v759 = vmul.f32 1.0, %v758
  %v760 = vadd.f32 %v164, %v718
  %v761 = vxor.u32 %v760, 2147483648
  %v762 = vmul.f32 %v761, 1.442695
  %v763 = vpow.pop %v762
  %v764 = vadd.f32 %v763, 1.0
  %v765 = vrcp.pop %v764
  %v766 = vmul.f32 %v764, %v765
  %v767 = vsub.f32 1.0, %v766
  %v768 = vmul.f32 %v765, %v767
  %v769 = vadd.f32 %v765, %v768
  %vm770 = vweird.f32 %v764
  %vm771 = vweird.f32 %v765
  %vm772 = vmor %vm770, %vm771
  %v773 = vsel %vm772, %v765, %v769
  %v774 = vand.u32 2147483647, %v764
  %vm775 = vcmp.eq.f32.partialorder %v774, 8.507059e+37
  %v776 = vand.u32 %v764, 2147483648
  %v777 = vor.u32 1.1754944e-38, %v776
  %v778 = vsel %vm775, %v777, %v773
  %v779 = vmul.f32 1.0, %v778
  %v780 = vmul.f32 %v759, %v738
  %v781 = vadd.f32 %v211, %v780
  %v782 = vtanh.pop %v781
  %v783 = vsub.f32 1.0, %v779
  %v784 = vmul.f32 %v783, %v782
  %v785 = vmul.f32 %v779, %v676
  %v786 = vadd.f32 %v784, %v785
  %v788 = vsel %vm62, %v786, 0
  %790 = vmatpush.msra.mxu0 0.0
  %791 = vmatpush.msra.mxu0 0.0
  %792 = vmatpush.msra.mxu0 0.0
  %793 = vmatpush.msra.mxu0 0.0
  %794 = vmatpush.msra.mxu0 0.0
  %795 = vmatpush.msra.mxu0 0.0
  %796 = vmatpush.msra.mxu0 0.0
  %797 = vmatpush.msra.mxu0 0.0
  %798 = vmatpush.msra.mxu0 0.0
  %799 = vmatpush.msra.mxu0 0.0
  %800 = vmatpush.msra.mxu0 0.0
  %801 = vmatpush.msra.mxu0 0.0
  %802 = vmatpush.msra.mxu0 %v225
  %803 = vmatpush.msra.mxu0 %v224
  %804 = vmatpush.msra.mxu0 %v223
  %805 = vmatpush.msra.mxu0 %v222
  %806 = vmatmul.f32.gmra.mxu0 %v788
  %v807 = vpop.f32.mrf.mxu0
  %v808 = vadd.f32 0.0, %v807
  %809 = vdwg.mxu0
  %810 = vmatpush.msra.mxu0 0.0
  %811 = vmatpush.msra.mxu0 0.0
  %812 = vmatpush.msra.mxu0 0.0
  %813 = vmatpush.msra.mxu0 0.0
  %814 = vmatpush.msra.mxu0 0.0
  %815 = vmatpush.msra.mxu0 0.0
  %816 = vmatpush.msra.mxu0 0.0
  %817 = vmatpush.msra.mxu0 0.0
  %818 = vmatpush.msra.mxu0 0.0
  %819 = vmatpush.msra.mxu0 0.0
  %820 = vmatpush.msra.mxu0 0.0
  %821 = vmatpush.msra.mxu0 0.0
  %822 = vmatpush.msra.mxu0 %v230
  %823 = vmatpush.msra.mxu0 %v229
  %824 = vmatpush.msra.mxu0 %v228
  %825 = vmatpush.msra.mxu0 %v227
  %826 = vmatmul.f32.gmra.mxu0 %v788
  %v827 = vpop.f32.mrf.mxu0
  %v828 = vadd.f32 0.0, %v827
  %829 = vdwg.mxu0
  %830 = vmatpush.msra.mxu0 0.0
  %831 = vmatpush.msra.mxu0 0.0
  %832 = vmatpush.msra.mxu0 0.0
  %833 = vmatpush.msra.mxu0 0.0
  %834 = vmatpush.msra.mxu0 0.0
  %835 = vmatpush.msra.mxu0 0.0
  %836 = vmatpush.msra.mxu0 0.0
  %837 = vmatpush.msra.mxu0 0.0
  %838 = vmatpush.msra.mxu0 0.0
  %839 = vmatpush.msra.mxu0 0.0
  %840 = vmatpush.msra.mxu0 0.0
  %841 = vmatpush.msra.mxu0 0.0
  %842 = vmatpush.msra.mxu0 %v235
  %843 = vmatpush.msra.mxu0 %v234
  %844 = vmatpush.msra.mxu0 %v233
  %845 = vmatpush.msra.mxu0 %v232
  %846 = vmatmul.f32.gmra.mxu0 %v788
  %v847 = vpop.f32.mrf.mxu0
  %v848 = vadd.f32 %v279, %v847
  %849 = vdwg.mxu0
  %v850 = vadd.f32 %v120, %v808
  %v851 = vxor.u32 %v850, 2147483648
  %v852 = vmul.f32 %v851, 1.442695
  %v853 = vpow.pop %v852
  %v854 = vadd.f32 %v853, 1.0
  %v855 = vrcp.pop %v854
  %v856 = vmul.f32 %v854, %v855
  %v857 = vsub.f32 1.0, %v856
  %v858 = vmul.f32 %v855, %v857
  %v859 = vadd.f32 %v855, %v858
  %vm860 = vweird.f32 %v854
  %vm861 = vweird.f32 %v855
  %vm862 = vmor %vm860, %vm861
  %v863 = vsel %vm862, %v855, %v859
  %v864 = vand.u32 2147483647, %v854
  %vm865 = vcmp.eq.f32.partialorder %v864, 8.507059e+37
  %v866 = vand.u32 %v854, 2147483648
  %v867 = vor.u32 1.1754944e-38, %v866
  %v868 = vsel %vm865, %v867, %v863
  %v869 = vmul.f32 1.0, %v868
  %v870 = vadd.f32 %v167, %v828
  %v871 = vxor.u32 %v870, 2147483648
  %v872 = vmul.f32 %v871, 1.442695
  %v873 = vpow.pop %v872
  %v874 = vadd.f32 %v873, 1.0
  %v875 = vrcp.pop %v874
  %v876 = vmul.f32 %v874, %v875
  %v877 = vsub.f32 1.0, %v876
  %v878 = vmul.f32 %v875, %v877
  %v879 = vadd.f32 %v875, %v878
  %vm880 = vweird.f32 %v874
  %vm881 = vweird.f32 %v875
  %vm882 = vmor %vm880, %vm881
  %v883 = vsel %vm882, %v875, %v879
  %v884 = vand.u32 2147483647, %v874
  %vm885 = vcmp.eq.f32.partialorder %v884, 8.507059e+37
  %v886 = vand.u32 %v874, 2147483648
  %v887 = vor.u32 1.1754944e-38, %v886
  %v888 = vsel %vm885, %v887, %v883
  %v889 = vmul.f32 1.0, %v888
  %v890 = vmul.f32 %v869, %v848
  %v891 = vadd.f32 %v214, %v890
  %v892 = vtanh.pop %v891
  %v893 = vsub.f32 1.0, %v889
  %v894 = vmul.f32 %v893, %v892
  %v895 = vmul.f32 %v889, %v786
  %v896 = vadd.f32 %v894, %v895
  %v898 = vsel %vm62, %v896, 0
  %900 = vmatpush.msra.mxu0 0.0
  %901 = vmatpush.msra.mxu0 0.0
  %902 = vmatpush.msra.mxu0 0.0
  %903 = vmatpush.msra.mxu0 0.0
  %904 = vmatpush.msra.mxu0 0.0
  %905 = vmatpush.msra.mxu0 0.0
  %906 = vmatpush.msra.mxu0 0.0
  %907 = vmatpush.msra.mxu0 0.0
  %908 = vmatpush.msra.mxu0 0.0
  %909 = vmatpush.msra.mxu0 0.0
  %910 = vmatpush.msra.mxu0 0.0
  %911 = vmatpush.msra.mxu0 0.0
  %912 = vmatpush.msra.mxu0 %v225
  %913 = vmatpush.msra.mxu0 %v224
  %914 = vmatpush.msra.mxu0 %v223
  %915 = vmatpush.msra.mxu0 %v222
  %916 = vmatmul.f32.gmra.mxu0 %v898
  %v917 = vpop.f32.mrf.mxu0
  %v918 = vadd.f32 0.0, %v917
  %919 = vdwg.mxu0
  %920 = vmatpush.msra.mxu0 0.0
  %921 = vmatpush.msra.mxu0 0.0
  %922 = vmatpush.msra.mxu0 0.0
  %923 = vmatpush.msra.mxu0 0.0
  %924 = vmatpush.msra.mxu0 0.0
  %925 = vmatpush.msra.mxu0 0.0
  %926 = vmatpush.msra.mxu0 0.0
  %927 = vmatpush.msra.mxu0 0.0
  %928 = vmatpush.msra.mxu0 0.0
  %929 = vmatpush.msra.mxu0 0.0
  %930 = vmatpush.msra.mxu0 0.0
  %931 = vmatpush.msra.mxu0 0.0
  %932 = vmatpush.msra.mxu0 %v230
  %933 = vmatpush.msra.mxu0 %v229
  %934 = vmatpush.msra.mxu0 %v228
  %935 = vmatpush.msra.mxu0 %v227
  %936 = vmatmul.f32.gmra.mxu0 %v898
  %v937 = vpop.f32.mrf.mxu0
  %v938 = vadd.f32 0.0, %v937
  %939 = vdwg.mxu0
  %940 = vmatpush.msra.mxu0 0.0
  %941 = vmatpush.msra.mxu0 0.0
  %942 = vmatpush.msra.mxu0 0.0
  %943 = vmatpush.msra.mxu0 0.0
  %944 = vmatpush.msra.mxu0 0.0
  %945 = vmatpush.msra.mxu0 0.0
  %946 = vmatpush.msra.mxu0 0.0
  %947 = vmatpush.msra.mxu0 0.0
  %948 = vmatpush.msra.mxu0 0.0
  %949 = vmatpush.msra.mxu0 0.0
  %950 = vmatpush.msra.mxu0 0.0
  %951 = vmatpush.msra.mxu0 0.0
  %952 = vmatpush.msra.mxu0 %v235
  %953 = vmatpush.msra.mxu0 %v234
  %954 = vmatpush.msra.mxu0 %v233
  %955 = vmatpush.msra.mxu0 %v232
  %956 = vmatmul.f32.gmra.mxu0 %v898
  %v957 = vpop.f32.mrf.mxu0
  %v958 = vadd.f32 %v279, %v957
  %959 = vdwg.mxu0
  %v960 = vadd.f32 %v123, %v918
  %v961 = vxor.u32 %v960, 2147483648
  %v962 = vmul.f32 %v961, 1.442695
  %v963 = vpow.pop %v962
  %v964 = vadd.f32 %v963, 1.0
  %v965 = vrcp.pop %v964
  %v966 = vmul.f32 %v964, %v965
  %v967 = vsub.f32 1.0, %v966
  %v968 = vmul.f32 %v965, %v967
  %v969 = vadd.f32 %v965, %v968
  %vm970 = vweird.f32 %v964
  %vm971 = vweird.f32 %v965
  %vm972 = vmor %vm970, %vm971
  %v973 = vsel %vm972, %v965, %v969
  %v974 = vand.u32 2147483647, %v964
  %vm975 = vcmp.eq.f32.partialorder %v974, 8.507059e+37
  %v976 = vand.u32 %v964, 2147483648
  %v977 = vor.u32 1.1754944e-38, %v976
  %v978 = vsel %vm975, %v977, %v973
  %v979 = vmul.f32 1.0, %v978
  %v980 = vadd.f32 %v170, %v938
  %v981 = vxor.u32 %v980, 2147483648
  %v982 = vmul.f32 %v981, 1.442695
  %v983 = vpow.pop %v982
  %v984 = vadd.f32 %v983, 1.0
  %v985 = vrcp.pop %v984
  %v986 = vmul.f32 %v984, %v985
  %v987 = vsub.f32 1.0, %v986
  %v988 = vmul.f32 %v985, %v987
  %v989 = vadd.f32 %v985, %v988
  %vm990 = vweird.f32 %v984
  %vm991 = vweird.f32 %v985
  %vm992 = vmor %vm990, %vm991
  %v993 = vsel %vm992, %v985, %v989
  %v994 = vand.u32 2147483647, %v984
  %vm995 = vcmp.eq.f32.partialorder %v994, 8.507059e+37
  %v996 = vand.u32 %v984, 2147483648
  %v997 = vor.u32 1.1754944e-38, %v996
  %v998 = vsel %vm995, %v997, %v993
  %v999 = vmul.f32 1.0, %v998
  %v1000 = vmul.f32 %v979, %v958
  %v1001 = vadd.f32 %v217, %v1000
  %v1002 = vtanh.pop %v1001
  %v1003 = vsub.f32 1.0, %v999
  %v1004 = vmul.f32 %v1003, %v1002
  %v1005 = vmul.f32 %v999, %v896
  %v1006 = vadd.f32 %v1004, %v1005
  %v1008 = vsel %vm62, %v1006, 0
  %1010 = vmatpush.msra.mxu0 0.0
  %1011 = vmatpush.msra.mxu0 0.0
  %1012 = vmatpush.msra.mxu0 0.0
  %1013 = vmatpush.msra.mxu0 0.0
  %1014 = vmatpush.msra.mxu0 0.0
  %1015 = vmatpush.msra.mxu0 0.0
  %1016 = vmatpush.msra.mxu0 0.0
  %1017 = vmatpush.msra.mxu0 0.0
  %1018 = vmatpush.msra.mxu0 0.0
  %1019 = vmatpush.msra.mxu0 0.0
  %1020 = vmatpush.msra.mxu0 0.0
  %1021 = vmatpush.msra.mxu0 0.0
  %1022 = vmatpush.msra.mxu0 %v225
  %1023 = vmatpush.msra.mxu0 %v224
  %1024 = vmatpush.msra.mxu0 %v223
  %1025 = vmatpush.msra.mxu0 %v222
  %1026 = vmatmul.f32.gmra.mxu0 %v1008
  %v1027 = vpop.f32.mrf.mxu0
  %v1028 = vadd.f32 0.0, %v1027
  %1029 = vdwg.mxu0
  %1030 = vmatpush.msra.mxu0 0.0
  %1031 = vmatpush.msra.mxu0 0.0
  %1032 = vmatpush.msra.mxu0 0.0
  %1033 = vmatpush.msra.mxu0 0.0
  %1034 = vmatpush.msra.mxu0 0.0
  %1035 = vmatpush.msra.mxu0 0.0
  %1036 = vmatpush.msra.mxu0 0.0
  %1037 = vmatpush.msra.mxu0 0.0
  %1038 = vmatpush.msra.mxu0 0.0
  %1039 = vmatpush.msra.mxu0 0.0
  %1040 = vmatpush.msra.mxu0 0.0
  %1041 = vmatpush.msra.mxu0 0.0
  %1042 = vmatpush.msra.mxu0 %v230
  %1043 = vmatpush.msra.mxu0 %v229
  %1044 = vmatpush.msra.mxu0 %v228
  %1045 = vmatpush.msra.mxu0 %v227
  %1046 = vmatmul.f32.gmra.mxu0 %v1008
  %v1047 = vpop.f32.mrf.mxu0
  %v1048 = vadd.f32 0.0, %v1047
  %1049 = vdwg.mxu0
  %1050 = vmatpush.msra.mxu0 0.0
  %1051 = vmatpush.msra.mxu0 0.0
  %1052 = vmatpush.msra.mxu0 0.0
  %1053 = vmatpush.msra.mxu0 0.0
  %1054 = vmatpush.msra.mxu0 0.0
  %1055 = vmatpush.msra.mxu0 0.0
  %1056 = vmatpush.msra.mxu0 0.0
  %1057 = vmatpush.msra.mxu0 0.0
  %1058 = vmatpush.msra.mxu0 0.0
  %1059 = vmatpush.msra.mxu0 0.0
  %1060 = vmatpush.msra.mxu0 0.0
  %1061 = vmatpush.msra.mxu0 0.0
  %1062 = vmatpush.msra.mxu0 %v235
  %1063 = vmatpush.msra.mxu0 %v234
  %1064 = vmatpush.msra.mxu0 %v233
  %1065 = vmatpush.msra.mxu0 %v232
  %1066 = vmatmul.f32.gmra.mxu0 %v1008
  %v1067 = vpop.f32.mrf.mxu0
  %v1068 = vadd.f32 %v279, %v1067
  %1069 = vdwg.mxu0
  %v1070 = vadd.f32 %v126, %v1028
  %v1071 = vxor.u32 %v1070, 2147483648
  %v1072 = vmul.f32 %v1071, 1.442695
  %v1073 = vpow.pop %v1072
  %v1074 = vadd.f32 %v1073, 1.0
  %v1075 = vrcp.pop %v1074
  %v1076 = vmul.f32 %v1074, %v1075
  %v1077 = vsub.f32 1.0, %v1076
  %v1078 = vmul.f32 %v1075, %v1077
  %v1079 = vadd.f32 %v1075, %v1078
  %vm1080 = vweird.f32 %v1074
  %vm1081 = vweird.f32 %v1075
  %vm1082 = vmor %vm1080, %vm1081
  %v1083 = vsel %vm1082, %v1075, %v1079
  %v1084 = vand.u32 2147483647, %v1074
  %vm1085 = vcmp.eq.f32.partialorder %v1084, 8.507059e+37
  %v1086 = vand.u32 %v1074, 2147483648
  %v1087 = vor.u32 1.1754944e-38, %v1086
  %v1088 = vsel %vm1085, %v1087, %v1083
  %v1089 = vmul.f32 1.0, %v1088
  %v1090 = vadd.f32 %v173, %v1048
  %v1091 = vxor.u32 %v1090, 2147483648
  %v1092 = vmul.f32 %v1091, 1.442695
  %v1093 = vpow.pop %v1092
  %v1094 = vadd.f32 %v1093, 1.0
  %v1095 = vrcp.pop %v1094
  %v1096 = vmul.f32 %v1094, %v1095
  %v1097 = vsub.f32 1.0, %v1096
  %v1098 = vmul.f32 %v1095, %v1097
  %v1099 = vadd.f32 %v1095, %v1098
  %vm1100 = vweird.f32 %v1094
  %vm1101 = vweird.f32 %v1095
  %vm1102 = vmor %vm1100, %vm1101
  %v1103 = vsel %vm1102, %v1095, %v1099
  %v1104 = vand.u32 2147483647, %v1094
  %vm1105 = vcmp.eq.f32.partialorder %v1104, 8.507059e+37
  %v1106 = vand.u32 %v1094, 2147483648
  %v1107 = vor.u32 1.1754944e-38, %v1106
  %v1108 = vsel %vm1105, %v1107, %v1103
  %v1109 = vmul.f32 1.0, %v1108
  %v1110 = vmul.f32 %v1089, %v1068
  %v1111 = vadd.f32 %v220, %v1110
  %v1112 = vtanh.pop %v1111
  %v1113 = vsub.f32 1.0, %v1109
  %v1114 = vmul.f32 %v1113, %v1112
  %v1115 = vmul.f32 %v1109, %v1006
  %v1116 = vadd.f32 %v1114, %v1115
  %v1117 = vld [vmem:[%s7] sm:$0xf]
  %v1118 = vld [vmem:[%s5] sm:$0xff]
  %v1119 = vld [vmem:[%s5 + $0x8] sm:$0xff]
  %v1120 = vld [vmem:[%s5 + $0x10] sm:$0xff]
  %v1121 = vld [vmem:[%s5 + $0x18] sm:$0xff]
  %v1122 = vperm.slane %v1117, 0
  %v1124 = vsel %vm62, %v1116, 0
  %1126 = vmatpush.msra.mxu0 0.0
  %1127 = vmatpush.msra.mxu0 0.0
  %1128 = vmatpush.msra.mxu0 0.0
  %1129 = vmatpush.msra.mxu0 0.0
  %1130 = vmatpush.msra.mxu0 0.0
  %1131 = vmatpush.msra.mxu0 0.0
  %1132 = vmatpush.msra.mxu0 0.0
  %1133 = vmatpush.msra.mxu0 0.0
  %1134 = vmatpush.msra.mxu0 0.0
  %1135 = vmatpush.msra.mxu0 0.0
  %1136 = vmatpush.msra.mxu0 0.0
  %1137 = vmatpush.msra.mxu0 0.0
  %1138 = vmatpush.msra.mxu0 %v1121
  %1139 = vmatpush.msra.mxu0 %v1120
  %1140 = vmatpush.msra.mxu0 %v1119
  %1141 = vmatpush.msra.mxu0 %v1118
  %1142 = vmatmul.f32.gmra.mxu0 %v348
  %v1143 = vpop.f32.mrf.mxu0
  %v1144 = vadd.f32 %v1122, %v1143
  %1145 = vmatmul.f32.gmra.mxu0 %v458
  %v1146 = vpop.f32.mrf.mxu0
  %v1147 = vadd.f32 %v1122, %v1146
  %1148 = vmatmul.f32.gmra.mxu0 %v568
  %v1149 = vpop.f32.mrf.mxu0
  %v1150 = vadd.f32 %v1122, %v1149
  %1151 = vmatmul.f32.gmra.mxu0 %v678
  %v1152 = vpop.f32.mrf.mxu0
  %v1153 = vadd.f32 %v1122, %v1152
  %1154 = vmatmul.f32.gmra.mxu0 %v788
  %v1155 = vpop.f32.mrf.mxu0
  %v1156 = vadd.f32 %v1122, %v1155
  %1157 = vmatmul.f32.gmra.mxu0 %v898
  %v1158 = vpop.f32.mrf.mxu0
  %v1159 = vadd.f32 %v1122, %v1158
  %1160 = vmatmul.f32.gmra.mxu0 %v1008
  %v1161 = vpop.f32.mrf.mxu0
  %v1162 = vadd.f32 %v1122, %v1161
  %1163 = vmatmul.f32.gmra.mxu0 %v1124
  %v1164 = vpop.f32.mrf.mxu0
  %v1165 = vadd.f32 %v1122, %v1164
  %1166 = vdwg.mxu0
  %s1167 = scalar_lea.vmem %s5, 32
  %v1168 = vld [vmem:[%s1167] sm:$0xff]
  %v1169 = vld [vmem:[%s1167 + $0x8] sm:$0xff]
  %v1170 = vld [vmem:[%s1167 + $0x10] sm:$0xff]
  %v1171 = vld [vmem:[%s1167 + $0x18] sm:$0xff]
  %v1172 = vperm.slane %v1117, 1
  %1173 = vmatpush.msra.mxu0 0.0
  %1174 = vmatpush.msra.mxu0 0.0
  %1175 = vmatpush.msra.mxu0 0.0
  %1176 = vmatpush.msra.mxu0 0.0
  %1177 = vmatpush.msra.mxu0 0.0
  %1178 = vmatpush.msra.mxu0 0.0
  %1179 = vmatpush.msra.mxu0 0.0
  %1180 = vmatpush.msra.mxu0 0.0
  %1181 = vmatpush.msra.mxu0 0.0
  %1182 = vmatpush.msra.mxu0 0.0
  %1183 = vmatpush.msra.mxu0 0.0
  %1184 = vmatpush.msra.mxu0 0.0
  %1185 = vmatpush.msra.mxu0 %v1171
  %1186 = vmatpush.msra.mxu0 %v1170
  %1187 = vmatpush.msra.mxu0 %v1169
  %1188 = vmatpush.msra.mxu0 %v1168
  %1189 = vmatmul.f32.gmra.mxu0 %v348
  %v1190 = vpop.f32.mrf.mxu0
  %v1191 = vadd.f32 %v1172, %v1190
  %1192 = vmatmul.f32.gmra.mxu0 %v458
  %v1193 = vpop.f32.mrf.mxu0
  %v1194 = vadd.f32 %v1172, %v1193
  %1195 = vmatmul.f32.gmra.mxu0 %v568
  %v1196 = vpop.f32.mrf.mxu0
  %v1197 = vadd.f32 %v1172, %v1196
  %1198 = vmatmul.f32.gmra.mxu0 %v678
  %v1199 = vpop.f32.mrf.mxu0
  %v1200 = vadd.f32 %v1172, %v1199
  %1201 = vmatmul.f32.gmra.mxu0 %v788
  %v1202 = vpop.f32.mrf.mxu0
  %v1203 = vadd.f32 %v1172, %v1202
  %1204 = vmatmul.f32.gmra.mxu0 %v898
  %v1205 = vpop.f32.mrf.mxu0
  %v1206 = vadd.f32 %v1172, %v1205
  %1207 = vmatmul.f32.gmra.mxu0 %v1008
  %v1208 = vpop.f32.mrf.mxu0
  %v1209 = vadd.f32 %v1172, %v1208
  %1210 = vmatmul.f32.gmra.mxu0 %v1124
  %v1211 = vpop.f32.mrf.mxu0
  %v1212 = vadd.f32 %v1172, %v1211
  %1213 = vdwg.mxu0
  %s1214 = scalar_lea.vmem %s5, 64
  %v1215 = vld [vmem:[%s1214] sm:$0xff]
  %v1216 = vld [vmem:[%s1214 + $0x8] sm:$0xff]
  %v1217 = vld [vmem:[%s1214 + $0x10] sm:$0xff]
  %v1218 = vld [vmem:[%s1214 + $0x18] sm:$0xff]
  %v1219 = vperm.slane %v1117, 2
  %1220 = vmatpush.msra.mxu0 0.0
  %1221 = vmatpush.msra.mxu0 0.0
  %1222 = vmatpush.msra.mxu0 0.0
  %1223 = vmatpush.msra.mxu0 0.0
  %1224 = vmatpush.msra.mxu0 0.0
  %1225 = vmatpush.msra.mxu0 0.0
  %1226 = vmatpush.msra.mxu0 0.0
  %1227 = vmatpush.msra.mxu0 0.0
  %1228 = vmatpush.msra.mxu0 0.0
  %1229 = vmatpush.msra.mxu0 0.0
  %1230 = vmatpush.msra.mxu0 0.0
  %1231 = vmatpush.msra.mxu0 0.0
  %1232 = vmatpush.msra.mxu0 %v1218
  %1233 = vmatpush.msra.mxu0 %v1217
  %1234 = vmatpush.msra.mxu0 %v1216
  %1235 = vmatpush.msra.mxu0 %v1215
  %1236 = vmatmul.f32.gmra.mxu0 %v348
  %v1237 = vpop.f32.mrf.mxu0
  %v1238 = vadd.f32 %v1219, %v1237
  %1239 = vmatmul.f32.gmra.mxu0 %v458
  %v1240 = vpop.f32.mrf.mxu0
  %v1241 = vadd.f32 %v1219, %v1240
  %1242 = vmatmul.f32.gmra.mxu0 %v568
  %v1243 = vpop.f32.mrf.mxu0
  %v1244 = vadd.f32 %v1219, %v1243
  %1245 = vmatmul.f32.gmra.mxu0 %v678
  %v1246 = vpop.f32.mrf.mxu0
  %v1247 = vadd.f32 %v1219, %v1246
  %1248 = vmatmul.f32.gmra.mxu0 %v788
  %v1249 = vpop.f32.mrf.mxu0
  %v1250 = vadd.f32 %v1219, %v1249
  %1251 = vmatmul.f32.gmra.mxu0 %v898
  %v1252 = vpop.f32.mrf.mxu0
  %v1253 = vadd.f32 %v1219, %v1252
  %1254 = vmatmul.f32.gmra.mxu0 %v1008
  %v1255 = vpop.f32.mrf.mxu0
  %v1256 = vadd.f32 %v1219, %v1255
  %1257 = vmatmul.f32.gmra.mxu0 %v1124
  %v1258 = vpop.f32.mrf.mxu0
  %v1259 = vadd.f32 %v1219, %v1258
  %1260 = vdwg.mxu0
  %v1261 = vld [vmem:[%s6] sm:$0xff]
  %v1262 = vld [vmem:[%s6 + $0x8] sm:$0xff]
  %v1263 = vld [vmem:[%s6 + $0x10] sm:$0xff]
  %v1264 = vld [vmem:[%s6 + $0x18] sm:$0xff]
  %s1265 = scalar_lea.vmem %s6, 32
  %v1266 = vld [vmem:[%s1265] sm:$0xff]
  %v1267 = vld [vmem:[%s1265 + $0x8] sm:$0xff]
  %v1268 = vld [vmem:[%s1265 + $0x10] sm:$0xff]
  %v1269 = vld [vmem:[%s1265 + $0x18] sm:$0xff]
  %s1270 = scalar_lea.vmem %s6, 64
  %v1271 = vld [vmem:[%s1270] sm:$0xff]
  %v1272 = vld [vmem:[%s1270 + $0x8] sm:$0xff]
  %v1273 = vld [vmem:[%s1270 + $0x10] sm:$0xff]
  %v1274 = vld [vmem:[%s1270 + $0x18] sm:$0xff]
  %1275 = vmatpush.msra.mxu0 0.0
  %1276 = vmatpush.msra.mxu0 0.0
  %1277 = vmatpush.msra.mxu0 0.0
  %1278 = vmatpush.msra.mxu0 0.0
  %1279 = vmatpush.msra.mxu0 0.0
  %1280 = vmatpush.msra.mxu0 0.0
  %1281 = vmatpush.msra.mxu0 0.0
  %1282 = vmatpush.msra.mxu0 0.0
  %1283 = vmatpush.msra.mxu0 0.0
  %1284 = vmatpush.msra.mxu0 0.0
  %1285 = vmatpush.msra.mxu0 0.0
  %1286 = vmatpush.msra.mxu0 0.0
  %1287 = vmatpush.msra.mxu0 %v1264
  %1288 = vmatpush.msra.mxu0 %v1263
  %1289 = vmatpush.msra.mxu0 %v1262
  %1290 = vmatpush.msra.mxu0 %v1261
  %1291 = vmatmul.f32.gmra.mxu0 %v237
  %v1292 = vpop.f32.mrf.mxu0
  %v1293 = vadd.f32 0.0, %v1292
  %1294 = vdwg.mxu0
  %1295 = vmatpush.msra.mxu0 0.0
  %1296 = vmatpush.msra.mxu0 0.0
  %1297 = vmatpush.msra.mxu0 0.0
  %1298 = vmatpush.msra.mxu0 0.0
  %1299 = vmatpush.msra.mxu0 0.0
  %1300 = vmatpush.msra.mxu0 0.0
  %1301 = vmatpush.msra.mxu0 0.0
  %1302 = vmatpush.msra.mxu0 0.0
  %1303 = vmatpush.msra.mxu0 0.0
  %1304 = vmatpush.msra.mxu0 0.0
  %1305 = vmatpush.msra.mxu0 0.0
  %1306 = vmatpush.msra.mxu0 0.0
  %1307 = vmatpush.msra.mxu0 %v1269
  %1308 = vmatpush.msra.mxu0 %v1268
  %1309 = vmatpush.msra.mxu0 %v1267
  %1310 = vmatpush.msra.mxu0 %v1266
  %1311 = vmatmul.f32.gmra.mxu0 %v237
  %v1312 = vpop.f32.mrf.mxu0
  %v1313 = vadd.f32 0.0, %v1312
  %1314 = vdwg.mxu0
  %v1315 = vperm.slane %v1117, 3
  %1316 = vmatpush.msra.mxu0 0.0
  %1317 = vmatpush.msra.mxu0 0.0
  %1318 = vmatpush.msra.mxu0 0.0
  %1319 = vmatpush.msra.mxu0 0.0
  %1320 = vmatpush.msra.mxu0 0.0
  %1321 = vmatpush.msra.mxu0 0.0
  %1322 = vmatpush.msra.mxu0 0.0
  %1323 = vmatpush.msra.mxu0 0.0
  %1324 = vmatpush.msra.mxu0 0.0
  %1325 = vmatpush.msra.mxu0 0.0
  %1326 = vmatpush.msra.mxu0 0.0
  %1327 = vmatpush.msra.mxu0 0.0
  %1328 = vmatpush.msra.mxu0 %v1274
  %1329 = vmatpush.msra.mxu0 %v1273
  %1330 = vmatpush.msra.mxu0 %v1272
  %1331 = vmatpush.msra.mxu0 %v1271
  %1332 = vmatmul.f32.gmra.mxu0 %v237
  %v1333 = vpop.f32.mrf.mxu0
  %v1334 = vadd.f32 %v1315, %v1333
  %1335 = vdwg.mxu0
  %v1336 = vadd.f32 %v1144, %v1293
  %v1337 = vxor.u32 %v1336, 2147483648
  %v1338 = vmul.f32 %v1337, 1.442695
  %v1339 = vpow.pop %v1338
  %v1340 = vadd.f32 %v1339, 1.0
  %v1341 = vrcp.pop %v1340
  %v1342 = vmul.f32 %v1340, %v1341
  %v1343 = vsub.f32 1.0, %v1342
  %v1344 = vmul.f32 %v1341, %v1343
  %v1345 = vadd.f32 %v1341, %v1344
  %vm1346 = vweird.f32 %v1340
  %vm1347 = vweird.f32 %v1341
  %vm1348 = vmor %vm1346, %vm1347
  %v1349 = vsel %vm1348, %v1341, %v1345
  %v1350 = vand.u32 2147483647, %v1340
  %vm1351 = vcmp.eq.f32.partialorder %v1350, 8.507059e+37
  %v1352 = vand.u32 %v1340, 2147483648
  %v1353 = vor.u32 1.1754944e-38, %v1352
  %v1354 = vsel %vm1351, %v1353, %v1349
  %v1355 = vmul.f32 1.0, %v1354
  %v1356 = vadd.f32 %v1191, %v1313
  %v1357 = vxor.u32 %v1356, 2147483648
  %v1358 = vmul.f32 %v1357, 1.442695
  %v1359 = vpow.pop %v1358
  %v1360 = vadd.f32 %v1359, 1.0
  %v1361 = vrcp.pop %v1360
  %v1362 = vmul.f32 %v1360, %v1361
  %v1363 = vsub.f32 1.0, %v1362
  %v1364 = vmul.f32 %v1361, %v1363
  %v1365 = vadd.f32 %v1361, %v1364
  %vm1366 = vweird.f32 %v1360
  %vm1367 = vweird.f32 %v1361
  %vm1368 = vmor %vm1366, %vm1367
  %v1369 = vsel %vm1368, %v1361, %v1365
  %v1370 = vand.u32 2147483647, %v1360
  %vm1371 = vcmp.eq.f32.partialorder %v1370, 8.507059e+37
  %v1372 = vand.u32 %v1360, 2147483648
  %v1373 = vor.u32 1.1754944e-38, %v1372
  %v1374 = vsel %vm1371, %v1373, %v1369
  %v1375 = vmul.f32 1.0, %v1374
  %v1376 = vmul.f32 %v1355, %v1334
  %v1377 = vadd.f32 %v1238, %v1376
  %v1378 = vtanh.pop %v1377
  %v1379 = vsub.f32 1.0, %v1375
  %v1380 = vmul.f32 %v1379, %v1378
  %v1381 = vmul.f32 %v1375, 0.0
  %v1382 = vadd.f32 %v1380, %v1381
  %vm1383 = vcmp.eq.s32.totalorder %v47, 1
  %v1384 = vsel %vm1383, 1, 0
  %1385 = vset.pattern.permute.xlu0 0
  %1386 = vperm.xlu0 %1385, %v1384
  %v1387 = vpop.permute.xlu0 %1386
  %vm1388 = vcmp.eq.s32.totalorder %v1387, 1
  %v1389 = vsel %vm1388, %v1382, 0.0
  %v1391 = vsel %vm62, %v1382, 0
  %1393 = vmatpush.msra.mxu0 0.0
  %1394 = vmatpush.msra.mxu0 0.0
  %1395 = vmatpush.msra.mxu0 0.0
  %1396 = vmatpush.msra.mxu0 0.0
  %1397 = vmatpush.msra.mxu0 0.0
  %1398 = vmatpush.msra.mxu0 0.0
  %1399 = vmatpush.msra.mxu0 0.0
  %1400 = vmatpush.msra.mxu0 0.0
  %1401 = vmatpush.msra.mxu0 0.0
  %1402 = vmatpush.msra.mxu0 0.0
  %1403 = vmatpush.msra.mxu0 0.0
  %1404 = vmatpush.msra.mxu0 0.0
  %1405 = vmatpush.msra.mxu0 %v1264
  %1406 = vmatpush.msra.mxu0 %v1263
  %1407 = vmatpush.msra.mxu0 %v1262
  %1408 = vmatpush.msra.mxu0 %v1261
  %1409 = vmatmul.f32.gmra.mxu0 %v1391
  %v1410 = vpop.f32.mrf.mxu0
  %v1411 = vadd.f32 0.0, %v1410
  %1412 = vdwg.mxu0
  %1413 = vmatpush.msra.mxu0 0.0
  %1414 = vmatpush.msra.mxu0 0.0
  %1415 = vmatpush.msra.mxu0 0.0
  %1416 = vmatpush.msra.mxu0 0.0
  %1417 = vmatpush.msra.mxu0 0.0
  %1418 = vmatpush.msra.mxu0 0.0
  %1419 = vmatpush.msra.mxu0 0.0
  %1420 = vmatpush.msra.mxu0 0.0
  %1421 = vmatpush.msra.mxu0 0.0
  %1422 = vmatpush.msra.mxu0 0.0
  %1423 = vmatpush.msra.mxu0 0.0
  %1424 = vmatpush.msra.mxu0 0.0
  %1425 = vmatpush.msra.mxu0 %v1269
  %1426 = vmatpush.msra.mxu0 %v1268
  %1427 = vmatpush.msra.mxu0 %v1267
  %1428 = vmatpush.msra.mxu0 %v1266
  %1429 = vmatmul.f32.gmra.mxu0 %v1391
  %v1430 = vpop.f32.mrf.mxu0
  %v1431 = vadd.f32 0.0, %v1430
  %1432 = vdwg.mxu0
  %1433 = vmatpush.msra.mxu0 0.0
  %1434 = vmatpush.msra.mxu0 0.0
  %1435 = vmatpush.msra.mxu0 0.0
  %1436 = vmatpush.msra.mxu0 0.0
  %1437 = vmatpush.msra.mxu0 0.0
  %1438 = vmatpush.msra.mxu0 0.0
  %1439 = vmatpush.msra.mxu0 0.0
  %1440 = vmatpush.msra.mxu0 0.0
  %1441 = vmatpush.msra.mxu0 0.0
  %1442 = vmatpush.msra.mxu0 0.0
  %1443 = vmatpush.msra.mxu0 0.0
  %1444 = vmatpush.msra.mxu0 0.0
  %1445 = vmatpush.msra.mxu0 %v1274
  %1446 = vmatpush.msra.mxu0 %v1273
  %1447 = vmatpush.msra.mxu0 %v1272
  %1448 = vmatpush.msra.mxu0 %v1271
  %1449 = vmatmul.f32.gmra.mxu0 %v1391
  %v1450 = vpop.f32.mrf.mxu0
  %v1451 = vadd.f32 %v1315, %v1450
  %1452 = vdwg.mxu0
  %v1453 = vadd.f32 %v1147, %v1411
  %v1454 = vxor.u32 %v1453, 2147483648
  %v1455 = vmul.f32 %v1454, 1.442695
  %v1456 = vpow.pop %v1455
  %v1457 = vadd.f32 %v1456, 1.0
  %v1458 = vrcp.pop %v1457
  %v1459 = vmul.f32 %v1457, %v1458
  %v1460 = vsub.f32 1.0, %v1459
  %v1461 = vmul.f32 %v1458, %v1460
  %v1462 = vadd.f32 %v1458, %v1461
  %vm1463 = vweird.f32 %v1457
  %vm1464 = vweird.f32 %v1458
  %vm1465 = vmor %vm1463, %vm1464
  %v1466 = vsel %vm1465, %v1458, %v1462
  %v1467 = vand.u32 2147483647, %v1457
  %vm1468 = vcmp.eq.f32.partialorder %v1467, 8.507059e+37
  %v1469 = vand.u32 %v1457, 2147483648
  %v1470 = vor.u32 1.1754944e-38, %v1469
  %v1471 = vsel %vm1468, %v1470, %v1466
  %v1472 = vmul.f32 1.0, %v1471
  %v1473 = vadd.f32 %v1194, %v1431
  %v1474 = vxor.u32 %v1473, 2147483648
  %v1475 = vmul.f32 %v1474, 1.442695
  %v1476 = vpow.pop %v1475
  %v1477 = vadd.f32 %v1476, 1.0
  %v1478 = vrcp.pop %v1477
  %v1479 = vmul.f32 %v1477, %v1478
  %v1480 = vsub.f32 1.0, %v1479
  %v1481 = vmul.f32 %v1478, %v1480
  %v1482 = vadd.f32 %v1478, %v1481
  %vm1483 = vweird.f32 %v1477
  %vm1484 = vweird.f32 %v1478
  %vm1485 = vmor %vm1483, %vm1484
  %v1486 = vsel %vm1485, %v1478, %v1482
  %v1487 = vand.u32 2147483647, %v1477
  %vm1488 = vcmp.eq.f32.partialorder %v1487, 8.507059e+37
  %v1489 = vand.u32 %v1477, 2147483648
  %v1490 = vor.u32 1.1754944e-38, %v1489
  %v1491 = vsel %vm1488, %v1490, %v1486
  %v1492 = vmul.f32 1.0, %v1491
  %v1493 = vmul.f32 %v1472, %v1451
  %v1494 = vadd.f32 %v1241, %v1493
  %v1495 = vtanh.pop %v1494
  %v1496 = vsub.f32 1.0, %v1492
  %v1497 = vmul.f32 %v1496, %v1495
  %v1498 = vmul.f32 %v1492, %v1382
  %v1499 = vadd.f32 %v1497, %v1498
  %vm1500 = vcmp.eq.s32.totalorder %v47, 2
  %v1501 = vsel %vm1500, 1, 0
  %1502 = vset.pattern.permute.xlu0 0
  %1503 = vperm.xlu0 %1502, %v1501
  %v1504 = vpop.permute.xlu0 %1503
  %vm1505 = vcmp.eq.s32.totalorder %v1504, 1
  %v1506 = vsel %vm1505, %v1499, %v1389
  %v1508 = vsel %vm62, %v1499, 0
  %1510 = vmatpush.msra.mxu0 0.0
  %1511 = vmatpush.msra.mxu0 0.0
  %1512 = vmatpush.msra.mxu0 0.0
  %1513 = vmatpush.msra.mxu0 0.0
  %1514 = vmatpush.msra.mxu0 0.0
  %1515 = vmatpush.msra.mxu0 0.0
  %1516 = vmatpush.msra.mxu0 0.0
  %1517 = vmatpush.msra.mxu0 0.0
  %1518 = vmatpush.msra.mxu0 0.0
  %1519 = vmatpush.msra.mxu0 0.0
  %1520 = vmatpush.msra.mxu0 0.0
  %1521 = vmatpush.msra.mxu0 0.0
  %1522 = vmatpush.msra.mxu0 %v1264
  %1523 = vmatpush.msra.mxu0 %v1263
  %1524 = vmatpush.msra.mxu0 %v1262
  %1525 = vmatpush.msra.mxu0 %v1261
  %1526 = vmatmul.f32.gmra.mxu0 %v1508
  %v1527 = vpop.f32.mrf.mxu0
  %v1528 = vadd.f32 0.0, %v1527
  %1529 = vdwg.mxu0
  %1530 = vmatpush.msra.mxu0 0.0
  %1531 = vmatpush.msra.mxu0 0.0
  %1532 = vmatpush.msra.mxu0 0.0
  %1533 = vmatpush.msra.mxu0 0.0
  %1534 = vmatpush.msra.mxu0 0.0
  %1535 = vmatpush.msra.mxu0 0.0
  %1536 = vmatpush.msra.mxu0 0.0
  %1537 = vmatpush.msra.mxu0 0.0
  %1538 = vmatpush.msra.mxu0 0.0
  %1539 = vmatpush.msra.mxu0 0.0
  %1540 = vmatpush.msra.mxu0 0.0
  %1541 = vmatpush.msra.mxu0 0.0
  %1542 = vmatpush.msra.mxu0 %v1269
  %1543 = vmatpush.msra.mxu0 %v1268
  %1544 = vmatpush.msra.mxu0 %v1267
  %1545 = vmatpush.msra.mxu0 %v1266
  %1546 = vmatmul.f32.gmra.mxu0 %v1508
  %v1547 = vpop.f32.mrf.mxu0
  %v1548 = vadd.f32 0.0, %v1547
  %1549 = vdwg.mxu0
  %1550 = vmatpush.msra.mxu0 0.0
  %1551 = vmatpush.msra.mxu0 0.0
  %1552 = vmatpush.msra.mxu0 0.0
  %1553 = vmatpush.msra.mxu0 0.0
  %1554 = vmatpush.msra.mxu0 0.0
  %1555 = vmatpush.msra.mxu0 0.0
  %1556 = vmatpush.msra.mxu0 0.0
  %1557 = vmatpush.msra.mxu0 0.0
  %1558 = vmatpush.msra.mxu0 0.0
  %1559 = vmatpush.msra.mxu0 0.0
  %1560 = vmatpush.msra.mxu0 0.0
  %1561 = vmatpush.msra.mxu0 0.0
  %1562 = vmatpush.msra.mxu0 %v1274
  %1563 = vmatpush.msra.mxu0 %v1273
  %1564 = vmatpush.msra.mxu0 %v1272
  %1565 = vmatpush.msra.mxu0 %v1271
  %1566 = vmatmul.f32.gmra.mxu0 %v1508
  %v1567 = vpop.f32.mrf.mxu0
  %v1568 = vadd.f32 %v1315, %v1567
  %1569 = vdwg.mxu0
  %v1570 = vadd.f32 %v1150, %v1528
  %v1571 = vxor.u32 %v1570, 2147483648
  %v1572 = vmul.f32 %v1571, 1.442695
  %v1573 = vpow.pop %v1572
  %v1574 = vadd.f32 %v1573, 1.0
  %v1575 = vrcp.pop %v1574
  %v1576 = vmul.f32 %v1574, %v1575
  %v1577 = vsub.f32 1.0, %v1576
  %v1578 = vmul.f32 %v1575, %v1577
  %v1579 = vadd.f32 %v1575, %v1578
  %vm1580 = vweird.f32 %v1574
  %vm1581 = vweird.f32 %v1575
  %vm1582 = vmor %vm1580, %vm1581
  %v1583 = vsel %vm1582, %v1575, %v1579
  %v1584 = vand.u32 2147483647, %v1574
  %vm1585 = vcmp.eq.f32.partialorder %v1584, 8.507059e+37
  %v1586 = vand.u32 %v1574, 2147483648
  %v1587 = vor.u32 1.1754944e-38, %v1586
  %v1588 = vsel %vm1585, %v1587, %v1583
  %v1589 = vmul.f32 1.0, %v1588
  %v1590 = vadd.f32 %v1197, %v1548
  %v1591 = vxor.u32 %v1590, 2147483648
  %v1592 = vmul.f32 %v1591, 1.442695
  %v1593 = vpow.pop %v1592
  %v1594 = vadd.f32 %v1593, 1.0
  %v1595 = vrcp.pop %v1594
  %v1596 = vmul.f32 %v1594, %v1595
  %v1597 = vsub.f32 1.0, %v1596
  %v1598 = vmul.f32 %v1595, %v1597
  %v1599 = vadd.f32 %v1595, %v1598
  %vm1600 = vweird.f32 %v1594
  %vm1601 = vweird.f32 %v1595
  %vm1602 = vmor %vm1600, %vm1601
  %v1603 = vsel %vm1602, %v1595, %v1599
  %v1604 = vand.u32 2147483647, %v1594
  %vm1605 = vcmp.eq.f32.partialorder %v1604, 8.507059e+37
  %v1606 = vand.u32 %v1594, 2147483648
  %v1607 = vor.u32 1.1754944e-38, %v1606
  %v1608 = vsel %vm1605, %v1607, %v1603
  %v1609 = vmul.f32 1.0, %v1608
  %v1610 = vmul.f32 %v1589, %v1568
  %v1611 = vadd.f32 %v1244, %v1610
  %v1612 = vtanh.pop %v1611
  %v1613 = vsub.f32 1.0, %v1609
  %v1614 = vmul.f32 %v1613, %v1612
  %v1615 = vmul.f32 %v1609, %v1499
  %v1616 = vadd.f32 %v1614, %v1615
  %vm1617 = vcmp.eq.s32.totalorder %v47, 3
  %v1618 = vsel %vm1617, 1, 0
  %1619 = vset.pattern.permute.xlu0 0
  %1620 = vperm.xlu0 %1619, %v1618
  %v1621 = vpop.permute.xlu0 %1620
  %vm1622 = vcmp.eq.s32.totalorder %v1621, 1
  %v1623 = vsel %vm1622, %v1616, %v1506
  %v1625 = vsel %vm62, %v1616, 0
  %1627 = vmatpush.msra.mxu0 0.0
  %1628 = vmatpush.msra.mxu0 0.0
  %1629 = vmatpush.msra.mxu0 0.0
  %1630 = vmatpush.msra.mxu0 0.0
  %1631 = vmatpush.msra.mxu0 0.0
  %1632 = vmatpush.msra.mxu0 0.0
  %1633 = vmatpush.msra.mxu0 0.0
  %1634 = vmatpush.msra.mxu0 0.0
  %1635 = vmatpush.msra.mxu0 0.0
  %1636 = vmatpush.msra.mxu0 0.0
  %1637 = vmatpush.msra.mxu0 0.0
  %1638 = vmatpush.msra.mxu0 0.0
  %1639 = vmatpush.msra.mxu0 %v1264
  %1640 = vmatpush.msra.mxu0 %v1263
  %1641 = vmatpush.msra.mxu0 %v1262
  %1642 = vmatpush.msra.mxu0 %v1261
  %1643 = vmatmul.f32.gmra.mxu0 %v1625
  %v1644 = vpop.f32.mrf.mxu0
  %v1645 = vadd.f32 0.0, %v1644
  %1646 = vdwg.mxu0
  %1647 = vmatpush.msra.mxu0 0.0
  %1648 = vmatpush.msra.mxu0 0.0
  %1649 = vmatpush.msra.mxu0 0.0
  %1650 = vmatpush.msra.mxu0 0.0
  %1651 = vmatpush.msra.mxu0 0.0
  %1652 = vmatpush.msra.mxu0 0.0
  %1653 = vmatpush.msra.mxu0 0.0
  %1654 = vmatpush.msra.mxu0 0.0
  %1655 = vmatpush.msra.mxu0 0.0
  %1656 = vmatpush.msra.mxu0 0.0
  %1657 = vmatpush.msra.mxu0 0.0
  %1658 = vmatpush.msra.mxu0 0.0
  %1659 = vmatpush.msra.mxu0 %v1269
  %1660 = vmatpush.msra.mxu0 %v1268
  %1661 = vmatpush.msra.mxu0 %v1267
  %1662 = vmatpush.msra.mxu0 %v1266
  %1663 = vmatmul.f32.gmra.mxu0 %v1625
  %v1664 = vpop.f32.mrf.mxu0
  %v1665 = vadd.f32 0.0, %v1664
  %1666 = vdwg.mxu0
  %1667 = vmatpush.msra.mxu0 0.0
  %1668 = vmatpush.msra.mxu0 0.0
  %1669 = vmatpush.msra.mxu0 0.0
  %1670 = vmatpush.msra.mxu0 0.0
  %1671 = vmatpush.msra.mxu0 0.0
  %1672 = vmatpush.msra.mxu0 0.0
  %1673 = vmatpush.msra.mxu0 0.0
  %1674 = vmatpush.msra.mxu0 0.0
  %1675 = vmatpush.msra.mxu0 0.0
  %1676 = vmatpush.msra.mxu0 0.0
  %1677 = vmatpush.msra.mxu0 0.0
  %1678 = vmatpush.msra.mxu0 0.0
  %1679 = vmatpush.msra.mxu0 %v1274
  %1680 = vmatpush.msra.mxu0 %v1273
  %1681 = vmatpush.msra.mxu0 %v1272
  %1682 = vmatpush.msra.mxu0 %v1271
  %1683 = vmatmul.f32.gmra.mxu0 %v1625
  %v1684 = vpop.f32.mrf.mxu0
  %v1685 = vadd.f32 %v1315, %v1684
  %1686 = vdwg.mxu0
  %v1687 = vadd.f32 %v1153, %v1645
  %v1688 = vxor.u32 %v1687, 2147483648
  %v1689 = vmul.f32 %v1688, 1.442695
  %v1690 = vpow.pop %v1689
  %v1691 = vadd.f32 %v1690, 1.0
  %v1692 = vrcp.pop %v1691
  %v1693 = vmul.f32 %v1691, %v1692
  %v1694 = vsub.f32 1.0, %v1693
  %v1695 = vmul.f32 %v1692, %v1694
  %v1696 = vadd.f32 %v1692, %v1695
  %vm1697 = vweird.f32 %v1691
  %vm1698 = vweird.f32 %v1692
  %vm1699 = vmor %vm1697, %vm1698
  %v1700 = vsel %vm1699, %v1692, %v1696
  %v1701 = vand.u32 2147483647, %v1691
  %vm1702 = vcmp.eq.f32.partialorder %v1701, 8.507059e+37
  %v1703 = vand.u32 %v1691, 2147483648
  %v1704 = vor.u32 1.1754944e-38, %v1703
  %v1705 = vsel %vm1702, %v1704, %v1700
  %v1706 = vmul.f32 1.0, %v1705
  %v1707 = vadd.f32 %v1200, %v1665
  %v1708 = vxor.u32 %v1707, 2147483648
  %v1709 = vmul.f32 %v1708, 1.442695
  %v1710 = vpow.pop %v1709
  %v1711 = vadd.f32 %v1710, 1.0
  %v1712 = vrcp.pop %v1711
  %v1713 = vmul.f32 %v1711, %v1712
  %v1714 = vsub.f32 1.0, %v1713
  %v1715 = vmul.f32 %v1712, %v1714
  %v1716 = vadd.f32 %v1712, %v1715
  %vm1717 = vweird.f32 %v1711
  %vm1718 = vweird.f32 %v1712
  %vm1719 = vmor %vm1717, %vm1718
  %v1720 = vsel %vm1719, %v1712, %v1716
  %v1721 = vand.u32 2147483647, %v1711
  %vm1722 = vcmp.eq.f32.partialorder %v1721, 8.507059e+37
  %v1723 = vand.u32 %v1711, 2147483648
  %v1724 = vor.u32 1.1754944e-38, %v1723
  %v1725 = vsel %vm1722, %v1724, %v1720
  %v1726 = vmul.f32 1.0, %v1725
  %v1727 = vmul.f32 %v1706, %v1685
  %v1728 = vadd.f32 %v1247, %v1727
  %v1729 = vtanh.pop %v1728
  %v1730 = vsub.f32 1.0, %v1726
  %v1731 = vmul.f32 %v1730, %v1729
  %v1732 = vmul.f32 %v1726, %v1616
  %v1733 = vadd.f32 %v1731, %v1732
  %vm1734 = vcmp.eq.s32.totalorder %v47, 4
  %v1735 = vsel %vm1734, 1, 0
  %1736 = vset.pattern.permute.xlu0 0
  %1737 = vperm.xlu0 %1736, %v1735
  %v1738 = vpop.permute.xlu0 %1737
  %vm1739 = vcmp.eq.s32.totalorder %v1738, 1
  %v1740 = vsel %vm1739, %v1733, %v1623
  %v1742 = vsel %vm62, %v1733, 0
  %1744 = vmatpush.msra.mxu0 0.0
  %1745 = vmatpush.msra.mxu0 0.0
  %1746 = vmatpush.msra.mxu0 0.0
  %1747 = vmatpush.msra.mxu0 0.0
  %1748 = vmatpush.msra.mxu0 0.0
  %1749 = vmatpush.msra.mxu0 0.0
  %1750 = vmatpush.msra.mxu0 0.0
  %1751 = vmatpush.msra.mxu0 0.0
  %1752 = vmatpush.msra.mxu0 0.0
  %1753 = vmatpush.msra.mxu0 0.0
  %1754 = vmatpush.msra.mxu0 0.0
  %1755 = vmatpush.msra.mxu0 0.0
  %1756 = vmatpush.msra.mxu0 %v1264
  %1757 = vmatpush.msra.mxu0 %v1263
  %1758 = vmatpush.msra.mxu0 %v1262
  %1759 = vmatpush.msra.mxu0 %v1261
  %1760 = vmatmul.f32.gmra.mxu0 %v1742
  %v1761 = vpop.f32.mrf.mxu0
  %v1762 = vadd.f32 0.0, %v1761
  %1763 = vdwg.mxu0
  %1764 = vmatpush.msra.mxu0 0.0
  %1765 = vmatpush.msra.mxu0 0.0
  %1766 = vmatpush.msra.mxu0 0.0
  %1767 = vmatpush.msra.mxu0 0.0
  %1768 = vmatpush.msra.mxu0 0.0
  %1769 = vmatpush.msra.mxu0 0.0
  %1770 = vmatpush.msra.mxu0 0.0
  %1771 = vmatpush.msra.mxu0 0.0
  %1772 = vmatpush.msra.mxu0 0.0
  %1773 = vmatpush.msra.mxu0 0.0
  %1774 = vmatpush.msra.mxu0 0.0
  %1775 = vmatpush.msra.mxu0 0.0
  %1776 = vmatpush.msra.mxu0 %v1269
  %1777 = vmatpush.msra.mxu0 %v1268
  %1778 = vmatpush.msra.mxu0 %v1267
  %1779 = vmatpush.msra.mxu0 %v1266
  %1780 = vmatmul.f32.gmra.mxu0 %v1742
  %v1781 = vpop.f32.mrf.mxu0
  %v1782 = vadd.f32 0.0, %v1781
  %1783 = vdwg.mxu0
  %1784 = vmatpush.msra.mxu0 0.0
  %1785 = vmatpush.msra.mxu0 0.0
  %1786 = vmatpush.msra.mxu0 0.0
  %1787 = vmatpush.msra.mxu0 0.0
  %1788 = vmatpush.msra.mxu0 0.0
  %1789 = vmatpush.msra.mxu0 0.0
  %1790 = vmatpush.msra.mxu0 0.0
  %1791 = vmatpush.msra.mxu0 0.0
  %1792 = vmatpush.msra.mxu0 0.0
  %1793 = vmatpush.msra.mxu0 0.0
  %1794 = vmatpush.msra.mxu0 0.0
  %1795 = vmatpush.msra.mxu0 0.0
  %1796 = vmatpush.msra.mxu0 %v1274
  %1797 = vmatpush.msra.mxu0 %v1273
  %1798 = vmatpush.msra.mxu0 %v1272
  %1799 = vmatpush.msra.mxu0 %v1271
  %1800 = vmatmul.f32.gmra.mxu0 %v1742
  %v1801 = vpop.f32.mrf.mxu0
  %v1802 = vadd.f32 %v1315, %v1801
  %1803 = vdwg.mxu0
  %v1804 = vadd.f32 %v1156, %v1762
  %v1805 = vxor.u32 %v1804, 2147483648
  %v1806 = vmul.f32 %v1805, 1.442695
  %v1807 = vpow.pop %v1806
  %v1808 = vadd.f32 %v1807, 1.0
  %v1809 = vrcp.pop %v1808
  %v1810 = vmul.f32 %v1808, %v1809
  %v1811 = vsub.f32 1.0, %v1810
  %v1812 = vmul.f32 %v1809, %v1811
  %v1813 = vadd.f32 %v1809, %v1812
  %vm1814 = vweird.f32 %v1808
  %vm1815 = vweird.f32 %v1809
  %vm1816 = vmor %vm1814, %vm1815
  %v1817 = vsel %vm1816, %v1809, %v1813
  %v1818 = vand.u32 2147483647, %v1808
  %vm1819 = vcmp.eq.f32.partialorder %v1818, 8.507059e+37
  %v1820 = vand.u32 %v1808, 2147483648
  %v1821 = vor.u32 1.1754944e-38, %v1820
  %v1822 = vsel %vm1819, %v1821, %v1817
  %v1823 = vmul.f32 1.0, %v1822
  %v1824 = vadd.f32 %v1203, %v1782
  %v1825 = vxor.u32 %v1824, 2147483648
  %v1826 = vmul.f32 %v1825, 1.442695
  %v1827 = vpow.pop %v1826
  %v1828 = vadd.f32 %v1827, 1.0
  %v1829 = vrcp.pop %v1828
  %v1830 = vmul.f32 %v1828, %v1829
  %v1831 = vsub.f32 1.0, %v1830
  %v1832 = vmul.f32 %v1829, %v1831
  %v1833 = vadd.f32 %v1829, %v1832
  %vm1834 = vweird.f32 %v1828
  %vm1835 = vweird.f32 %v1829
  %vm1836 = vmor %vm1834, %vm1835
  %v1837 = vsel %vm1836, %v1829, %v1833
  %v1838 = vand.u32 2147483647, %v1828
  %vm1839 = vcmp.eq.f32.partialorder %v1838, 8.507059e+37
  %v1840 = vand.u32 %v1828, 2147483648
  %v1841 = vor.u32 1.1754944e-38, %v1840
  %v1842 = vsel %vm1839, %v1841, %v1837
  %v1843 = vmul.f32 1.0, %v1842
  %v1844 = vmul.f32 %v1823, %v1802
  %v1845 = vadd.f32 %v1250, %v1844
  %v1846 = vtanh.pop %v1845
  %v1847 = vsub.f32 1.0, %v1843
  %v1848 = vmul.f32 %v1847, %v1846
  %v1849 = vmul.f32 %v1843, %v1733
  %v1850 = vadd.f32 %v1848, %v1849
  %vm1851 = vcmp.eq.s32.totalorder %v47, 5
  %v1852 = vsel %vm1851, 1, 0
  %1853 = vset.pattern.permute.xlu0 0
  %1854 = vperm.xlu0 %1853, %v1852
  %v1855 = vpop.permute.xlu0 %1854
  %vm1856 = vcmp.eq.s32.totalorder %v1855, 1
  %v1857 = vsel %vm1856, %v1850, %v1740
  %v1859 = vsel %vm62, %v1850, 0
  %1861 = vmatpush.msra.mxu0 0.0
  %1862 = vmatpush.msra.mxu0 0.0
  %1863 = vmatpush.msra.mxu0 0.0
  %1864 = vmatpush.msra.mxu0 0.0
  %1865 = vmatpush.msra.mxu0 0.0
  %1866 = vmatpush.msra.mxu0 0.0
  %1867 = vmatpush.msra.mxu0 0.0
  %1868 = vmatpush.msra.mxu0 0.0
  %1869 = vmatpush.msra.mxu0 0.0
  %1870 = vmatpush.msra.mxu0 0.0
  %1871 = vmatpush.msra.mxu0 0.0
  %1872 = vmatpush.msra.mxu0 0.0
  %1873 = vmatpush.msra.mxu0 %v1264
  %1874 = vmatpush.msra.mxu0 %v1263
  %1875 = vmatpush.msra.mxu0 %v1262
  %1876 = vmatpush.msra.mxu0 %v1261
  %1877 = vmatmul.f32.gmra.mxu0 %v1859
  %v1878 = vpop.f32.mrf.mxu0
  %v1879 = vadd.f32 0.0, %v1878
  %1880 = vdwg.mxu0
  %1881 = vmatpush.msra.mxu0 0.0
  %1882 = vmatpush.msra.mxu0 0.0
  %1883 = vmatpush.msra.mxu0 0.0
  %1884 = vmatpush.msra.mxu0 0.0
  %1885 = vmatpush.msra.mxu0 0.0
  %1886 = vmatpush.msra.mxu0 0.0
  %1887 = vmatpush.msra.mxu0 0.0
  %1888 = vmatpush.msra.mxu0 0.0
  %1889 = vmatpush.msra.mxu0 0.0
  %1890 = vmatpush.msra.mxu0 0.0
  %1891 = vmatpush.msra.mxu0 0.0
  %1892 = vmatpush.msra.mxu0 0.0
  %1893 = vmatpush.msra.mxu0 %v1269
  %1894 = vmatpush.msra.mxu0 %v1268
  %1895 = vmatpush.msra.mxu0 %v1267
  %1896 = vmatpush.msra.mxu0 %v1266
  %1897 = vmatmul.f32.gmra.mxu0 %v1859
  %v1898 = vpop.f32.mrf.mxu0
  %v1899 = vadd.f32 0.0, %v1898
  %1900 = vdwg.mxu0
  %1901 = vmatpush.msra.mxu0 0.0
  %1902 = vmatpush.msra.mxu0 0.0
  %1903 = vmatpush.msra.mxu0 0.0
  %1904 = vmatpush.msra.mxu0 0.0
  %1905 = vmatpush.msra.mxu0 0.0
  %1906 = vmatpush.msra.mxu0 0.0
  %1907 = vmatpush.msra.mxu0 0.0
  %1908 = vmatpush.msra.mxu0 0.0
  %1909 = vmatpush.msra.mxu0 0.0
  %1910 = vmatpush.msra.mxu0 0.0
  %1911 = vmatpush.msra.mxu0 0.0
  %1912 = vmatpush.msra.mxu0 0.0
  %1913 = vmatpush.msra.mxu0 %v1274
  %1914 = vmatpush.msra.mxu0 %v1273
  %1915 = vmatpush.msra.mxu0 %v1272
  %1916 = vmatpush.msra.mxu0 %v1271
  %1917 = vmatmul.f32.gmra.mxu0 %v1859
  %v1918 = vpop.f32.mrf.mxu0
  %v1919 = vadd.f32 %v1315, %v1918
  %1920 = vdwg.mxu0
  %v1921 = vadd.f32 %v1159, %v1879
  %v1922 = vxor.u32 %v1921, 2147483648
  %v1923 = vmul.f32 %v1922, 1.442695
  %v1924 = vpow.pop %v1923
  %v1925 = vadd.f32 %v1924, 1.0
  %v1926 = vrcp.pop %v1925
  %v1927 = vmul.f32 %v1925, %v1926
  %v1928 = vsub.f32 1.0, %v1927
  %v1929 = vmul.f32 %v1926, %v1928
  %v1930 = vadd.f32 %v1926, %v1929
  %vm1931 = vweird.f32 %v1925
  %vm1932 = vweird.f32 %v1926
  %vm1933 = vmor %vm1931, %vm1932
  %v1934 = vsel %vm1933, %v1926, %v1930
  %v1935 = vand.u32 2147483647, %v1925
  %vm1936 = vcmp.eq.f32.partialorder %v1935, 8.507059e+37
  %v1937 = vand.u32 %v1925, 2147483648
  %v1938 = vor.u32 1.1754944e-38, %v1937
  %v1939 = vsel %vm1936, %v1938, %v1934
  %v1940 = vmul.f32 1.0, %v1939
  %v1941 = vadd.f32 %v1206, %v1899
  %v1942 = vxor.u32 %v1941, 2147483648
  %v1943 = vmul.f32 %v1942, 1.442695
  %v1944 = vpow.pop %v1943
  %v1945 = vadd.f32 %v1944, 1.0
  %v1946 = vrcp.pop %v1945
  %v1947 = vmul.f32 %v1945, %v1946
  %v1948 = vsub.f32 1.0, %v1947
  %v1949 = vmul.f32 %v1946, %v1948
  %v1950 = vadd.f32 %v1946, %v1949
  %vm1951 = vweird.f32 %v1945
  %vm1952 = vweird.f32 %v1946
  %vm1953 = vmor %vm1951, %vm1952
  %v1954 = vsel %vm1953, %v1946, %v1950
  %v1955 = vand.u32 2147483647, %v1945
  %vm1956 = vcmp.eq.f32.partialorder %v1955, 8.507059e+37
  %v1957 = vand.u32 %v1945, 2147483648
  %v1958 = vor.u32 1.1754944e-38, %v1957
  %v1959 = vsel %vm1956, %v1958, %v1954
  %v1960 = vmul.f32 1.0, %v1959
  %v1961 = vmul.f32 %v1940, %v1919
  %v1962 = vadd.f32 %v1253, %v1961
  %v1963 = vtanh.pop %v1962
  %v1964 = vsub.f32 1.0, %v1960
  %v1965 = vmul.f32 %v1964, %v1963
  %v1966 = vmul.f32 %v1960, %v1850
  %v1967 = vadd.f32 %v1965, %v1966
  %vm1968 = vcmp.eq.s32.totalorder %v47, 6
  %v1969 = vsel %vm1968, 1, 0
  %1970 = vset.pattern.permute.xlu0 0
  %1971 = vperm.xlu0 %1970, %v1969
  %v1972 = vpop.permute.xlu0 %1971
  %vm1973 = vcmp.eq.s32.totalorder %v1972, 1
  %v1974 = vsel %vm1973, %v1967, %v1857
  %v1976 = vsel %vm62, %v1967, 0
  %1978 = vmatpush.msra.mxu0 0.0
  %1979 = vmatpush.msra.mxu0 0.0
  %1980 = vmatpush.msra.mxu0 0.0
  %1981 = vmatpush.msra.mxu0 0.0
  %1982 = vmatpush.msra.mxu0 0.0
  %1983 = vmatpush.msra.mxu0 0.0
  %1984 = vmatpush.msra.mxu0 0.0
  %1985 = vmatpush.msra.mxu0 0.0
  %1986 = vmatpush.msra.mxu0 0.0
  %1987 = vmatpush.msra.mxu0 0.0
  %1988 = vmatpush.msra.mxu0 0.0
  %1989 = vmatpush.msra.mxu0 0.0
  %1990 = vmatpush.msra.mxu0 %v1264
  %1991 = vmatpush.msra.mxu0 %v1263
  %1992 = vmatpush.msra.mxu0 %v1262
  %1993 = vmatpush.msra.mxu0 %v1261
  %1994 = vmatmul.f32.gmra.mxu0 %v1976
  %v1995 = vpop.f32.mrf.mxu0
  %v1996 = vadd.f32 0.0, %v1995
  %1997 = vdwg.mxu0
  %1998 = vmatpush.msra.mxu0 0.0
  %1999 = vmatpush.msra.mxu0 0.0
  %2000 = vmatpush.msra.mxu0 0.0
  %2001 = vmatpush.msra.mxu0 0.0
  %2002 = vmatpush.msra.mxu0 0.0
  %2003 = vmatpush.msra.mxu0 0.0
  %2004 = vmatpush.msra.mxu0 0.0
  %2005 = vmatpush.msra.mxu0 0.0
  %2006 = vmatpush.msra.mxu0 0.0
  %2007 = vmatpush.msra.mxu0 0.0
  %2008 = vmatpush.msra.mxu0 0.0
  %2009 = vmatpush.msra.mxu0 0.0
  %2010 = vmatpush.msra.mxu0 %v1269
  %2011 = vmatpush.msra.mxu0 %v1268
  %2012 = vmatpush.msra.mxu0 %v1267
  %2013 = vmatpush.msra.mxu0 %v1266
  %2014 = vmatmul.f32.gmra.mxu0 %v1976
  %v2015 = vpop.f32.mrf.mxu0
  %v2016 = vadd.f32 0.0, %v2015
  %2017 = vdwg.mxu0
  %2018 = vmatpush.msra.mxu0 0.0
  %2019 = vmatpush.msra.mxu0 0.0
  %2020 = vmatpush.msra.mxu0 0.0
  %2021 = vmatpush.msra.mxu0 0.0
  %2022 = vmatpush.msra.mxu0 0.0
  %2023 = vmatpush.msra.mxu0 0.0
  %2024 = vmatpush.msra.mxu0 0.0
  %2025 = vmatpush.msra.mxu0 0.0
  %2026 = vmatpush.msra.mxu0 0.0
  %2027 = vmatpush.msra.mxu0 0.0
  %2028 = vmatpush.msra.mxu0 0.0
  %2029 = vmatpush.msra.mxu0 0.0
  %2030 = vmatpush.msra.mxu0 %v1274
  %2031 = vmatpush.msra.mxu0 %v1273
  %2032 = vmatpush.msra.mxu0 %v1272
  %2033 = vmatpush.msra.mxu0 %v1271
  %2034 = vmatmul.f32.gmra.mxu0 %v1976
  %v2035 = vpop.f32.mrf.mxu0
  %v2036 = vadd.f32 %v1315, %v2035
  %2037 = vdwg.mxu0
  %v2038 = vadd.f32 %v1162, %v1996
  %v2039 = vxor.u32 %v2038, 2147483648
  %v2040 = vmul.f32 %v2039, 1.442695
  %v2041 = vpow.pop %v2040
  %v2042 = vadd.f32 %v2041, 1.0
  %v2043 = vrcp.pop %v2042
  %v2044 = vmul.f32 %v2042, %v2043
  %v2045 = vsub.f32 1.0, %v2044
  %v2046 = vmul.f32 %v2043, %v2045
  %v2047 = vadd.f32 %v2043, %v2046
  %vm2048 = vweird.f32 %v2042
  %vm2049 = vweird.f32 %v2043
  %vm2050 = vmor %vm2048, %vm2049
  %v2051 = vsel %vm2050, %v2043, %v2047
  %v2052 = vand.u32 2147483647, %v2042
  %vm2053 = vcmp.eq.f32.partialorder %v2052, 8.507059e+37
  %v2054 = vand.u32 %v2042, 2147483648
  %v2055 = vor.u32 1.1754944e-38, %v2054
  %v2056 = vsel %vm2053, %v2055, %v2051
  %v2057 = vmul.f32 1.0, %v2056
  %v2058 = vadd.f32 %v1209, %v2016
  %v2059 = vxor.u32 %v2058, 2147483648
  %v2060 = vmul.f32 %v2059, 1.442695
  %v2061 = vpow.pop %v2060
  %v2062 = vadd.f32 %v2061, 1.0
  %v2063 = vrcp.pop %v2062
  %v2064 = vmul.f32 %v2062, %v2063
  %v2065 = vsub.f32 1.0, %v2064
  %v2066 = vmul.f32 %v2063, %v2065
  %v2067 = vadd.f32 %v2063, %v2066
  %vm2068 = vweird.f32 %v2062
  %vm2069 = vweird.f32 %v2063
  %vm2070 = vmor %vm2068, %vm2069
  %v2071 = vsel %vm2070, %v2063, %v2067
  %v2072 = vand.u32 2147483647, %v2062
  %vm2073 = vcmp.eq.f32.partialorder %v2072, 8.507059e+37
  %v2074 = vand.u32 %v2062, 2147483648
  %v2075 = vor.u32 1.1754944e-38, %v2074
  %v2076 = vsel %vm2073, %v2075, %v2071
  %v2077 = vmul.f32 1.0, %v2076
  %v2078 = vmul.f32 %v2057, %v2036
  %v2079 = vadd.f32 %v1256, %v2078
  %v2080 = vtanh.pop %v2079
  %v2081 = vsub.f32 1.0, %v2077
  %v2082 = vmul.f32 %v2081, %v2080
  %v2083 = vmul.f32 %v2077, %v1967
  %v2084 = vadd.f32 %v2082, %v2083
  %vm2085 = vcmp.eq.s32.totalorder %v47, 7
  %v2086 = vsel %vm2085, 1, 0
  %2087 = vset.pattern.permute.xlu0 0
  %2088 = vperm.xlu0 %2087, %v2086
  %v2089 = vpop.permute.xlu0 %2088
  %vm2090 = vcmp.eq.s32.totalorder %v2089, 1
  %v2091 = vsel %vm2090, %v2084, %v1974
  %v2093 = vsel %vm62, %v2084, 0
  %2095 = vmatpush.msra.mxu0 0.0
  %2096 = vmatpush.msra.mxu0 0.0
  %2097 = vmatpush.msra.mxu0 0.0
  %2098 = vmatpush.msra.mxu0 0.0
  %2099 = vmatpush.msra.mxu0 0.0
  %2100 = vmatpush.msra.mxu0 0.0
  %2101 = vmatpush.msra.mxu0 0.0
  %2102 = vmatpush.msra.mxu0 0.0
  %2103 = vmatpush.msra.mxu0 0.0
  %2104 = vmatpush.msra.mxu0 0.0
  %2105 = vmatpush.msra.mxu0 0.0
  %2106 = vmatpush.msra.mxu0 0.0
  %2107 = vmatpush.msra.mxu0 %v1264
  %2108 = vmatpush.msra.mxu0 %v1263
  %2109 = vmatpush.msra.mxu0 %v1262
  %2110 = vmatpush.msra.mxu0 %v1261
  %2111 = vmatmul.f32.gmra.mxu0 %v2093
  %v2112 = vpop.f32.mrf.mxu0
  %v2113 = vadd.f32 0.0, %v2112
  %2114 = vdwg.mxu0
  %2115 = vmatpush.msra.mxu0 0.0
  %2116 = vmatpush.msra.mxu0 0.0
  %2117 = vmatpush.msra.mxu0 0.0
  %2118 = vmatpush.msra.mxu0 0.0
  %2119 = vmatpush.msra.mxu0 0.0
  %2120 = vmatpush.msra.mxu0 0.0
  %2121 = vmatpush.msra.mxu0 0.0
  %2122 = vmatpush.msra.mxu0 0.0
  %2123 = vmatpush.msra.mxu0 0.0
  %2124 = vmatpush.msra.mxu0 0.0
  %2125 = vmatpush.msra.mxu0 0.0
  %2126 = vmatpush.msra.mxu0 0.0
  %2127 = vmatpush.msra.mxu0 %v1269
  %2128 = vmatpush.msra.mxu0 %v1268
  %2129 = vmatpush.msra.mxu0 %v1267
  %2130 = vmatpush.msra.mxu0 %v1266
  %2131 = vmatmul.f32.gmra.mxu0 %v2093
  %v2132 = vpop.f32.mrf.mxu0
  %v2133 = vadd.f32 0.0, %v2132
  %2134 = vdwg.mxu0
  %2135 = vmatpush.msra.mxu0 0.0
  %2136 = vmatpush.msra.mxu0 0.0
  %2137 = vmatpush.msra.mxu0 0.0
  %2138 = vmatpush.msra.mxu0 0.0
  %2139 = vmatpush.msra.mxu0 0.0
  %2140 = vmatpush.msra.mxu0 0.0
  %2141 = vmatpush.msra.mxu0 0.0
  %2142 = vmatpush.msra.mxu0 0.0
  %2143 = vmatpush.msra.mxu0 0.0
  %2144 = vmatpush.msra.mxu0 0.0
  %2145 = vmatpush.msra.mxu0 0.0
  %2146 = vmatpush.msra.mxu0 0.0
  %2147 = vmatpush.msra.mxu0 %v1274
  %2148 = vmatpush.msra.mxu0 %v1273
  %2149 = vmatpush.msra.mxu0 %v1272
  %2150 = vmatpush.msra.mxu0 %v1271
  %2151 = vmatmul.f32.gmra.mxu0 %v2093
  %v2152 = vpop.f32.mrf.mxu0
  %v2153 = vadd.f32 %v1315, %v2152
  %2154 = vdwg.mxu0
  %v2155 = vadd.f32 %v1165, %v2113
  %v2156 = vxor.u32 %v2155, 2147483648
  %v2157 = vmul.f32 %v2156, 1.442695
  %v2158 = vpow.pop %v2157
  %v2159 = vadd.f32 %v2158, 1.0
  %v2160 = vrcp.pop %v2159
  %v2161 = vmul.f32 %v2159, %v2160
  %v2162 = vsub.f32 1.0, %v2161
  %v2163 = vmul.f32 %v2160, %v2162
  %v2164 = vadd.f32 %v2160, %v2163
  %vm2165 = vweird.f32 %v2159
  %vm2166 = vweird.f32 %v2160
  %vm2167 = vmor %vm2165, %vm2166
  %v2168 = vsel %vm2167, %v2160, %v2164
  %v2169 = vand.u32 2147483647, %v2159
  %vm2170 = vcmp.eq.f32.partialorder %v2169, 8.507059e+37
  %v2171 = vand.u32 %v2159, 2147483648
  %v2172 = vor.u32 1.1754944e-38, %v2171
  %v2173 = vsel %vm2170, %v2172, %v2168
  %v2174 = vmul.f32 1.0, %v2173
  %v2175 = vadd.f32 %v1212, %v2133
  %v2176 = vxor.u32 %v2175, 2147483648
  %v2177 = vmul.f32 %v2176, 1.442695
  %v2178 = vpow.pop %v2177
  %v2179 = vadd.f32 %v2178, 1.0
  %v2180 = vrcp.pop %v2179
  %v2181 = vmul.f32 %v2179, %v2180
  %v2182 = vsub.f32 1.0, %v2181
  %v2183 = vmul.f32 %v2180, %v2182
  %v2184 = vadd.f32 %v2180, %v2183
  %vm2185 = vweird.f32 %v2179
  %vm2186 = vweird.f32 %v2180
  %vm2187 = vmor %vm2185, %vm2186
  %v2188 = vsel %vm2187, %v2180, %v2184
  %v2189 = vand.u32 2147483647, %v2179
  %vm2190 = vcmp.eq.f32.partialorder %v2189, 8.507059e+37
  %v2191 = vand.u32 %v2179, 2147483648
  %v2192 = vor.u32 1.1754944e-38, %v2191
  %v2193 = vsel %vm2190, %v2192, %v2188
  %v2194 = vmul.f32 1.0, %v2193
  %v2195 = vmul.f32 %v2174, %v2153
  %v2196 = vadd.f32 %v1259, %v2195
  %v2197 = vtanh.pop %v2196
  %v2198 = vsub.f32 1.0, %v2194
  %v2199 = vmul.f32 %v2198, %v2197
  %v2200 = vmul.f32 %v2194, %v2084
  %v2201 = vadd.f32 %v2199, %v2200
  %vm2202 = vcmp.eq.s32.totalorder %v47, 8
  %v2203 = vsel %vm2202, 1, 0
  %2204 = vset.pattern.permute.xlu0 0
  %2205 = vperm.xlu0 %2204, %v2203
  %v2206 = vpop.permute.xlu0 %2205
  %vm2207 = vcmp.eq.s32.totalorder %v2206, 1
  %v2208 = vsel %vm2207, %v2201, %v2091
  %v2209 = vld [vmem:[%s8] sm:$0xff]
  %v2210 = vld [vmem:[%s8 + $0x8] sm:$0xff]
  %v2211 = vld [vmem:[%s8 + $0x10] sm:$0xff]
  %v2212 = vld [vmem:[%s8 + $0x18] sm:$0xff]
  %v2213 = vld [vmem:[%s9] sm:$0x1]
  %v2215 = vperm.slane %v2213, 0
  %v2218 = vsel %vm62, %v2208, 0
  %2220 = vmatpush.msra.mxu0 0.0
  %2221 = vmatpush.msra.mxu0 0.0
  %2222 = vmatpush.msra.mxu0 0.0
  %2223 = vmatpush.msra.mxu0 0.0
  %2224 = vmatpush.msra.mxu0 0.0
  %2225 = vmatpush.msra.mxu0 0.0
  %2226 = vmatpush.msra.mxu0 0.0
  %2227 = vmatpush.msra.mxu0 0.0
  %2228 = vmatpush.msra.mxu0 0.0
  %2229 = vmatpush.msra.mxu0 0.0
  %2230 = vmatpush.msra.mxu0 0.0
  %2231 = vmatpush.msra.mxu0 0.0
  %2232 = vmatpush.msra.mxu0 %v2212
  %2233 = vmatpush.msra.mxu0 %v2211
  %2234 = vmatpush.msra.mxu0 %v2210
  %2235 = vmatpush.msra.mxu0 %v2209
  %2236 = vmatmul.f32.gmra.mxu0 %v2218
  %v2237 = vpop.f32.mrf.mxu0
  %v2238 = vadd.f32 %v2215, %v2237
  %2239 = vdwg.mxu0
  %v2240 = vld [vmem:[%s10] sm:$0xff]
  %v2241 = vld [vmem:[%s10 + $0x8] sm:$0xff]
  %v2242 = vld [vmem:[%s10 + $0x10] sm:$0xff]
  %v2243 = vld [vmem:[%s10 + $0x18] sm:$0xff]
  %v2244 = vld [vmem:[%s11] sm:$0x1]
  %v2246 = vperm.slane %v2244, 0
  %v2249 = vsel %vm62, %v2238, 0
  %2251 = vmatpush.msra.mxu0 0.0
  %2252 = vmatpush.msra.mxu0 0.0
  %2253 = vmatpush.msra.mxu0 0.0
  %2254 = vmatpush.msra.mxu0 0.0
  %2255 = vmatpush.msra.mxu0 0.0
  %2256 = vmatpush.msra.mxu0 0.0
  %2257 = vmatpush.msra.mxu0 0.0
  %2258 = vmatpush.msra.mxu0 0.0
  %2259 = vmatpush.msra.mxu0 0.0
  %2260 = vmatpush.msra.mxu0 0.0
  %2261 = vmatpush.msra.mxu0 0.0
  %2262 = vmatpush.msra.mxu0 0.0
  %2263 = vmatpush.msra.mxu0 %v2243
  %2264 = vmatpush.msra.mxu0 %v2242
  %2265 = vmatpush.msra.mxu0 %v2241
  %2266 = vmatpush.msra.mxu0 %v2240
  %2267 = vmatmul.f32.gmra.mxu0 %v2249
  %v2268 = vpop.f32.mrf.mxu0
  %v2269 = vadd.f32 %v2246, %v2268
  %2270 = vdwg.mxu0
  %v2271 = vmax.f32 %v2269, 0.0
  %v2272 = vld [vmem:[%s12] sm:$0xff]
  %v2273 = vld [vmem:[%s12 + $0x8] sm:$0xff]
  %v2274 = vld [vmem:[%s12 + $0x10] sm:$0xff]
  %v2275 = vld [vmem:[%s12 + $0x18] sm:$0xff]
  %v2276 = vld [vmem:[%s13] sm:$0x1]
  %v2278 = vperm.slane %v2276, 0
  %v2281 = vsel %vm62, %v2271, 0
  %2283 = vmatpush.msra.mxu0 0.0
  %2284 = vmatpush.msra.mxu0 0.0
  %2285 = vmatpush.msra.mxu0 0.0
  %2286 = vmatpush.msra.mxu0 0.0
  %2287 = vmatpush.msra.mxu0 0.0
  %2288 = vmatpush.msra.mxu0 0.0
  %2289 = vmatpush.msra.mxu0 0.0
  %2290 = vmatpush.msra.mxu0 0.0
  %2291 = vmatpush.msra.mxu0 0.0
  %2292 = vmatpush.msra.mxu0 0.0
  %2293 = vmatpush.msra.mxu0 0.0
  %2294 = vmatpush.msra.mxu0 0.0
  %2295 = vmatpush.msra.mxu0 %v2275
  %2296 = vmatpush.msra.mxu0 %v2274
  %2297 = vmatpush.msra.mxu0 %v2273
  %2298 = vmatpush.msra.mxu0 %v2272
  %2299 = vmatmul.f32.gmra.mxu0 %v2281
  %v2300 = vpop.f32.mrf.mxu0
  %v2301 = vadd.f32 %v2278, %v2300
  %2302 = vdwg.mxu0
  %2303 = vst.msk [vmem:[%s14] sm:$0xff] %vm62, %v2301
  // Predicated region
  $region58: #{style_rewarder_forward.1} parent=0 // pred_check
    _
  $region59: #{style_rewarder_forward.1} parent=0 // pred_check_branch
    %2305 = sbr.rel (0) target = $region61
  $region60: #{style_rewarder_forward.1} parent=0 // pred_region
    _
  $region61: #{style_rewarder_forward.1} parent=0 // pred_fallthru
    _
  // Predicated region
  $region62: #{style_rewarder_forward.1} parent=0 // pred_check
    _
  $region63: #{style_rewarder_forward.1} parent=0 // pred_check_branch
    %2307 = sbr.rel (0) target = $region65
  $region64: #{style_rewarder_forward.1} parent=0 // pred_region
    _
  $region65: #{style_rewarder_forward.1} parent=0 // pred_fallthru
    _

</llo_original>
